<compile_context>
chip_gen: v7x
topology: tpu7x:2x2x1
jax: 0.10.0
libtpu: 0.0.40
codegen_flags: <defaults>
</compile_context>

<pallas_src>
import jax
import jax.numpy as jnp
from jax.experimental import pallas as pl
from jax.experimental.pallas import tpu as pltpu


MAX_TILE_ROWS = 1024   # rows per grid step; double-buffered VMEM stays < ~10 MiB


def _round_up(n, m):
    return (n + m - 1) // m * m


# ---------------------------------------------------------------------------
# Kernels
# ---------------------------------------------------------------------------

def conv_relu_pool_kernel(p_ref, w_ref, b_ref, o_ref):
    # p_ref: [4, tile_rows, Kp]  (4 = the 2x2 max-pool window quadrants)
    # w_ref: [Kp, Cp]   b_ref: [1, Cp]   o_ref: [tile_rows, Cp]
    w = w_ref[...]
    acc = jnp.dot(p_ref[0], w, preferred_element_type=jnp.float32)
    for q in range(1, 4):                      # static unrolled pool loop
        acc = jnp.maximum(
            acc, jnp.dot(p_ref[q], w, preferred_element_type=jnp.float32))
    # bias hoisted out of the loop; fuse ReLU after the pool reduction
    o_ref[...] = jnp.maximum(acc + b_ref[...], 0.0)


def fc_fused_kernel(x_ref, w1_ref, b1_ref, w2_ref, b2_ref, w3_ref, b3_ref,
                    o_ref):
    # fc1+relu -> fc2+relu -> fc3; intermediates never leave VMEM/registers.
    h = jnp.dot(x_ref[...], w1_ref[...], preferred_element_type=jnp.float32)
    h = jnp.maximum(h + b1_ref[...], 0.0)
    h = jnp.dot(h, w2_ref[...], preferred_element_type=jnp.float32)
    h = jnp.maximum(h + b2_ref[...], 0.0)
    h = jnp.dot(h, w3_ref[...], preferred_element_type=jnp.float32)
    o_ref[...] = h + b3_ref[...]


# ---------------------------------------------------------------------------
# Wrappers (XLA-side glue: im2col, padding, weight re-layout)
# ---------------------------------------------------------------------------

def conv_relu_pool(x_nhwc, w, b):
    """x: [B, H, W, Cin] (NHWC), w: [Cout, Cin, k, k] (torch), b: [Cout].

    Returns the conv(valid, stride 1) + ReLU + 2x2/2 max-pool output in NHWC.
    """
    B, H, W, Cin = x_nhwc.shape
    Cout, _, k, _ = w.shape
    OH, OW = H - k + 1, W - k + 1
    PH, PW = OH // 2, OW // 2

    # im2col glue, feature axis flattened in (kh, kw, cin) order (NHWC-native).
    cols = []
    for kh in range(k):
        for kw in range(k):
            cols.append(x_nhwc[:, kh:kh + OH, kw:kw + OW, :])  # [B, OH, OW, Cin]
    patches = jnp.concatenate(cols, axis=-1)                   # [B, OH, OW, K]
    K = k * k * Cin

    # group the 2x2 pooling window into 4 "quadrant" matmul problems
    quads = []
    for a in range(2):
        for c in range(2):
            quads.append(patches[:, a::2, c::2, :].reshape(B * PH * PW, K))
    p4 = jnp.stack(quads, axis=0)                              # [4, rows, K]

    rows = B * PH * PW
    Kp = _round_up(K, 128)                 # aligned K: unmasked loads
    Cp = _round_up(Cout, 128)              # lane-dense output: unmasked stores
    tile = min(MAX_TILE_ROWS, _round_up(rows, 8))
    rows_pad = _round_up(rows, tile)

    p4 = jnp.pad(p4, ((0, 0), (0, rows_pad - rows), (0, Kp - K)))
    # torch weight [Cout, Cin, kh, kw] -> columns in (kh, kw, cin) order
    w2 = w.transpose(0, 2, 3, 1).reshape(Cout, K).T            # [K, Cout]
    w2 = jnp.pad(w2, ((0, Kp - K), (0, Cp - Cout)))
    b2 = jnp.pad(b.reshape(1, Cout), ((0, 0), (0, Cp - Cout)))

    out = pl.pallas_call(
        conv_relu_pool_kernel,
        out_shape=jax.ShapeDtypeStruct((rows_pad, Cp), jnp.float32),
        grid=(rows_pad // tile,),
        in_specs=[
            pl.BlockSpec((4, tile, Kp), lambda i: (0, i, 0)),
            pl.BlockSpec((Kp, Cp), lambda i: (0, 0)),
            pl.BlockSpec((1, Cp), lambda i: (0, 0)),
        ],
        out_specs=pl.BlockSpec((tile, Cp), lambda i: (i, 0)),
        compiler_params=pltpu.CompilerParams(
            dimension_semantics=("parallel",)),
    )(p4, w2, b2)

    return out[:rows, :Cout].reshape(B, PH, PW, Cout)          # stay NHWC


def mlp_head(x, w1, b1, w2, b2, w3, b3):
    """Fused fc1+relu -> fc2+relu -> fc3.  Weights in torch [Out, In] layout."""
    B, In = x.shape
    H1, H2, Out = w1.shape[0], w2.shape[0], w3.shape[0]
    Inp, H1p = _round_up(In, 128), _round_up(H1, 128)
    H2p, Outp = _round_up(H2, 128), _round_up(Out, 128)
    tile = min(MAX_TILE_ROWS, _round_up(B, 8))
    Bp = _round_up(B, tile)

    xp = jnp.pad(x, ((0, Bp - B), (0, Inp - In)))
    w1p = jnp.pad(w1.T, ((0, Inp - In), (0, H1p - H1)))
    b1p = jnp.pad(b1.reshape(1, H1), ((0, 0), (0, H1p - H1)))
    w2p = jnp.pad(w2.T, ((0, H1p - H1), (0, H2p - H2)))
    b2p = jnp.pad(b2.reshape(1, H2), ((0, 0), (0, H2p - H2)))
    w3p = jnp.pad(w3.T, ((0, H2p - H2), (0, Outp - Out)))
    b3p = jnp.pad(b3.reshape(1, Out), ((0, 0), (0, Outp - Out)))

    out = pl.pallas_call(
        fc_fused_kernel,
        out_shape=jax.ShapeDtypeStruct((Bp, Outp), jnp.float32),
        grid=(Bp // tile,),
        in_specs=[
            pl.BlockSpec((tile, Inp), lambda i: (i, 0)),
            pl.BlockSpec((Inp, H1p), lambda i: (0, 0)),
            pl.BlockSpec((1, H1p), lambda i: (0, 0)),
            pl.BlockSpec((H1p, H2p), lambda i: (0, 0)),
            pl.BlockSpec((1, H2p), lambda i: (0, 0)),
            pl.BlockSpec((H2p, Outp), lambda i: (0, 0)),
            pl.BlockSpec((1, Outp), lambda i: (0, 0)),
        ],
        out_specs=pl.BlockSpec((tile, Outp), lambda i: (i, 0)),
        compiler_params=pltpu.CompilerParams(
            dimension_semantics=("parallel",)),
    )(xp, w1p, b1p, w2p, b2p, w3p, b3p)

    return out[:B, :Out]


# ---------------------------------------------------------------------------
# Parameters and forward pass
# ---------------------------------------------------------------------------

def init_params(key):
    # deterministic init, mimicking torch's default U(-1/sqrt(fan_in), +..)
    def uniform(k, shape, fan_in):
        bound = 1.0 / float(fan_in) ** 0.5
        return jax.random.uniform(k, shape, jnp.float32, -bound, bound)

    ks = jax.random.split(key, 10)
    return {
        "conv1_w": uniform(ks[0], (6, 3, 5, 5), 3 * 5 * 5),
        "conv1_b": uniform(ks[1], (6,), 3 * 5 * 5),
        "conv2_w": uniform(ks[2], (16, 6, 5, 5), 6 * 5 * 5),
        "conv2_b": uniform(ks[3], (16,), 6 * 5 * 5),
        "fc1_w": uniform(ks[4], (120, 16 * 5 * 5), 16 * 5 * 5),
        "fc1_b": uniform(ks[5], (120,), 16 * 5 * 5),
        "fc2_w": uniform(ks[6], (84, 120), 120),
        "fc2_b": uniform(ks[7], (84,), 120),
        "fc3_w": uniform(ks[8], (10, 84), 84),
        "fc3_b": uniform(ks[9], (10,), 84),
    }


def net2_forward(params, x_nchw):
    # single NCHW -> NHWC transpose; everything else stays NHWC
    x = x_nchw.transpose(0, 2, 3, 1)
    x = conv_relu_pool(x, params["conv1_w"], params["conv1_b"])  # [B,14,14, 6]
    x = conv_relu_pool(x, params["conv2_w"], params["conv2_b"])  # [B, 5, 5,16]

    B, PH, PW, C = x.shape
    x = x.reshape(B, PH * PW * C)                                # (h, w, c) order
    # absorb torch's NCHW .view() flatten order into fc1's columns (once)
    H1 = params["fc1_w"].shape[0]
    fc1_w = params["fc1_w"].reshape(H1, C, PH, PW).transpose(0, 2, 3, 1)
    fc1_w = fc1_w.reshape(H1, PH * PW * C)

    return mlp_head(x, fc1_w, params["fc1_b"],
                    params["fc2_w"], params["fc2_b"],
                    params["fc3_w"], params["fc3_b"])            # [B, 10]


if __name__ == "__main__":
    key = jax.random.PRNGKey(0)
    pkey, xkey = jax.random.split(key)
    params = init_params(pkey)
    # input must be 3x32x32 for the 16*5*5 flatten in the reference module
    x = jax.random.normal(xkey, (2, 3, 32, 32), jnp.float32)

    fwd = jax.jit(net2_forward)
    out = jax.block_until_ready(fwd(params, x))
    assert out.shape == (2, 10)
    print("KERNEL_OK")
</pallas_src>

<mosaic_0001>
module attributes {stable_mosaic.version = 11 : i64} {
  func.func @conv_relu_pool_kernel(%arg0: i32, %arg1: memref<4x392x128xf32, #tpu.memory_space<vmem>>, %arg2: memref<128x128xf32, #tpu.memory_space<vmem>>, %arg3: memref<1x128xf32, #tpu.memory_space<vmem>>, %arg4: memref<392x128xf32, #tpu.memory_space<vmem>>) attributes {dimension_semantics = [#tpu.dimension_semantics<parallel>], iteration_bounds = array<i64: 1>, scalar_prefetch = 0 : i64, scratch_operands = 0 : i64, tpu.core_type = #tpu.core_type<tc>, window_params = [{transform_indices = @transform_0, window_bounds = array<i64: 4, 392, 128>}, {pipeline_mode = #tpu.pipeline_mode<synchronous>, transform_indices = @transform_1, window_bounds = array<i64: 128, 128>}, {pipeline_mode = #tpu.pipeline_mode<synchronous>, transform_indices = @transform_2, window_bounds = array<i64: 1, 128>}, {transform_indices = @transform_3, window_bounds = array<i64: 392, 128>}]} {
    %c0 = arith.constant 0 : index
    %c0_0 = arith.constant 0 : index
    %0 = vector.load %arg2[%c0, %c0_0] : memref<128x128xf32, #tpu.memory_space<vmem>>, vector<128x128xf32>
    %c0_1 = arith.constant 0 : index
    %c0_2 = arith.constant 0 : index
    %c0_3 = arith.constant 0 : index
    %1 = vector.load %arg1[%c0_1, %c0_2, %c0_3] : memref<4x392x128xf32, #tpu.memory_space<vmem>>, vector<1x392x128xf32>
    %2 = vector.shape_cast %1 : vector<1x392x128xf32> to vector<392x128xf32>
    %cst = arith.constant dense<0.000000e+00> : vector<392x128xf32>
    %3 = tpu.matmul %2, %0, %cst {dimension_numbers = #tpu.dot_dimension_numbers<[1], [0], [0], [1], [0, 0, 1, 1], [], []>} : vector<392x128xf32>, vector<128x128xf32>, vector<392x128xf32> -> vector<392x128xf32>
    %c1 = arith.constant 1 : index
    %c0_4 = arith.constant 0 : index
    %c0_5 = arith.constant 0 : index
    %4 = vector.load %arg1[%c1, %c0_4, %c0_5] : memref<4x392x128xf32, #tpu.memory_space<vmem>>, vector<1x392x128xf32>
    %5 = vector.shape_cast %4 : vector<1x392x128xf32> to vector<392x128xf32>
    %cst_6 = arith.constant dense<0.000000e+00> : vector<392x128xf32>
    %6 = tpu.matmul %5, %0, %cst_6 {dimension_numbers = #tpu.dot_dimension_numbers<[1], [0], [0], [1], [0, 0, 1, 1], [], []>} : vector<392x128xf32>, vector<128x128xf32>, vector<392x128xf32> -> vector<392x128xf32>
    %7 = arith.maximumf %3, %6 : vector<392x128xf32>
    %c2 = arith.constant 2 : index
    %c0_7 = arith.constant 0 : index
    %c0_8 = arith.constant 0 : index
    %8 = vector.load %arg1[%c2, %c0_7, %c0_8] : memref<4x392x128xf32, #tpu.memory_space<vmem>>, vector<1x392x128xf32>
    %9 = vector.shape_cast %8 : vector<1x392x128xf32> to vector<392x128xf32>
    %cst_9 = arith.constant dense<0.000000e+00> : vector<392x128xf32>
    %10 = tpu.matmul %9, %0, %cst_9 {dimension_numbers = #tpu.dot_dimension_numbers<[1], [0], [0], [1], [0, 0, 1, 1], [], []>} : vector<392x128xf32>, vector<128x128xf32>, vector<392x128xf32> -> vector<392x128xf32>
    %11 = arith.maximumf %7, %10 : vector<392x128xf32>
    %c3 = arith.constant 3 : index
    %c0_10 = arith.constant 0 : index
    %c0_11 = arith.constant 0 : index
    %12 = vector.load %arg1[%c3, %c0_10, %c0_11] : memref<4x392x128xf32, #tpu.memory_space<vmem>>, vector<1x392x128xf32>
    %13 = vector.shape_cast %12 : vector<1x392x128xf32> to vector<392x128xf32>
    %cst_12 = arith.constant dense<0.000000e+00> : vector<392x128xf32>
    %14 = tpu.matmul %13, %0, %cst_12 {dimension_numbers = #tpu.dot_dimension_numbers<[1], [0], [0], [1], [0, 0, 1, 1], [], []>} : vector<392x128xf32>, vector<128x128xf32>, vector<392x128xf32> -> vector<392x128xf32>
    %15 = arith.maximumf %11, %14 : vector<392x128xf32>
    %c0_13 = arith.constant 0 : index
    %c0_14 = arith.constant 0 : index
    %16 = vector.load %arg3[%c0_13, %c0_14] : memref<1x128xf32, #tpu.memory_space<vmem>>, vector<1x128xf32>
    %17 = vector.broadcast %16 : vector<1x128xf32> to vector<392x128xf32>
    %18 = arith.addf %15, %17 : vector<392x128xf32>
    %cst_15 = arith.constant 0.000000e+00 : f32
    %19 = vector.broadcast %cst_15 : f32 to vector<392x128xf32>
    %20 = arith.maximumf %18, %19 : vector<392x128xf32>
    %c0_16 = arith.constant 0 : index
    %c0_17 = arith.constant 0 : index
    %21 = vector.load %arg4[%c0_16, %c0_17] : memref<392x128xf32, #tpu.memory_space<vmem>>, vector<392x128xf32>
    tpu.vector_store %arg4[%c0_16, %c0_17], %20 {strides = array<i32>} : memref<392x128xf32, #tpu.memory_space<vmem>>, vector<392x128xf32>,
    return
  }
  func.func @transform_0(%arg0: i32) -> (i32, i32, i32) {
    %c0_i32 = arith.constant 0 : i32
    %c0_i32_0 = arith.constant 0 : i32
    %c0_i32_1 = arith.constant 0 : i32
    return %c0_i32, %arg0, %c0_i32_0 : i32, i32, i32
  }
  func.func @transform_1(%arg0: i32) -> (i32, i32) {
    %c0_i32 = arith.constant 0 : i32
    %c0_i32_0 = arith.constant 0 : i32
    %c0_i32_1 = arith.constant 0 : i32
    return %c0_i32, %c0_i32_0 : i32, i32
  }
  func.func @transform_2(%arg0: i32) -> (i32, i32) {
    %c0_i32 = arith.constant 0 : i32
    %c0_i32_0 = arith.constant 0 : i32
    %c0_i32_1 = arith.constant 0 : i32
    return %c0_i32, %c0_i32_0 : i32, i32
  }
  func.func @transform_3(%arg0: i32) -> (i32, i32) {
    %c0_i32 = arith.constant 0 : i32
    %c0_i32_0 = arith.constant 0 : i32
    return %arg0, %c0_i32 : i32, i32
  }
}

module attributes {stable_mosaic.version = 11 : i64} {
  func.func @conv_relu_pool_kernel(%arg0: i32, %arg1: memref<4x56x256xf32, #tpu.memory_space<vmem>>, %arg2: memref<256x128xf32, #tpu.memory_space<vmem>>, %arg3: memref<1x128xf32, #tpu.memory_space<vmem>>, %arg4: memref<56x128xf32, #tpu.memory_space<vmem>>) attributes {dimension_semantics = [#tpu.dimension_semantics<parallel>], iteration_bounds = array<i64: 1>, scalar_prefetch = 0 : i64, scratch_operands = 0 : i64, tpu.core_type = #tpu.core_type<tc>, window_params = [{transform_indices = @transform_0, window_bounds = array<i64: 4, 56, 256>}, {pipeline_mode = #tpu.pipeline_mode<synchronous>, transform_indices = @transform_1, window_bounds = array<i64: 256, 128>}, {pipeline_mode = #tpu.pipeline_mode<synchronous>, transform_indices = @transform_2, window_bounds = array<i64: 1, 128>}, {transform_indices = @transform_3, window_bounds = array<i64: 56, 128>}]} {
    %c0 = arith.constant 0 : index
    %c0_0 = arith.constant 0 : index
    %0 = vector.load %arg2[%c0, %c0_0] : memref<256x128xf32, #tpu.memory_space<vmem>>, vector<256x128xf32>
    %c0_1 = arith.constant 0 : index
    %c0_2 = arith.constant 0 : index
    %c0_3 = arith.constant 0 : index
    %1 = vector.load %arg1[%c0_1, %c0_2, %c0_3] : memref<4x56x256xf32, #tpu.memory_space<vmem>>, vector<1x56x256xf32>
    %2 = vector.shape_cast %1 : vector<1x56x256xf32> to vector<56x256xf32>
    %cst = arith.constant dense<0.000000e+00> : vector<56x128xf32>
    %3 = tpu.matmul %2, %0, %cst {dimension_numbers = #tpu.dot_dimension_numbers<[1], [0], [0], [1], [0, 0, 1, 1], [], []>} : vector<56x256xf32>, vector<256x128xf32>, vector<56x128xf32> -> vector<56x128xf32>
    %c1 = arith.constant 1 : index
    %c0_4 = arith.constant 0 : index
    %c0_5 = arith.constant 0 : index
    %4 = vector.load %arg1[%c1, %c0_4, %c0_5] : memref<4x56x256xf32, #tpu.memory_space<vmem>>, vector<1x56x256xf32>
    %5 = vector.shape_cast %4 : vector<1x56x256xf32> to vector<56x256xf32>
    %cst_6 = arith.constant dense<0.000000e+00> : vector<56x128xf32>
    %6 = tpu.matmul %5, %0, %cst_6 {dimension_numbers = #tpu.dot_dimension_numbers<[1], [0], [0], [1], [0, 0, 1, 1], [], []>} : vector<56x256xf32>, vector<256x128xf32>, vector<56x128xf32> -> vector<56x128xf32>
    %7 = arith.maximumf %3, %6 : vector<56x128xf32>
    %c2 = arith.constant 2 : index
    %c0_7 = arith.constant 0 : index
    %c0_8 = arith.constant 0 : index
    %8 = vector.load %arg1[%c2, %c0_7, %c0_8] : memref<4x56x256xf32, #tpu.memory_space<vmem>>, vector<1x56x256xf32>
    %9 = vector.shape_cast %8 : vector<1x56x256xf32> to vector<56x256xf32>
    %cst_9 = arith.constant dense<0.000000e+00> : vector<56x128xf32>
    %10 = tpu.matmul %9, %0, %cst_9 {dimension_numbers = #tpu.dot_dimension_numbers<[1], [0], [0], [1], [0, 0, 1, 1], [], []>} : vector<56x256xf32>, vector<256x128xf32>, vector<56x128xf32> -> vector<56x128xf32>
    %11 = arith.maximumf %7, %10 : vector<56x128xf32>
    %c3 = arith.constant 3 : index
    %c0_10 = arith.constant 0 : index
    %c0_11 = arith.constant 0 : index
    %12 = vector.load %arg1[%c3, %c0_10, %c0_11] : memref<4x56x256xf32, #tpu.memory_space<vmem>>, vector<1x56x256xf32>
    %13 = vector.shape_cast %12 : vector<1x56x256xf32> to vector<56x256xf32>
    %cst_12 = arith.constant dense<0.000000e+00> : vector<56x128xf32>
    %14 = tpu.matmul %13, %0, %cst_12 {dimension_numbers = #tpu.dot_dimension_numbers<[1], [0], [0], [1], [0, 0, 1, 1], [], []>} : vector<56x256xf32>, vector<256x128xf32>, vector<56x128xf32> -> vector<56x128xf32>
    %15 = arith.maximumf %11, %14 : vector<56x128xf32>
    %c0_13 = arith.constant 0 : index
    %c0_14 = arith.constant 0 : index
    %16 = vector.load %arg3[%c0_13, %c0_14] : memref<1x128xf32, #tpu.memory_space<vmem>>, vector<1x128xf32>
    %17 = vector.broadcast %16 : vector<1x128xf32> to vector<56x128xf32>
    %18 = arith.addf %15, %17 : vector<56x128xf32>
    %cst_15 = arith.constant 0.000000e+00 : f32
    %19 = vector.broadcast %cst_15 : f32 to vector<56x128xf32>
    %20 = arith.maximumf %18, %19 : vector<56x128xf32>
    %c0_16 = arith.constant 0 : index
    %c0_17 = arith.constant 0 : index
    %21 = vector.load %arg4[%c0_16, %c0_17] : memref<56x128xf32, #tpu.memory_space<vmem>>, vector<56x128xf32>
    tpu.vector_store %arg4[%c0_16, %c0_17], %20 {strides = array<i32>} : memref<56x128xf32, #tpu.memory_space<vmem>>, vector<56x128xf32>,
    return
  }
  func.func @transform_0(%arg0: i32) -> (i32, i32, i32) {
    %c0_i32 = arith.constant 0 : i32
    %c0_i32_0 = arith.constant 0 : i32
    %c0_i32_1 = arith.constant 0 : i32
    return %c0_i32, %arg0, %c0_i32_0 : i32, i32, i32
  }
  func.func @transform_1(%arg0: i32) -> (i32, i32) {
    %c0_i32 = arith.constant 0 : i32
    %c0_i32_0 = arith.constant 0 : i32
    %c0_i32_1 = arith.constant 0 : i32
    return %c0_i32, %c0_i32_0 : i32, i32
  }
  func.func @transform_2(%arg0: i32) -> (i32, i32) {
    %c0_i32 = arith.constant 0 : i32
    %c0_i32_0 = arith.constant 0 : i32
    %c0_i32_1 = arith.constant 0 : i32
    return %c0_i32, %c0_i32_0 : i32, i32
  }
  func.func @transform_3(%arg0: i32) -> (i32, i32) {
    %c0_i32 = arith.constant 0 : i32
    %c0_i32_0 = arith.constant 0 : i32
    return %arg0, %c0_i32 : i32, i32
  }
}

module attributes {stable_mosaic.version = 11 : i64} {
  func.func @fc_fused_kernel(%arg0: i32, %arg1: memref<8x512xf32, #tpu.memory_space<vmem>>, %arg2: memref<512x128xf32, #tpu.memory_space<vmem>>, %arg3: memref<1x128xf32, #tpu.memory_space<vmem>>, %arg4: memref<128x128xf32, #tpu.memory_space<vmem>>, %arg5: memref<1x128xf32, #tpu.memory_space<vmem>>, %arg6: memref<128x128xf32, #tpu.memory_space<vmem>>, %arg7: memref<1x128xf32, #tpu.memory_space<vmem>>, %arg8: memref<8x128xf32, #tpu.memory_space<vmem>>) attributes {dimension_semantics = [#tpu.dimension_semantics<parallel>], iteration_bounds = array<i64: 1>, scalar_prefetch = 0 : i64, scratch_operands = 0 : i64, tpu.core_type = #tpu.core_type<tc>, window_params = [{transform_indices = @transform_0, window_bounds = array<i64: 8, 512>}, {pipeline_mode = #tpu.pipeline_mode<synchronous>, transform_indices = @transform_1, window_bounds = array<i64: 512, 128>}, {pipeline_mode = #tpu.pipeline_mode<synchronous>, transform_indices = @transform_2, window_bounds = array<i64: 1, 128>}, {pipeline_mode = #tpu.pipeline_mode<synchronous>, transform_indices = @transform_3, window_bounds = array<i64: 128, 128>}, {pipeline_mode = #tpu.pipeline_mode<synchronous>, transform_indices = @transform_4, window_bounds = array<i64: 1, 128>}, {pipeline_mode = #tpu.pipeline_mode<synchronous>, transform_indices = @transform_5, window_bounds = array<i64: 128, 128>}, {pipeline_mode = #tpu.pipeline_mode<synchronous>, transform_indices = @transform_6, window_bounds = array<i64: 1, 128>}, {transform_indices = @transform_7, window_bounds = array<i64: 8, 128>}]} {
    %c0 = arith.constant 0 : index
    %c0_0 = arith.constant 0 : index
    %0 = vector.load %arg1[%c0, %c0_0] : memref<8x512xf32, #tpu.memory_space<vmem>>, vector<8x512xf32>
    %c0_1 = arith.constant 0 : index
    %c0_2 = arith.constant 0 : index
    %1 = vector.load %arg2[%c0_1, %c0_2] : memref<512x128xf32, #tpu.memory_space<vmem>>, vector<512x128xf32>
    %cst = arith.constant dense<0.000000e+00> : vector<8x128xf32>
    %2 = tpu.matmul %0, %1, %cst {dimension_numbers = #tpu.dot_dimension_numbers<[1], [0], [0], [1], [0, 0, 1, 1], [], []>} : vector<8x512xf32>, vector<512x128xf32>, vector<8x128xf32> -> vector<8x128xf32>
    %c0_3 = arith.constant 0 : index
    %c0_4 = arith.constant 0 : index
    %3 = vector.load %arg3[%c0_3, %c0_4] : memref<1x128xf32, #tpu.memory_space<vmem>>, vector<1x128xf32>
    %4 = vector.broadcast %3 : vector<1x128xf32> to vector<8x128xf32>
    %5 = arith.addf %2, %4 : vector<8x128xf32>
    %cst_5 = arith.constant 0.000000e+00 : f32
    %6 = vector.broadcast %cst_5 : f32 to vector<8x128xf32>
    %7 = arith.maximumf %5, %6 : vector<8x128xf32>
    %c0_6 = arith.constant 0 : index
    %c0_7 = arith.constant 0 : index
    %8 = vector.load %arg4[%c0_6, %c0_7] : memref<128x128xf32, #tpu.memory_space<vmem>>, vector<128x128xf32>
    %cst_8 = arith.constant dense<0.000000e+00> : vector<8x128xf32>
    %9 = tpu.matmul %7, %8, %cst_8 {dimension_numbers = #tpu.dot_dimension_numbers<[1], [0], [0], [1], [0, 0, 1, 1], [], []>} : vector<8x128xf32>, vector<128x128xf32>, vector<8x128xf32> -> vector<8x128xf32>
    %c0_9 = arith.constant 0 : index
    %c0_10 = arith.constant 0 : index
    %10 = vector.load %arg5[%c0_9, %c0_10] : memref<1x128xf32, #tpu.memory_space<vmem>>, vector<1x128xf32>
    %11 = vector.broadcast %10 : vector<1x128xf32> to vector<8x128xf32>
    %12 = arith.addf %9, %11 : vector<8x128xf32>
    %cst_11 = arith.constant 0.000000e+00 : f32
    %13 = vector.broadcast %cst_11 : f32 to vector<8x128xf32>
    %14 = arith.maximumf %12, %13 : vector<8x128xf32>
    %c0_12 = arith.constant 0 : index
    %c0_13 = arith.constant 0 : index
    %15 = vector.load %arg6[%c0_12, %c0_13] : memref<128x128xf32, #tpu.memory_space<vmem>>, vector<128x128xf32>
    %cst_14 = arith.constant dense<0.000000e+00> : vector<8x128xf32>
    %16 = tpu.matmul %14, %15, %cst_14 {dimension_numbers = #tpu.dot_dimension_numbers<[1], [0], [0], [1], [0, 0, 1, 1], [], []>} : vector<8x128xf32>, vector<128x128xf32>, vector<8x128xf32> -> vector<8x128xf32>
    %c0_15 = arith.constant 0 : index
    %c0_16 = arith.constant 0 : index
    %17 = vector.load %arg7[%c0_15, %c0_16] : memref<1x128xf32, #tpu.memory_space<vmem>>, vector<1x128xf32>
    %18 = vector.broadcast %17 : vector<1x128xf32> to vector<8x128xf32>
    %19 = arith.addf %16, %18 : vector<8x128xf32>
    %c0_17 = arith.constant 0 : index
    %c0_18 = arith.constant 0 : index
    %20 = vector.load %arg8[%c0_17, %c0_18] : memref<8x128xf32, #tpu.memory_space<vmem>>, vector<8x128xf32>
    tpu.vector_store %arg8[%c0_17, %c0_18], %19 {strides = array<i32>} : memref<8x128xf32, #tpu.memory_space<vmem>>, vector<8x128xf32>,
    return
  }
  func.func @transform_0(%arg0: i32) -> (i32, i32) {
    %c0_i32 = arith.constant 0 : i32
    %c0_i32_0 = arith.constant 0 : i32
    return %arg0, %c0_i32 : i32, i32
  }
  func.func @transform_1(%arg0: i32) -> (i32, i32) {
    %c0_i32 = arith.constant 0 : i32
    %c0_i32_0 = arith.constant 0 : i32
    %c0_i32_1 = arith.constant 0 : i32
    return %c0_i32, %c0_i32_0 : i32, i32
  }
  func.func @transform_2(%arg0: i32) -> (i32, i32) {
    %c0_i32 = arith.constant 0 : i32
    %c0_i32_0 = arith.constant 0 : i32
    %c0_i32_1 = arith.constant 0 : i32
    return %c0_i32, %c0_i32_0 : i32, i32
  }
  func.func @transform_3(%arg0: i32) -> (i32, i32) {
    %c0_i32 = arith.constant 0 : i32
    %c0_i32_0 = arith.constant 0 : i32
    %c0_i32_1 = arith.constant 0 : i32
    return %c0_i32, %c0_i32_0 : i32, i32
  }
  func.func @transform_4(%arg0: i32) -> (i32, i32) {
    %c0_i32 = arith.constant 0 : i32
    %c0_i32_0 = arith.constant 0 : i32
    %c0_i32_1 = arith.constant 0 : i32
    return %c0_i32, %c0_i32_0 : i32, i32
  }
  func.func @transform_5(%arg0: i32) -> (i32, i32) {
    %c0_i32 = arith.constant 0 : i32
    %c0_i32_0 = arith.constant 0 : i32
    %c0_i32_1 = arith.constant 0 : i32
    return %c0_i32, %c0_i32_0 : i32, i32
  }
  func.func @transform_6(%arg0: i32) -> (i32, i32) {
    %c0_i32 = arith.constant 0 : i32
    %c0_i32_0 = arith.constant 0 : i32
    %c0_i32_1 = arith.constant 0 : i32
    return %c0_i32, %c0_i32_0 : i32, i32
  }
  func.func @transform_7(%arg0: i32) -> (i32, i32) {
    %c0_i32 = arith.constant 0 : i32
    %c0_i32_0 = arith.constant 0 : i32
    return %arg0, %c0_i32 : i32, i32
  }
}

</mosaic_0001>

<llo_original>
// kernel: net2_forward.3
$region0: #{net2_forward.3}
  #allocation0 [shape = 'u32[]', space=smem, size = 0x4, offset = 0x4, fixed_abs, tag = 'smem constant byte address 0x4 - core index']
  #allocation1 [shape = 'u32[144,128]{1,0:T(1,128)}', space=vmem, size = 0x12000, scoped, tag = 'internal scratch']
  %s0 = inlined_call_operand.vmem [shape: f32[4,392,128], index: 0, kind: input, shape index: {}]
  %s1 = inlined_call_operand.vmem [shape: f32[128,128], index: 1, kind: input, shape index: {}]
  %s2 = inlined_call_operand.vmem [shape: f32[1,128], index: 2, kind: input, shape index: {}]
  %s3 = inlined_call_operand.vmem [shape: f32[392,128], index: 3, kind: output, shape index: {}]
  %s4 = sld [smem:[#allocation0]]
  $region22: #{net2_forward.3} parent=0
    _
  %s6 = ssub.s32 1, %s4
  %s7 = scalar_select 0, %s6, %s4
  // Predicated region
  $region2: #{net2_forward.3} parent=0 // pred_check
    _
  $region3: #{net2_forward.3} parent=0 // pred_check_branch
    %9 = sbr.rel (0) target = $region5
  $region4: #{net2_forward.3} parent=0 // pred_region
    _
  $region5: #{net2_forward.3} parent=0 // pred_fallthru
    _
  // Predicated region
  $region6: #{net2_forward.3} parent=0 // pred_check
    _
  $region7: #{net2_forward.3} parent=0 // pred_check_branch
    %11 = sbr.rel (0) target = $region9
  $region8: #{net2_forward.3} parent=0 // pred_region
    _
  $region9: #{net2_forward.3} parent=0 // pred_fallthru
    _
  // Predicated region
  $region10: #{net2_forward.3} parent=0 // pred_check
    _
  $region11: #{net2_forward.3} parent=0 // pred_check_branch
    %13 = sbr.rel (0) target = $region13
  $region12: #{net2_forward.3} parent=0 // pred_region
    _
  $region13: #{net2_forward.3} parent=0 // pred_fallthru
    _
  %v14 = vld [vmem:[%s1] sm:$0xff]
  %v15 = vld [vmem:[%s1 + $0x8] sm:$0xff]
  %v16 = vld [vmem:[%s1 + $0x10] sm:$0xff]
  %v17 = vld [vmem:[%s1 + $0x18] sm:$0xff]
  %v18 = vld [vmem:[%s1 + $0x20] sm:$0xff]
  %v19 = vld [vmem:[%s1 + $0x28] sm:$0xff]
  %v20 = vld [vmem:[%s1 + $0x30] sm:$0xff]
  %v21 = vld [vmem:[%s1 + $0x38] sm:$0xff]
  %v22 = vld [vmem:[%s1 + $0x40] sm:$0xff]
  %v23 = vld [vmem:[%s1 + $0x48] sm:$0xff]
  %v24 = vld [vmem:[%s1 + $0x50] sm:$0xff]
  %v25 = vld [vmem:[%s1 + $0x58] sm:$0xff]
  %v26 = vld [vmem:[%s1 + $0x60] sm:$0xff]
  %v27 = vld [vmem:[%s1 + $0x68] sm:$0xff]
  %v28 = vld [vmem:[%s1 + $0x70] sm:$0xff]
  %v29 = vld [vmem:[%s1 + $0x78] sm:$0xff]
  %v30 = vld [vmem:[%s0] sm:$0xff]
  %v31 = vld [vmem:[%s0 + $0x8] sm:$0xff]
  %v32 = vld [vmem:[%s0 + $0x10] sm:$0xff]
  %v33 = vld [vmem:[%s0 + $0x18] sm:$0xff]
  %v34 = vld [vmem:[%s0 + $0x20] sm:$0xff]
  %v35 = vld [vmem:[%s0 + $0x28] sm:$0xff]
  %v36 = vld [vmem:[%s0 + $0x30] sm:$0xff]
  %v37 = vld [vmem:[%s0 + $0x38] sm:$0xff]
  %v38 = vld [vmem:[%s0 + $0x40] sm:$0xff]
  %v39 = vld [vmem:[%s0 + $0x48] sm:$0xff]
  %v40 = vld [vmem:[%s0 + $0x50] sm:$0xff]
  %v41 = vld [vmem:[%s0 + $0x58] sm:$0xff]
  %v42 = vld [vmem:[%s0 + $0x60] sm:$0xff]
  %v43 = vld [vmem:[%s0 + $0x68] sm:$0xff]
  %v44 = vld [vmem:[%s0 + $0x70] sm:$0xff]
  %v45 = vld [vmem:[%s0 + $0x78] sm:$0xff]
  %v46 = vld [vmem:[%s0 + $0x80] sm:$0xff]
  %v47 = vld [vmem:[%s0 + $0x88] sm:$0xff]
  %v48 = vld [vmem:[%s0 + $0x90] sm:$0xff]
  %v49 = vld [vmem:[%s0 + $0x98] sm:$0xff]
  %v50 = vld [vmem:[%s0 + $0xa0] sm:$0xff]
  %v51 = vld [vmem:[%s0 + $0xa8] sm:$0xff]
  %v52 = vld [vmem:[%s0 + $0xb0] sm:$0xff]
  %v53 = vld [vmem:[%s0 + $0xb8] sm:$0xff]
  %v54 = vld [vmem:[%s0 + $0xc0] sm:$0xff]
  %v55 = vld [vmem:[%s0 + $0xc8] sm:$0xff]
  %v56 = vld [vmem:[%s0 + $0xd0] sm:$0xff]
  %v57 = vld [vmem:[%s0 + $0xd8] sm:$0xff]
  %v58 = vld [vmem:[%s0 + $0xe0] sm:$0xff]
  %v59 = vld [vmem:[%s0 + $0xe8] sm:$0xff]
  %v60 = vld [vmem:[%s0 + $0xf0] sm:$0xff]
  %v61 = vld [vmem:[%s0 + $0xf8] sm:$0xff]
  %v62 = vld [vmem:[%s0 + $0x100] sm:$0xff]
  %v63 = vld [vmem:[%s0 + $0x108] sm:$0xff]
  %v64 = vld [vmem:[%s0 + $0x110] sm:$0xff]
  %v65 = vld [vmem:[%s0 + $0x118] sm:$0xff]
  %v66 = vld [vmem:[%s0 + $0x120] sm:$0xff]
  %v67 = vld [vmem:[%s0 + $0x128] sm:$0xff]
  %v68 = vld [vmem:[%s0 + $0x130] sm:$0xff]
  %v69 = vld [vmem:[%s0 + $0x138] sm:$0xff]
  %v70 = vld [vmem:[%s0 + $0x140] sm:$0xff]
  %v71 = vld [vmem:[%s0 + $0x148] sm:$0xff]
  %v72 = vld [vmem:[%s0 + $0x150] sm:$0xff]
  %v73 = vld [vmem:[%s0 + $0x158] sm:$0xff]
  %v74 = vld [vmem:[%s0 + $0x160] sm:$0xff]
  %v75 = vld [vmem:[%s0 + $0x168] sm:$0xff]
  %v76 = vld [vmem:[%s0 + $0x170] sm:$0xff]
  %v77 = vld [vmem:[%s0 + $0x178] sm:$0xff]
  %v78 = vld [vmem:[%s0 + $0x180] sm:$0xff]
  %79 = vmatprep.subr.mxu0 0.0
  %80 = vmatpush1.msra.mxu0 %v14
  %81 = vmatprep.subr.mxu0 0.0
  %82 = vmatpush1.msra.mxu0 %v15
  %83 = vmatprep.subr.mxu0 0.0
  %84 = vmatpush1.msra.mxu0 %v16
  %85 = vmatprep.subr.mxu0 0.0
  %86 = vmatpush1.msra.mxu0 %v17
  %87 = vmatprep.subr.mxu0 0.0
  %88 = vmatpush1.msra.mxu0 %v18
  %89 = vmatprep.subr.mxu0 0.0
  %90 = vmatpush1.msra.mxu0 %v19
  %91 = vmatprep.subr.mxu0 0.0
  %92 = vmatpush1.msra.mxu0 %v20
  %93 = vmatprep.subr.mxu0 0.0
  %94 = vmatpush1.msra.mxu0 %v21
  %95 = vmatprep.subr.mxu0 0.0
  %96 = vmatpush1.msra.mxu0 %v22
  %97 = vmatprep.subr.mxu0 0.0
  %98 = vmatpush1.msra.mxu0 %v23
  %99 = vmatprep.subr.mxu0 0.0
  %100 = vmatpush1.msra.mxu0 %v24
  %101 = vmatprep.subr.mxu0 0.0
  %102 = vmatpush1.msra.mxu0 %v25
  %103 = vmatprep.subr.mxu0 0.0
  %104 = vmatpush1.msra.mxu0 %v26
  %105 = vmatprep.subr.mxu0 0.0
  %106 = vmatpush1.msra.mxu0 %v27
  %107 = vmatprep.subr.mxu0 0.0
  %108 = vmatpush1.msra.mxu0 %v28
  %109 = vmatprep.subr.mxu0 0.0
  %110 = vmatpush1.msra.mxu0 %v29
  %111 = vmatprep.subr.mxu0 0.0
  %112 = vmatpush1.msra.mxu0 0.0
  %113 = vmatprep.subr.mxu0 0.0
  %114 = vmatpush1.msra.mxu0 0.0
  %115 = vmatprep.subr.mxu0 0.0
  %116 = vmatpush1.msra.mxu0 0.0
  %117 = vmatprep.subr.mxu0 0.0
  %118 = vmatpush1.msra.mxu0 0.0
  %119 = vmatprep.subr.mxu0 0.0
  %120 = vmatpush1.msra.mxu0 0.0
  %121 = vmatprep.subr.mxu0 0.0
  %122 = vmatpush1.msra.mxu0 0.0
  %123 = vmatprep.subr.mxu0 0.0
  %124 = vmatpush1.msra.mxu0 0.0
  %125 = vmatprep.subr.mxu0 0.0
  %126 = vmatpush1.msra.mxu0 0.0
  %127 = vmatprep.subr.mxu0 0.0
  %128 = vmatpush1.msra.mxu0 0.0
  %129 = vmatprep.subr.mxu0 0.0
  %130 = vmatpush1.msra.mxu0 0.0
  %131 = vmatprep.subr.mxu0 0.0
  %132 = vmatpush1.msra.mxu0 0.0
  %133 = vmatprep.subr.mxu0 0.0
  %134 = vmatpush1.msra.mxu0 0.0
  %135 = vmatprep.subr.mxu0 0.0
  %136 = vmatpush1.msra.mxu0 0.0
  %137 = vmatprep.subr.mxu0 0.0
  %138 = vmatpush1.msra.mxu0 0.0
  %139 = vmatprep.subr.mxu0 0.0
  %140 = vmatpush1.msra.mxu0 0.0
  %141 = vmatprep.subr.mxu0 0.0
  %142 = vmatpush1.msra.mxu0 0.0
  %143 = vmatprep.mubr.f32.mxu0 0.0
  %144 = vmatmul.mubr.f32.gmra.mrb[0].mxu0 %v30
  %v145 = vpop.f32.mrb[0].mxu0
  %v146 = vadd.f32 0.0, %v145
  %v147 = vpop.f32.mrb[0].mxu0
  %148 = vmatprep.mubr.f32.mxu0 0.0
  %149 = vmatmul.mubr.f32.gmra.mrb[0].mxu0 %v31
  %v150 = vpop.f32.mrb[0].mxu0
  %v151 = vadd.f32 0.0, %v150
  %v152 = vpop.f32.mrb[0].mxu0
  %153 = vmatprep.mubr.f32.mxu0 0.0
  %154 = vmatmul.mubr.f32.gmra.mrb[0].mxu0 %v32
  %v155 = vpop.f32.mrb[0].mxu0
  %v156 = vadd.f32 0.0, %v155
  %v157 = vpop.f32.mrb[0].mxu0
  %158 = vmatprep.mubr.f32.mxu0 0.0
  %159 = vmatmul.mubr.f32.gmra.mrb[0].mxu0 %v33
  %v160 = vpop.f32.mrb[0].mxu0
  %v161 = vadd.f32 0.0, %v160
  %v162 = vpop.f32.mrb[0].mxu0
  %163 = vmatprep.mubr.f32.mxu0 0.0
  %164 = vmatmul.mubr.f32.gmra.mrb[0].mxu0 %v34
  %v165 = vpop.f32.mrb[0].mxu0
  %v166 = vadd.f32 0.0, %v165
  %v167 = vpop.f32.mrb[0].mxu0
  %168 = vmatprep.mubr.f32.mxu0 0.0
  %169 = vmatmul.mubr.f32.gmra.mrb[0].mxu0 %v35
  %v170 = vpop.f32.mrb[0].mxu0
  %v171 = vadd.f32 0.0, %v170
  %v172 = vpop.f32.mrb[0].mxu0
  %173 = vmatprep.mubr.f32.mxu0 0.0
  %174 = vmatmul.mubr.f32.gmra.mrb[0].mxu0 %v36
  %v175 = vpop.f32.mrb[0].mxu0
  %v176 = vadd.f32 0.0, %v175
  %v177 = vpop.f32.mrb[0].mxu0
  %178 = vmatprep.mubr.f32.mxu0 0.0
  %179 = vmatmul.mubr.f32.gmra.mrb[0].mxu0 %v37
  %v180 = vpop.f32.mrb[0].mxu0
  %v181 = vadd.f32 0.0, %v180
  %v182 = vpop.f32.mrb[0].mxu0
  %183 = vmatprep.mubr.f32.mxu0 0.0
  %184 = vmatmul.mubr.f32.gmra.mrb[0].mxu0 %v38
  %v185 = vpop.f32.mrb[0].mxu0
  %v186 = vadd.f32 0.0, %v185
  %v187 = vpop.f32.mrb[0].mxu0
  %188 = vmatprep.mubr.f32.mxu0 0.0
  %189 = vmatmul.mubr.f32.gmra.mrb[0].mxu0 %v39
  %v190 = vpop.f32.mrb[0].mxu0
  %v191 = vadd.f32 0.0, %v190
  %v192 = vpop.f32.mrb[0].mxu0
  %193 = vmatprep.mubr.f32.mxu0 0.0
  %194 = vmatmul.mubr.f32.gmra.mrb[0].mxu0 %v40
  %v195 = vpop.f32.mrb[0].mxu0
  %v196 = vadd.f32 0.0, %v195
  %v197 = vpop.f32.mrb[0].mxu0
  %198 = vmatprep.mubr.f32.mxu0 0.0
  %199 = vmatmul.mubr.f32.gmra.mrb[0].mxu0 %v41
  %v200 = vpop.f32.mrb[0].mxu0
  %v201 = vadd.f32 0.0, %v200
  %v202 = vpop.f32.mrb[0].mxu0
  %203 = vmatprep.mubr.f32.mxu0 0.0
  %204 = vmatmul.mubr.f32.gmra.mrb[0].mxu0 %v42
  %v205 = vpop.f32.mrb[0].mxu0
  %v206 = vadd.f32 0.0, %v205
  %v207 = vpop.f32.mrb[0].mxu0
  %208 = vmatprep.mubr.f32.mxu0 0.0
  %209 = vmatmul.mubr.f32.gmra.mrb[0].mxu0 %v43
  %v210 = vpop.f32.mrb[0].mxu0
  %v211 = vadd.f32 0.0, %v210
  %v212 = vpop.f32.mrb[0].mxu0
  %213 = vmatprep.mubr.f32.mxu0 0.0
  %214 = vmatmul.mubr.f32.gmra.mrb[0].mxu0 %v44
  %v215 = vpop.f32.mrb[0].mxu0
  %v216 = vadd.f32 0.0, %v215
  %v217 = vpop.f32.mrb[0].mxu0
  %218 = vmatprep.mubr.f32.mxu0 0.0
  %219 = vmatmul.mubr.f32.gmra.mrb[0].mxu0 %v45
  %v220 = vpop.f32.mrb[0].mxu0
  %v221 = vadd.f32 0.0, %v220
  %v222 = vpop.f32.mrb[0].mxu0
  %223 = vmatprep.mubr.f32.mxu0 0.0
  %224 = vmatmul.mubr.f32.gmra.mrb[0].mxu0 %v46
  %v225 = vpop.f32.mrb[0].mxu0
  %v226 = vadd.f32 0.0, %v225
  %v227 = vpop.f32.mrb[0].mxu0
  %228 = vmatprep.mubr.f32.mxu0 0.0
  %229 = vmatmul.mubr.f32.gmra.mrb[0].mxu0 %v47
  %v230 = vpop.f32.mrb[0].mxu0
  %v231 = vadd.f32 0.0, %v230
  %v232 = vpop.f32.mrb[0].mxu0
  %233 = vmatprep.mubr.f32.mxu0 0.0
  %234 = vmatmul.mubr.f32.gmra.mrb[0].mxu0 %v48
  %v235 = vpop.f32.mrb[0].mxu0
  %v236 = vadd.f32 0.0, %v235
  %v237 = vpop.f32.mrb[0].mxu0
  %238 = vmatprep.mubr.f32.mxu0 0.0
  %239 = vmatmul.mubr.f32.gmra.mrb[0].mxu0 %v49
  %v240 = vpop.f32.mrb[0].mxu0
  %v241 = vadd.f32 0.0, %v240
  %v242 = vpop.f32.mrb[0].mxu0
  %243 = vmatprep.mubr.f32.mxu0 0.0
  %244 = vmatmul.mubr.f32.gmra.mrb[0].mxu0 %v50
  %v245 = vpop.f32.mrb[0].mxu0
  %v246 = vadd.f32 0.0, %v245
  %v247 = vpop.f32.mrb[0].mxu0
  %248 = vmatprep.mubr.f32.mxu0 0.0
  %249 = vmatmul.mubr.f32.gmra.mrb[0].mxu0 %v51
  %v250 = vpop.f32.mrb[0].mxu0
  %v251 = vadd.f32 0.0, %v250
  %v252 = vpop.f32.mrb[0].mxu0
  %253 = vmatprep.mubr.f32.mxu0 0.0
  %254 = vmatmul.mubr.f32.gmra.mrb[0].mxu0 %v52
  %v255 = vpop.f32.mrb[0].mxu0
  %v256 = vadd.f32 0.0, %v255
  %v257 = vpop.f32.mrb[0].mxu0
  %258 = vmatprep.mubr.f32.mxu0 0.0
  %259 = vmatmul.mubr.f32.gmra.mrb[0].mxu0 %v53
  %v260 = vpop.f32.mrb[0].mxu0
  %v261 = vadd.f32 0.0, %v260
  %v262 = vpop.f32.mrb[0].mxu0
  %263 = vmatprep.mubr.f32.mxu0 0.0
  %264 = vmatmul.mubr.f32.gmra.mrb[0].mxu0 %v54
  %v265 = vpop.f32.mrb[0].mxu0
  %v266 = vadd.f32 0.0, %v265
  %v267 = vpop.f32.mrb[0].mxu0
  %268 = vmatprep.mubr.f32.mxu0 0.0
  %269 = vmatmul.mubr.f32.gmra.mrb[0].mxu0 %v55
  %v270 = vpop.f32.mrb[0].mxu0
  %v271 = vadd.f32 0.0, %v270
  %v272 = vpop.f32.mrb[0].mxu0
  %273 = vmatprep.mubr.f32.mxu0 0.0
  %274 = vmatmul.mubr.f32.gmra.mrb[0].mxu0 %v56
  %v275 = vpop.f32.mrb[0].mxu0
  %v276 = vadd.f32 0.0, %v275
  %v277 = vpop.f32.mrb[0].mxu0
  %278 = vmatprep.mubr.f32.mxu0 0.0
  %279 = vmatmul.mubr.f32.gmra.mrb[0].mxu0 %v57
  %v280 = vpop.f32.mrb[0].mxu0
  %v281 = vadd.f32 0.0, %v280
  %v282 = vpop.f32.mrb[0].mxu0
  %283 = vmatprep.mubr.f32.mxu0 0.0
  %284 = vmatmul.mubr.f32.gmra.mrb[0].mxu0 %v58
  %v285 = vpop.f32.mrb[0].mxu0
  %v286 = vadd.f32 0.0, %v285
  %v287 = vpop.f32.mrb[0].mxu0
  %288 = vmatprep.mubr.f32.mxu0 0.0
  %289 = vmatmul.mubr.f32.gmra.mrb[0].mxu0 %v59
  %v290 = vpop.f32.mrb[0].mxu0
  %v291 = vadd.f32 0.0, %v290
  %v292 = vpop.f32.mrb[0].mxu0
  %293 = vmatprep.mubr.f32.mxu0 0.0
  %294 = vmatmul.mubr.f32.gmra.mrb[0].mxu0 %v60
  %v295 = vpop.f32.mrb[0].mxu0
  %v296 = vadd.f32 0.0, %v295
  %v297 = vpop.f32.mrb[0].mxu0
  %298 = vmatprep.mubr.f32.mxu0 0.0
  %299 = vmatmul.mubr.f32.gmra.mrb[0].mxu0 %v61
  %v300 = vpop.f32.mrb[0].mxu0
  %v301 = vadd.f32 0.0, %v300
  %v302 = vpop.f32.mrb[0].mxu0
  %303 = vmatprep.mubr.f32.mxu0 0.0
  %304 = vmatmul.mubr.f32.gmra.mrb[0].mxu0 %v62
  %v305 = vpop.f32.mrb[0].mxu0
  %v306 = vadd.f32 0.0, %v305
  %v307 = vpop.f32.mrb[0].mxu0
  %308 = vmatprep.mubr.f32.mxu0 0.0
  %309 = vmatmul.mubr.f32.gmra.mrb[0].mxu0 %v63
  %v310 = vpop.f32.mrb[0].mxu0
  %v311 = vadd.f32 0.0, %v310
  %v312 = vpop.f32.mrb[0].mxu0
  %313 = vmatprep.mubr.f32.mxu0 0.0
  %314 = vmatmul.mubr.f32.gmra.mrb[0].mxu0 %v64
  %v315 = vpop.f32.mrb[0].mxu0
  %v316 = vadd.f32 0.0, %v315
  %v317 = vpop.f32.mrb[0].mxu0
  %318 = vmatprep.mubr.f32.mxu0 0.0
  %319 = vmatmul.mubr.f32.gmra.mrb[0].mxu0 %v65
  %v320 = vpop.f32.mrb[0].mxu0
  %v321 = vadd.f32 0.0, %v320
  %v322 = vpop.f32.mrb[0].mxu0
  %323 = vmatprep.mubr.f32.mxu0 0.0
  %324 = vmatmul.mubr.f32.gmra.mrb[0].mxu0 %v66
  %v325 = vpop.f32.mrb[0].mxu0
  %v326 = vadd.f32 0.0, %v325
  %v327 = vpop.f32.mrb[0].mxu0
  %328 = vmatprep.mubr.f32.mxu0 0.0
  %329 = vmatmul.mubr.f32.gmra.mrb[0].mxu0 %v67
  %v330 = vpop.f32.mrb[0].mxu0
  %v331 = vadd.f32 0.0, %v330
  %v332 = vpop.f32.mrb[0].mxu0
  %333 = vmatprep.mubr.f32.mxu0 0.0
  %334 = vmatmul.mubr.f32.gmra.mrb[0].mxu0 %v68
  %v335 = vpop.f32.mrb[0].mxu0
  %v336 = vadd.f32 0.0, %v335
  %v337 = vpop.f32.mrb[0].mxu0
  %338 = vmatprep.mubr.f32.mxu0 0.0
  %339 = vmatmul.mubr.f32.gmra.mrb[0].mxu0 %v69
  %v340 = vpop.f32.mrb[0].mxu0
  %v341 = vadd.f32 0.0, %v340
  %v342 = vpop.f32.mrb[0].mxu0
  %343 = vmatprep.mubr.f32.mxu0 0.0
  %344 = vmatmul.mubr.f32.gmra.mrb[0].mxu0 %v70
  %v345 = vpop.f32.mrb[0].mxu0
  %v346 = vadd.f32 0.0, %v345
  %v347 = vpop.f32.mrb[0].mxu0
  %348 = vmatprep.mubr.f32.mxu0 0.0
  %349 = vmatmul.mubr.f32.gmra.mrb[0].mxu0 %v71
  %v350 = vpop.f32.mrb[0].mxu0
  %v351 = vadd.f32 0.0, %v350
  %v352 = vpop.f32.mrb[0].mxu0
  %353 = vmatprep.mubr.f32.mxu0 0.0
  %354 = vmatmul.mubr.f32.gmra.mrb[0].mxu0 %v72
  %v355 = vpop.f32.mrb[0].mxu0
  %v356 = vadd.f32 0.0, %v355
  %v357 = vpop.f32.mrb[0].mxu0
  %358 = vmatprep.mubr.f32.mxu0 0.0
  %359 = vmatmul.mubr.f32.gmra.mrb[0].mxu0 %v73
  %v360 = vpop.f32.mrb[0].mxu0
  %v361 = vadd.f32 0.0, %v360
  %v362 = vpop.f32.mrb[0].mxu0
  %363 = vmatprep.mubr.f32.mxu0 0.0
  %364 = vmatmul.mubr.f32.gmra.mrb[0].mxu0 %v74
  %v365 = vpop.f32.mrb[0].mxu0
  %v366 = vadd.f32 0.0, %v365
  %v367 = vpop.f32.mrb[0].mxu0
  %368 = vmatprep.mubr.f32.mxu0 0.0
  %369 = vmatmul.mubr.f32.gmra.mrb[0].mxu0 %v75
  %v370 = vpop.f32.mrb[0].mxu0
  %v371 = vadd.f32 0.0, %v370
  %v372 = vpop.f32.mrb[0].mxu0
  %373 = vmatprep.mubr.f32.mxu0 0.0
  %374 = vmatmul.mubr.f32.gmra.mrb[0].mxu0 %v76
  %v375 = vpop.f32.mrb[0].mxu0
  %v376 = vadd.f32 0.0, %v375
  %v377 = vpop.f32.mrb[0].mxu0
  %378 = vmatprep.mubr.f32.mxu0 0.0
  %379 = vmatmul.mubr.f32.gmra.mrb[0].mxu0 %v77
  %v380 = vpop.f32.mrb[0].mxu0
  %v381 = vadd.f32 0.0, %v380
  %v382 = vpop.f32.mrb[0].mxu0
  %383 = vmatprep.mubr.f32.mxu0 0.0
  %384 = vmatmul.mubr.f32.gmra.mrb[0].mxu0 %v78
  %v385 = vpop.f32.mrb[0].mxu0
  %v386 = vadd.f32 0.0, %v385
  %v387 = vpop.f32.mrb[0].mxu0
  %388 = vdwg.mxu0
  %s389 = scalar_lea.vmem %s0, 392
  %v390 = vld [vmem:[%s389] sm:$0xff]
  %v391 = vld [vmem:[%s389 + $0x8] sm:$0xff]
  %v392 = vld [vmem:[%s389 + $0x10] sm:$0xff]
  %v393 = vld [vmem:[%s389 + $0x18] sm:$0xff]
  %v394 = vld [vmem:[%s389 + $0x20] sm:$0xff]
  %v395 = vld [vmem:[%s389 + $0x28] sm:$0xff]
  %v396 = vld [vmem:[%s389 + $0x30] sm:$0xff]
  %v397 = vld [vmem:[%s389 + $0x38] sm:$0xff]
  %v398 = vld [vmem:[%s389 + $0x40] sm:$0xff]
  %v399 = vld [vmem:[%s389 + $0x48] sm:$0xff]
  %v400 = vld [vmem:[%s389 + $0x50] sm:$0xff]
  %v401 = vld [vmem:[%s389 + $0x58] sm:$0xff]
  %v402 = vld [vmem:[%s389 + $0x60] sm:$0xff]
  %v403 = vld [vmem:[%s389 + $0x68] sm:$0xff]
  %v404 = vld [vmem:[%s389 + $0x70] sm:$0xff]
  %v405 = vld [vmem:[%s389 + $0x78] sm:$0xff]
  %v406 = vld [vmem:[%s389 + $0x80] sm:$0xff]
  %v407 = vld [vmem:[%s389 + $0x88] sm:$0xff]
  %v408 = vld [vmem:[%s389 + $0x90] sm:$0xff]
  %v409 = vld [vmem:[%s389 + $0x98] sm:$0xff]
  %v410 = vld [vmem:[%s389 + $0xa0] sm:$0xff]
  %v411 = vld [vmem:[%s389 + $0xa8] sm:$0xff]
  %v412 = vld [vmem:[%s389 + $0xb0] sm:$0xff]
  %v413 = vld [vmem:[%s389 + $0xb8] sm:$0xff]
  %v414 = vld [vmem:[%s389 + $0xc0] sm:$0xff]
  %v415 = vld [vmem:[%s389 + $0xc8] sm:$0xff]
  %v416 = vld [vmem:[%s389 + $0xd0] sm:$0xff]
  %v417 = vld [vmem:[%s389 + $0xd8] sm:$0xff]
  %v418 = vld [vmem:[%s389 + $0xe0] sm:$0xff]
  %v419 = vld [vmem:[%s389 + $0xe8] sm:$0xff]
  %v420 = vld [vmem:[%s389 + $0xf0] sm:$0xff]
  %v421 = vld [vmem:[%s389 + $0xf8] sm:$0xff]
  %v422 = vld [vmem:[%s389 + $0x100] sm:$0xff]
  %v423 = vld [vmem:[%s389 + $0x108] sm:$0xff]
  %v424 = vld [vmem:[%s389 + $0x110] sm:$0xff]
  %v425 = vld [vmem:[%s389 + $0x118] sm:$0xff]
  %v426 = vld [vmem:[%s389 + $0x120] sm:$0xff]
  %v427 = vld [vmem:[%s389 + $0x128] sm:$0xff]
  %v428 = vld [vmem:[%s389 + $0x130] sm:$0xff]
  %v429 = vld [vmem:[%s389 + $0x138] sm:$0xff]
  %v430 = vld [vmem:[%s389 + $0x140] sm:$0xff]
  %v431 = vld [vmem:[%s389 + $0x148] sm:$0xff]
  %v432 = vld [vmem:[%s389 + $0x150] sm:$0xff]
  %v433 = vld [vmem:[%s389 + $0x158] sm:$0xff]
  %v434 = vld [vmem:[%s389 + $0x160] sm:$0xff]
  %v435 = vld [vmem:[%s389 + $0x168] sm:$0xff]
  %v436 = vld [vmem:[%s389 + $0x170] sm:$0xff]
  %v437 = vld [vmem:[%s389 + $0x178] sm:$0xff]
  %v438 = vld [vmem:[%s389 + $0x180] sm:$0xff]
  %439 = vmatprep.subr.mxu0 0.0
  %440 = vmatpush1.msra.mxu0 %v14
  %441 = vmatprep.subr.mxu0 0.0
  %442 = vmatpush1.msra.mxu0 %v15
  %443 = vmatprep.subr.mxu0 0.0
  %444 = vmatpush1.msra.mxu0 %v16
  %445 = vmatprep.subr.mxu0 0.0
  %446 = vmatpush1.msra.mxu0 %v17
  %447 = vmatprep.subr.mxu0 0.0
  %448 = vmatpush1.msra.mxu0 %v18
  %449 = vmatprep.subr.mxu0 0.0
  %450 = vmatpush1.msra.mxu0 %v19
  %451 = vmatprep.subr.mxu0 0.0
  %452 = vmatpush1.msra.mxu0 %v20
  %453 = vmatprep.subr.mxu0 0.0
  %454 = vmatpush1.msra.mxu0 %v21
  %455 = vmatprep.subr.mxu0 0.0
  %456 = vmatpush1.msra.mxu0 %v22
  %457 = vmatprep.subr.mxu0 0.0
  %458 = vmatpush1.msra.mxu0 %v23
  %459 = vmatprep.subr.mxu0 0.0
  %460 = vmatpush1.msra.mxu0 %v24
  %461 = vmatprep.subr.mxu0 0.0
  %462 = vmatpush1.msra.mxu0 %v25
  %463 = vmatprep.subr.mxu0 0.0
  %464 = vmatpush1.msra.mxu0 %v26
  %465 = vmatprep.subr.mxu0 0.0
  %466 = vmatpush1.msra.mxu0 %v27
  %467 = vmatprep.subr.mxu0 0.0
  %468 = vmatpush1.msra.mxu0 %v28
  %469 = vmatprep.subr.mxu0 0.0
  %470 = vmatpush1.msra.mxu0 %v29
  %471 = vmatprep.subr.mxu0 0.0
  %472 = vmatpush1.msra.mxu0 0.0
  %473 = vmatprep.subr.mxu0 0.0
  %474 = vmatpush1.msra.mxu0 0.0
  %475 = vmatprep.subr.mxu0 0.0
  %476 = vmatpush1.msra.mxu0 0.0
  %477 = vmatprep.subr.mxu0 0.0
  %478 = vmatpush1.msra.mxu0 0.0
  %479 = vmatprep.subr.mxu0 0.0
  %480 = vmatpush1.msra.mxu0 0.0
  %481 = vmatprep.subr.mxu0 0.0
  %482 = vmatpush1.msra.mxu0 0.0
  %483 = vmatprep.subr.mxu0 0.0
  %484 = vmatpush1.msra.mxu0 0.0
  %485 = vmatprep.subr.mxu0 0.0
  %486 = vmatpush1.msra.mxu0 0.0
  %487 = vmatprep.subr.mxu0 0.0
  %488 = vmatpush1.msra.mxu0 0.0
  %489 = vmatprep.subr.mxu0 0.0
  %490 = vmatpush1.msra.mxu0 0.0
  %491 = vmatprep.subr.mxu0 0.0
  %492 = vmatpush1.msra.mxu0 0.0
  %493 = vmatprep.subr.mxu0 0.0
  %494 = vmatpush1.msra.mxu0 0.0
  %495 = vmatprep.subr.mxu0 0.0
  %496 = vmatpush1.msra.mxu0 0.0
  %497 = vmatprep.subr.mxu0 0.0
  %498 = vmatpush1.msra.mxu0 0.0
  %499 = vmatprep.subr.mxu0 0.0
  %500 = vmatpush1.msra.mxu0 0.0
  %501 = vmatprep.subr.mxu0 0.0
  %502 = vmatpush1.msra.mxu0 0.0
  %503 = vmatprep.mubr.f32.mxu0 0.0
  %504 = vmatmul.mubr.f32.gmra.mrb[0].mxu0 %v390
  %v505 = vpop.f32.mrb[0].mxu0
  %v506 = vadd.f32 0.0, %v505
  %v507 = vpop.f32.mrb[0].mxu0
  %508 = vmatprep.mubr.f32.mxu0 0.0
  %509 = vmatmul.mubr.f32.gmra.mrb[0].mxu0 %v391
  %v510 = vpop.f32.mrb[0].mxu0
  %v511 = vadd.f32 0.0, %v510
  %v512 = vpop.f32.mrb[0].mxu0
  %513 = vmatprep.mubr.f32.mxu0 0.0
  %514 = vmatmul.mubr.f32.gmra.mrb[0].mxu0 %v392
  %v515 = vpop.f32.mrb[0].mxu0
  %v516 = vadd.f32 0.0, %v515
  %v517 = vpop.f32.mrb[0].mxu0
  %518 = vmatprep.mubr.f32.mxu0 0.0
  %519 = vmatmul.mubr.f32.gmra.mrb[0].mxu0 %v393
  %v520 = vpop.f32.mrb[0].mxu0
  %v521 = vadd.f32 0.0, %v520
  %v522 = vpop.f32.mrb[0].mxu0
  %523 = vmatprep.mubr.f32.mxu0 0.0
  %524 = vmatmul.mubr.f32.gmra.mrb[0].mxu0 %v394
  %v525 = vpop.f32.mrb[0].mxu0
  %v526 = vadd.f32 0.0, %v525
  %v527 = vpop.f32.mrb[0].mxu0
  %528 = vmatprep.mubr.f32.mxu0 0.0
  %529 = vmatmul.mubr.f32.gmra.mrb[0].mxu0 %v395
  %v530 = vpop.f32.mrb[0].mxu0
  %v531 = vadd.f32 0.0, %v530
  %v532 = vpop.f32.mrb[0].mxu0
  %533 = vmatprep.mubr.f32.mxu0 0.0
  %534 = vmatmul.mubr.f32.gmra.mrb[0].mxu0 %v396
  %v535 = vpop.f32.mrb[0].mxu0
  %v536 = vadd.f32 0.0, %v535
  %v537 = vpop.f32.mrb[0].mxu0
  %538 = vmatprep.mubr.f32.mxu0 0.0
  %539 = vmatmul.mubr.f32.gmra.mrb[0].mxu0 %v397
  %v540 = vpop.f32.mrb[0].mxu0
  %v541 = vadd.f32 0.0, %v540
  %v542 = vpop.f32.mrb[0].mxu0
  %543 = vmatprep.mubr.f32.mxu0 0.0
  %544 = vmatmul.mubr.f32.gmra.mrb[0].mxu0 %v398
  %v545 = vpop.f32.mrb[0].mxu0
  %v546 = vadd.f32 0.0, %v545
  %v547 = vpop.f32.mrb[0].mxu0
  %548 = vmatprep.mubr.f32.mxu0 0.0
  %549 = vmatmul.mubr.f32.gmra.mrb[0].mxu0 %v399
  %v550 = vpop.f32.mrb[0].mxu0
  %v551 = vadd.f32 0.0, %v550
  %v552 = vpop.f32.mrb[0].mxu0
  %553 = vmatprep.mubr.f32.mxu0 0.0
  %554 = vmatmul.mubr.f32.gmra.mrb[0].mxu0 %v400
  %v555 = vpop.f32.mrb[0].mxu0
  %v556 = vadd.f32 0.0, %v555
  %v557 = vpop.f32.mrb[0].mxu0
  %558 = vmatprep.mubr.f32.mxu0 0.0
  %559 = vmatmul.mubr.f32.gmra.mrb[0].mxu0 %v401
  %v560 = vpop.f32.mrb[0].mxu0
  %v561 = vadd.f32 0.0, %v560
  %v562 = vpop.f32.mrb[0].mxu0
  %563 = vmatprep.mubr.f32.mxu0 0.0
  %564 = vmatmul.mubr.f32.gmra.mrb[0].mxu0 %v402
  %v565 = vpop.f32.mrb[0].mxu0
  %v566 = vadd.f32 0.0, %v565
  %v567 = vpop.f32.mrb[0].mxu0
  %568 = vmatprep.mubr.f32.mxu0 0.0
  %569 = vmatmul.mubr.f32.gmra.mrb[0].mxu0 %v403
  %v570 = vpop.f32.mrb[0].mxu0
  %v571 = vadd.f32 0.0, %v570
  %v572 = vpop.f32.mrb[0].mxu0
  %573 = vmatprep.mubr.f32.mxu0 0.0
  %574 = vmatmul.mubr.f32.gmra.mrb[0].mxu0 %v404
  %v575 = vpop.f32.mrb[0].mxu0
  %v576 = vadd.f32 0.0, %v575
  %v577 = vpop.f32.mrb[0].mxu0
  %578 = vmatprep.mubr.f32.mxu0 0.0
  %579 = vmatmul.mubr.f32.gmra.mrb[0].mxu0 %v405
  %v580 = vpop.f32.mrb[0].mxu0
  %v581 = vadd.f32 0.0, %v580
  %v582 = vpop.f32.mrb[0].mxu0
  %583 = vmatprep.mubr.f32.mxu0 0.0
  %584 = vmatmul.mubr.f32.gmra.mrb[0].mxu0 %v406
  %v585 = vpop.f32.mrb[0].mxu0
  %v586 = vadd.f32 0.0, %v585
  %v587 = vpop.f32.mrb[0].mxu0
  %588 = vmatprep.mubr.f32.mxu0 0.0
  %589 = vmatmul.mubr.f32.gmra.mrb[0].mxu0 %v407
  %v590 = vpop.f32.mrb[0].mxu0
  %v591 = vadd.f32 0.0, %v590
  %v592 = vpop.f32.mrb[0].mxu0
  %593 = vmatprep.mubr.f32.mxu0 0.0
  %594 = vmatmul.mubr.f32.gmra.mrb[0].mxu0 %v408
  %v595 = vpop.f32.mrb[0].mxu0
  %v596 = vadd.f32 0.0, %v595
  %v597 = vpop.f32.mrb[0].mxu0
  %598 = vmatprep.mubr.f32.mxu0 0.0
  %599 = vmatmul.mubr.f32.gmra.mrb[0].mxu0 %v409
  %v600 = vpop.f32.mrb[0].mxu0
  %v601 = vadd.f32 0.0, %v600
  %v602 = vpop.f32.mrb[0].mxu0
  %603 = vmatprep.mubr.f32.mxu0 0.0
  %604 = vmatmul.mubr.f32.gmra.mrb[0].mxu0 %v410
  %v605 = vpop.f32.mrb[0].mxu0
  %v606 = vadd.f32 0.0, %v605
  %v607 = vpop.f32.mrb[0].mxu0
  %608 = vmatprep.mubr.f32.mxu0 0.0
  %609 = vmatmul.mubr.f32.gmra.mrb[0].mxu0 %v411
  %v610 = vpop.f32.mrb[0].mxu0
  %v611 = vadd.f32 0.0, %v610
  %v612 = vpop.f32.mrb[0].mxu0
  %613 = vmatprep.mubr.f32.mxu0 0.0
  %614 = vmatmul.mubr.f32.gmra.mrb[0].mxu0 %v412
  %v615 = vpop.f32.mrb[0].mxu0
  %v616 = vadd.f32 0.0, %v615
  %v617 = vpop.f32.mrb[0].mxu0
  %618 = vmatprep.mubr.f32.mxu0 0.0
  %619 = vmatmul.mubr.f32.gmra.mrb[0].mxu0 %v413
  %v620 = vpop.f32.mrb[0].mxu0
  %v621 = vadd.f32 0.0, %v620
  %v622 = vpop.f32.mrb[0].mxu0
  %623 = vmatprep.mubr.f32.mxu0 0.0
  %624 = vmatmul.mubr.f32.gmra.mrb[0].mxu0 %v414
  %v625 = vpop.f32.mrb[0].mxu0
  %v626 = vadd.f32 0.0, %v625
  %v627 = vpop.f32.mrb[0].mxu0
  %628 = vmatprep.mubr.f32.mxu0 0.0
  %629 = vmatmul.mubr.f32.gmra.mrb[0].mxu0 %v415
  %v630 = vpop.f32.mrb[0].mxu0
  %v631 = vadd.f32 0.0, %v630
  %v632 = vpop.f32.mrb[0].mxu0
  %633 = vmatprep.mubr.f32.mxu0 0.0
  %634 = vmatmul.mubr.f32.gmra.mrb[0].mxu0 %v416
  %v635 = vpop.f32.mrb[0].mxu0
  %v636 = vadd.f32 0.0, %v635
  %v637 = vpop.f32.mrb[0].mxu0
  %638 = vmatprep.mubr.f32.mxu0 0.0
  %639 = vmatmul.mubr.f32.gmra.mrb[0].mxu0 %v417
  %v640 = vpop.f32.mrb[0].mxu0
  %v641 = vadd.f32 0.0, %v640
  %v642 = vpop.f32.mrb[0].mxu0
  %643 = vmatprep.mubr.f32.mxu0 0.0
  %644 = vmatmul.mubr.f32.gmra.mrb[0].mxu0 %v418
  %v645 = vpop.f32.mrb[0].mxu0
  %v646 = vadd.f32 0.0, %v645
  %v647 = vpop.f32.mrb[0].mxu0
  %648 = vmatprep.mubr.f32.mxu0 0.0
  %649 = vmatmul.mubr.f32.gmra.mrb[0].mxu0 %v419
  %v650 = vpop.f32.mrb[0].mxu0
  %v651 = vadd.f32 0.0, %v650
  %v652 = vpop.f32.mrb[0].mxu0
  %653 = vmatprep.mubr.f32.mxu0 0.0
  %654 = vmatmul.mubr.f32.gmra.mrb[0].mxu0 %v420
  %v655 = vpop.f32.mrb[0].mxu0
  %v656 = vadd.f32 0.0, %v655
  %v657 = vpop.f32.mrb[0].mxu0
  %658 = vmatprep.mubr.f32.mxu0 0.0
  %659 = vmatmul.mubr.f32.gmra.mrb[0].mxu0 %v421
  %v660 = vpop.f32.mrb[0].mxu0
  %v661 = vadd.f32 0.0, %v660
  %v662 = vpop.f32.mrb[0].mxu0
  %663 = vmatprep.mubr.f32.mxu0 0.0
  %664 = vmatmul.mubr.f32.gmra.mrb[0].mxu0 %v422
  %v665 = vpop.f32.mrb[0].mxu0
  %v666 = vadd.f32 0.0, %v665
  %v667 = vpop.f32.mrb[0].mxu0
  %668 = vmatprep.mubr.f32.mxu0 0.0
  %669 = vmatmul.mubr.f32.gmra.mrb[0].mxu0 %v423
  %v670 = vpop.f32.mrb[0].mxu0
  %v671 = vadd.f32 0.0, %v670
  %v672 = vpop.f32.mrb[0].mxu0
  %673 = vmatprep.mubr.f32.mxu0 0.0
  %674 = vmatmul.mubr.f32.gmra.mrb[0].mxu0 %v424
  %v675 = vpop.f32.mrb[0].mxu0
  %v676 = vadd.f32 0.0, %v675
  %v677 = vpop.f32.mrb[0].mxu0
  %678 = vmatprep.mubr.f32.mxu0 0.0
  %679 = vmatmul.mubr.f32.gmra.mrb[0].mxu0 %v425
  %v680 = vpop.f32.mrb[0].mxu0
  %v681 = vadd.f32 0.0, %v680
  %v682 = vpop.f32.mrb[0].mxu0
  %683 = vmatprep.mubr.f32.mxu0 0.0
  %684 = vmatmul.mubr.f32.gmra.mrb[0].mxu0 %v426
  %v685 = vpop.f32.mrb[0].mxu0
  %v686 = vadd.f32 0.0, %v685
  %v687 = vpop.f32.mrb[0].mxu0
  %688 = vmatprep.mubr.f32.mxu0 0.0
  %689 = vmatmul.mubr.f32.gmra.mrb[0].mxu0 %v427
  %v690 = vpop.f32.mrb[0].mxu0
  %v691 = vadd.f32 0.0, %v690
  %v692 = vpop.f32.mrb[0].mxu0
  %693 = vmatprep.mubr.f32.mxu0 0.0
  %694 = vmatmul.mubr.f32.gmra.mrb[0].mxu0 %v428
  %v695 = vpop.f32.mrb[0].mxu0
  %v696 = vadd.f32 0.0, %v695
  %v697 = vpop.f32.mrb[0].mxu0
  %698 = vmatprep.mubr.f32.mxu0 0.0
  %699 = vmatmul.mubr.f32.gmra.mrb[0].mxu0 %v429
  %v700 = vpop.f32.mrb[0].mxu0
  %v701 = vadd.f32 0.0, %v700
  %v702 = vpop.f32.mrb[0].mxu0
  %703 = vmatprep.mubr.f32.mxu0 0.0
  %704 = vmatmul.mubr.f32.gmra.mrb[0].mxu0 %v430
  %v705 = vpop.f32.mrb[0].mxu0
  %v706 = vadd.f32 0.0, %v705
  %v707 = vpop.f32.mrb[0].mxu0
  %708 = vmatprep.mubr.f32.mxu0 0.0
  %709 = vmatmul.mubr.f32.gmra.mrb[0].mxu0 %v431
  %v710 = vpop.f32.mrb[0].mxu0
  %v711 = vadd.f32 0.0, %v710
  %v712 = vpop.f32.mrb[0].mxu0
  %713 = vmatprep.mubr.f32.mxu0 0.0
  %714 = vmatmul.mubr.f32.gmra.mrb[0].mxu0 %v432
  %v715 = vpop.f32.mrb[0].mxu0
  %v716 = vadd.f32 0.0, %v715
  %v717 = vpop.f32.mrb[0].mxu0
  %718 = vmatprep.mubr.f32.mxu0 0.0
  %719 = vmatmul.mubr.f32.gmra.mrb[0].mxu0 %v433
  %v720 = vpop.f32.mrb[0].mxu0
  %v721 = vadd.f32 0.0, %v720
  %v722 = vpop.f32.mrb[0].mxu0
  %723 = vmatprep.mubr.f32.mxu0 0.0
  %724 = vmatmul.mubr.f32.gmra.mrb[0].mxu0 %v434
  %v725 = vpop.f32.mrb[0].mxu0
  %v726 = vadd.f32 0.0, %v725
  %v727 = vpop.f32.mrb[0].mxu0
  %728 = vmatprep.mubr.f32.mxu0 0.0
  %729 = vmatmul.mubr.f32.gmra.mrb[0].mxu0 %v435
  %v730 = vpop.f32.mrb[0].mxu0
  %v731 = vadd.f32 0.0, %v730
  %v732 = vpop.f32.mrb[0].mxu0
  %733 = vmatprep.mubr.f32.mxu0 0.0
  %734 = vmatmul.mubr.f32.gmra.mrb[0].mxu0 %v436
  %v735 = vpop.f32.mrb[0].mxu0
  %v736 = vadd.f32 0.0, %v735
  %v737 = vpop.f32.mrb[0].mxu0
  %738 = vmatprep.mubr.f32.mxu0 0.0
  %739 = vmatmul.mubr.f32.gmra.mrb[0].mxu0 %v437
  %v740 = vpop.f32.mrb[0].mxu0
  %v741 = vadd.f32 0.0, %v740
  %v742 = vpop.f32.mrb[0].mxu0
  %743 = vmatprep.mubr.f32.mxu0 0.0
  %744 = vmatmul.mubr.f32.gmra.mrb[0].mxu0 %v438
  %v745 = vpop.f32.mrb[0].mxu0
  %v746 = vadd.f32 0.0, %v745
  %v747 = vpop.f32.mrb[0].mxu0
  %748 = vdwg.mxu0
  %v749 = vmax.f32 %v146, %v506
  %v750 = vmax.f32 %v151, %v511
  %v751 = vmax.f32 %v156, %v516
  %v752 = vmax.f32 %v161, %v521
  %v753 = vmax.f32 %v166, %v526
  %v754 = vmax.f32 %v171, %v531
  %v755 = vmax.f32 %v176, %v536
  %v756 = vmax.f32 %v181, %v541
  %v757 = vmax.f32 %v186, %v546
  %v758 = vmax.f32 %v191, %v551
  %v759 = vmax.f32 %v196, %v556
  %v760 = vmax.f32 %v201, %v561
  %v761 = vmax.f32 %v206, %v566
  %v762 = vmax.f32 %v211, %v571
  %v763 = vmax.f32 %v216, %v576
  %v764 = vmax.f32 %v221, %v581
  %v765 = vmax.f32 %v226, %v586
  %v766 = vmax.f32 %v231, %v591
  %v767 = vmax.f32 %v236, %v596
  %v768 = vmax.f32 %v241, %v601
  %v769 = vmax.f32 %v246, %v606
  %v770 = vmax.f32 %v251, %v611
  %v771 = vmax.f32 %v256, %v616
  %v772 = vmax.f32 %v261, %v621
  %v773 = vmax.f32 %v266, %v626
  %v774 = vmax.f32 %v271, %v631
  %v775 = vmax.f32 %v276, %v636
  %v776 = vmax.f32 %v281, %v641
  %v777 = vmax.f32 %v286, %v646
  %v778 = vmax.f32 %v291, %v651
  %v779 = vmax.f32 %v296, %v656
  %v780 = vmax.f32 %v301, %v661
  %v781 = vmax.f32 %v306, %v666
  %v782 = vmax.f32 %v311, %v671
  %v783 = vmax.f32 %v316, %v676
  %v784 = vmax.f32 %v321, %v681
  %v785 = vmax.f32 %v326, %v686
  %v786 = vmax.f32 %v331, %v691
  %v787 = vmax.f32 %v336, %v696
  %v788 = vmax.f32 %v341, %v701
  %v789 = vmax.f32 %v346, %v706
  %v790 = vmax.f32 %v351, %v711
  %v791 = vmax.f32 %v356, %v716
  %v792 = vmax.f32 %v361, %v721
  %v793 = vmax.f32 %v366, %v726
  %v794 = vmax.f32 %v371, %v731
  %v795 = vmax.f32 %v376, %v736
  %v796 = vmax.f32 %v381, %v741
  %v797 = vmax.f32 %v386, %v746
  %s798 = scalar_lea.vmem %s0, 784
  %v799 = vld [vmem:[%s798] sm:$0xff]
  %v800 = vld [vmem:[%s798 + $0x8] sm:$0xff]
  %v801 = vld [vmem:[%s798 + $0x10] sm:$0xff]
  %v802 = vld [vmem:[%s798 + $0x18] sm:$0xff]
  %v803 = vld [vmem:[%s798 + $0x20] sm:$0xff]
  %v804 = vld [vmem:[%s798 + $0x28] sm:$0xff]
  %v805 = vld [vmem:[%s798 + $0x30] sm:$0xff]
  %v806 = vld [vmem:[%s798 + $0x38] sm:$0xff]
  %v807 = vld [vmem:[%s798 + $0x40] sm:$0xff]
  %v808 = vld [vmem:[%s798 + $0x48] sm:$0xff]
  %v809 = vld [vmem:[%s798 + $0x50] sm:$0xff]
  %v810 = vld [vmem:[%s798 + $0x58] sm:$0xff]
  %v811 = vld [vmem:[%s798 + $0x60] sm:$0xff]
  %v812 = vld [vmem:[%s798 + $0x68] sm:$0xff]
  %v813 = vld [vmem:[%s798 + $0x70] sm:$0xff]
  %v814 = vld [vmem:[%s798 + $0x78] sm:$0xff]
  %v815 = vld [vmem:[%s798 + $0x80] sm:$0xff]
  %v816 = vld [vmem:[%s798 + $0x88] sm:$0xff]
  %v817 = vld [vmem:[%s798 + $0x90] sm:$0xff]
  %v818 = vld [vmem:[%s798 + $0x98] sm:$0xff]
  %v819 = vld [vmem:[%s798 + $0xa0] sm:$0xff]
  %v820 = vld [vmem:[%s798 + $0xa8] sm:$0xff]
  %v821 = vld [vmem:[%s798 + $0xb0] sm:$0xff]
  %v822 = vld [vmem:[%s798 + $0xb8] sm:$0xff]
  %v823 = vld [vmem:[%s798 + $0xc0] sm:$0xff]
  %v824 = vld [vmem:[%s798 + $0xc8] sm:$0xff]
  %v825 = vld [vmem:[%s798 + $0xd0] sm:$0xff]
  %v826 = vld [vmem:[%s798 + $0xd8] sm:$0xff]
  %v827 = vld [vmem:[%s798 + $0xe0] sm:$0xff]
  %v828 = vld [vmem:[%s798 + $0xe8] sm:$0xff]
  %v829 = vld [vmem:[%s798 + $0xf0] sm:$0xff]
  %v830 = vld [vmem:[%s798 + $0xf8] sm:$0xff]
  %v831 = vld [vmem:[%s798 + $0x100] sm:$0xff]
  %v832 = vld [vmem:[%s798 + $0x108] sm:$0xff]
  %v833 = vld [vmem:[%s798 + $0x110] sm:$0xff]
  %v834 = vld [vmem:[%s798 + $0x118] sm:$0xff]
  %v835 = vld [vmem:[%s798 + $0x120] sm:$0xff]
  %v836 = vld [vmem:[%s798 + $0x128] sm:$0xff]
  %v837 = vld [vmem:[%s798 + $0x130] sm:$0xff]
  %v838 = vld [vmem:[%s798 + $0x138] sm:$0xff]
  %v839 = vld [vmem:[%s798 + $0x140] sm:$0xff]
  %v840 = vld [vmem:[%s798 + $0x148] sm:$0xff]
  %v841 = vld [vmem:[%s798 + $0x150] sm:$0xff]
  %v842 = vld [vmem:[%s798 + $0x158] sm:$0xff]
  %v843 = vld [vmem:[%s798 + $0x160] sm:$0xff]
  %v844 = vld [vmem:[%s798 + $0x168] sm:$0xff]
  %v845 = vld [vmem:[%s798 + $0x170] sm:$0xff]
  %v846 = vld [vmem:[%s798 + $0x178] sm:$0xff]
  %v847 = vld [vmem:[%s798 + $0x180] sm:$0xff]
  %848 = vmatprep.subr.mxu0 0.0
  %849 = vmatpush1.msra.mxu0 %v14
  %850 = vmatprep.subr.mxu0 0.0
  %851 = vmatpush1.msra.mxu0 %v15
  %852 = vmatprep.subr.mxu0 0.0
  %853 = vmatpush1.msra.mxu0 %v16
  %854 = vmatprep.subr.mxu0 0.0
  %855 = vmatpush1.msra.mxu0 %v17
  %856 = vmatprep.subr.mxu0 0.0
  %857 = vmatpush1.msra.mxu0 %v18
  %858 = vmatprep.subr.mxu0 0.0
  %859 = vmatpush1.msra.mxu0 %v19
  %860 = vmatprep.subr.mxu0 0.0
  %861 = vmatpush1.msra.mxu0 %v20
  %862 = vmatprep.subr.mxu0 0.0
  %863 = vmatpush1.msra.mxu0 %v21
  %864 = vmatprep.subr.mxu0 0.0
  %865 = vmatpush1.msra.mxu0 %v22
  %866 = vmatprep.subr.mxu0 0.0
  %867 = vmatpush1.msra.mxu0 %v23
  %868 = vmatprep.subr.mxu0 0.0
  %869 = vmatpush1.msra.mxu0 %v24
  %870 = vmatprep.subr.mxu0 0.0
  %871 = vmatpush1.msra.mxu0 %v25
  %872 = vmatprep.subr.mxu0 0.0
  %873 = vmatpush1.msra.mxu0 %v26
  %874 = vmatprep.subr.mxu0 0.0
  %875 = vmatpush1.msra.mxu0 %v27
  %876 = vmatprep.subr.mxu0 0.0
  %877 = vmatpush1.msra.mxu0 %v28
  %878 = vmatprep.subr.mxu0 0.0
  %879 = vmatpush1.msra.mxu0 %v29
  %880 = vmatprep.subr.mxu0 0.0
  %881 = vmatpush1.msra.mxu0 0.0
  %882 = vmatprep.subr.mxu0 0.0
  %883 = vmatpush1.msra.mxu0 0.0
  %884 = vmatprep.subr.mxu0 0.0
  %885 = vmatpush1.msra.mxu0 0.0
  %886 = vmatprep.subr.mxu0 0.0
  %887 = vmatpush1.msra.mxu0 0.0
  %888 = vmatprep.subr.mxu0 0.0
  %889 = vmatpush1.msra.mxu0 0.0
  %890 = vmatprep.subr.mxu0 0.0
  %891 = vmatpush1.msra.mxu0 0.0
  %892 = vmatprep.subr.mxu0 0.0
  %893 = vmatpush1.msra.mxu0 0.0
  %894 = vmatprep.subr.mxu0 0.0
  %895 = vmatpush1.msra.mxu0 0.0
  %896 = vmatprep.subr.mxu0 0.0
  %897 = vmatpush1.msra.mxu0 0.0
  %898 = vmatprep.subr.mxu0 0.0
  %899 = vmatpush1.msra.mxu0 0.0
  %900 = vmatprep.subr.mxu0 0.0
  %901 = vmatpush1.msra.mxu0 0.0
  %902 = vmatprep.subr.mxu0 0.0
  %903 = vmatpush1.msra.mxu0 0.0
  %904 = vmatprep.subr.mxu0 0.0
  %905 = vmatpush1.msra.mxu0 0.0
  %906 = vmatprep.subr.mxu0 0.0
  %907 = vmatpush1.msra.mxu0 0.0
  %908 = vmatprep.subr.mxu0 0.0
  %909 = vmatpush1.msra.mxu0 0.0
  %910 = vmatprep.subr.mxu0 0.0
  %911 = vmatpush1.msra.mxu0 0.0
  %912 = vmatprep.mubr.f32.mxu0 0.0
  %913 = vmatmul.mubr.f32.gmra.mrb[0].mxu0 %v799
  %v914 = vpop.f32.mrb[0].mxu0
  %v915 = vadd.f32 0.0, %v914
  %v916 = vpop.f32.mrb[0].mxu0
  %917 = vmatprep.mubr.f32.mxu0 0.0
  %918 = vmatmul.mubr.f32.gmra.mrb[0].mxu0 %v800
  %v919 = vpop.f32.mrb[0].mxu0
  %v920 = vadd.f32 0.0, %v919
  %v921 = vpop.f32.mrb[0].mxu0
  %922 = vmatprep.mubr.f32.mxu0 0.0
  %923 = vmatmul.mubr.f32.gmra.mrb[0].mxu0 %v801
  %v924 = vpop.f32.mrb[0].mxu0
  %v925 = vadd.f32 0.0, %v924
  %v926 = vpop.f32.mrb[0].mxu0
  %927 = vmatprep.mubr.f32.mxu0 0.0
  %928 = vmatmul.mubr.f32.gmra.mrb[0].mxu0 %v802
  %v929 = vpop.f32.mrb[0].mxu0
  %v930 = vadd.f32 0.0, %v929
  %v931 = vpop.f32.mrb[0].mxu0
  %932 = vmatprep.mubr.f32.mxu0 0.0
  %933 = vmatmul.mubr.f32.gmra.mrb[0].mxu0 %v803
  %v934 = vpop.f32.mrb[0].mxu0
  %v935 = vadd.f32 0.0, %v934
  %v936 = vpop.f32.mrb[0].mxu0
  %937 = vmatprep.mubr.f32.mxu0 0.0
  %938 = vmatmul.mubr.f32.gmra.mrb[0].mxu0 %v804
  %v939 = vpop.f32.mrb[0].mxu0
  %v940 = vadd.f32 0.0, %v939
  %v941 = vpop.f32.mrb[0].mxu0
  %942 = vmatprep.mubr.f32.mxu0 0.0
  %943 = vmatmul.mubr.f32.gmra.mrb[0].mxu0 %v805
  %v944 = vpop.f32.mrb[0].mxu0
  %v945 = vadd.f32 0.0, %v944
  %v946 = vpop.f32.mrb[0].mxu0
  %947 = vmatprep.mubr.f32.mxu0 0.0
  %948 = vmatmul.mubr.f32.gmra.mrb[0].mxu0 %v806
  %v949 = vpop.f32.mrb[0].mxu0
  %v950 = vadd.f32 0.0, %v949
  %v951 = vpop.f32.mrb[0].mxu0
  %952 = vmatprep.mubr.f32.mxu0 0.0
  %953 = vmatmul.mubr.f32.gmra.mrb[0].mxu0 %v807
  %v954 = vpop.f32.mrb[0].mxu0
  %v955 = vadd.f32 0.0, %v954
  %v956 = vpop.f32.mrb[0].mxu0
  %957 = vmatprep.mubr.f32.mxu0 0.0
  %958 = vmatmul.mubr.f32.gmra.mrb[0].mxu0 %v808
  %v959 = vpop.f32.mrb[0].mxu0
  %v960 = vadd.f32 0.0, %v959
  %v961 = vpop.f32.mrb[0].mxu0
  %962 = vmatprep.mubr.f32.mxu0 0.0
  %963 = vmatmul.mubr.f32.gmra.mrb[0].mxu0 %v809
  %v964 = vpop.f32.mrb[0].mxu0
  %v965 = vadd.f32 0.0, %v964
  %v966 = vpop.f32.mrb[0].mxu0
  %967 = vmatprep.mubr.f32.mxu0 0.0
  %968 = vmatmul.mubr.f32.gmra.mrb[0].mxu0 %v810
  %v969 = vpop.f32.mrb[0].mxu0
  %v970 = vadd.f32 0.0, %v969
  %v971 = vpop.f32.mrb[0].mxu0
  %972 = vmatprep.mubr.f32.mxu0 0.0
  %973 = vmatmul.mubr.f32.gmra.mrb[0].mxu0 %v811
  %v974 = vpop.f32.mrb[0].mxu0
  %v975 = vadd.f32 0.0, %v974
  %v976 = vpop.f32.mrb[0].mxu0
  %977 = vmatprep.mubr.f32.mxu0 0.0
  %978 = vmatmul.mubr.f32.gmra.mrb[0].mxu0 %v812
  %v979 = vpop.f32.mrb[0].mxu0
  %v980 = vadd.f32 0.0, %v979
  %v981 = vpop.f32.mrb[0].mxu0
  %982 = vmatprep.mubr.f32.mxu0 0.0
  %983 = vmatmul.mubr.f32.gmra.mrb[0].mxu0 %v813
  %v984 = vpop.f32.mrb[0].mxu0
  %v985 = vadd.f32 0.0, %v984
  %v986 = vpop.f32.mrb[0].mxu0
  %987 = vmatprep.mubr.f32.mxu0 0.0
  %988 = vmatmul.mubr.f32.gmra.mrb[0].mxu0 %v814
  %v989 = vpop.f32.mrb[0].mxu0
  %v990 = vadd.f32 0.0, %v989
  %v991 = vpop.f32.mrb[0].mxu0
  %992 = vmatprep.mubr.f32.mxu0 0.0
  %993 = vmatmul.mubr.f32.gmra.mrb[0].mxu0 %v815
  %v994 = vpop.f32.mrb[0].mxu0
  %v995 = vadd.f32 0.0, %v994
  %v996 = vpop.f32.mrb[0].mxu0
  %997 = vmatprep.mubr.f32.mxu0 0.0
  %998 = vmatmul.mubr.f32.gmra.mrb[0].mxu0 %v816
  %v999 = vpop.f32.mrb[0].mxu0
  %v1000 = vadd.f32 0.0, %v999
  %v1001 = vpop.f32.mrb[0].mxu0
  %1002 = vmatprep.mubr.f32.mxu0 0.0
  %1003 = vmatmul.mubr.f32.gmra.mrb[0].mxu0 %v817
  %v1004 = vpop.f32.mrb[0].mxu0
  %v1005 = vadd.f32 0.0, %v1004
  %v1006 = vpop.f32.mrb[0].mxu0
  %1007 = vmatprep.mubr.f32.mxu0 0.0
  %1008 = vmatmul.mubr.f32.gmra.mrb[0].mxu0 %v818
  %v1009 = vpop.f32.mrb[0].mxu0
  %v1010 = vadd.f32 0.0, %v1009
  %v1011 = vpop.f32.mrb[0].mxu0
  %1012 = vmatprep.mubr.f32.mxu0 0.0
  %1013 = vmatmul.mubr.f32.gmra.mrb[0].mxu0 %v819
  %v1014 = vpop.f32.mrb[0].mxu0
  %v1015 = vadd.f32 0.0, %v1014
  %v1016 = vpop.f32.mrb[0].mxu0
  %1017 = vmatprep.mubr.f32.mxu0 0.0
  %1018 = vmatmul.mubr.f32.gmra.mrb[0].mxu0 %v820
  %v1019 = vpop.f32.mrb[0].mxu0
  %v1020 = vadd.f32 0.0, %v1019
  %v1021 = vpop.f32.mrb[0].mxu0
  %1022 = vmatprep.mubr.f32.mxu0 0.0
  %1023 = vmatmul.mubr.f32.gmra.mrb[0].mxu0 %v821
  %v1024 = vpop.f32.mrb[0].mxu0
  %v1025 = vadd.f32 0.0, %v1024
  %v1026 = vpop.f32.mrb[0].mxu0
  %1027 = vmatprep.mubr.f32.mxu0 0.0
  %1028 = vmatmul.mubr.f32.gmra.mrb[0].mxu0 %v822
  %v1029 = vpop.f32.mrb[0].mxu0
  %v1030 = vadd.f32 0.0, %v1029
  %v1031 = vpop.f32.mrb[0].mxu0
  %1032 = vmatprep.mubr.f32.mxu0 0.0
  %1033 = vmatmul.mubr.f32.gmra.mrb[0].mxu0 %v823
  %v1034 = vpop.f32.mrb[0].mxu0
  %v1035 = vadd.f32 0.0, %v1034
  %v1036 = vpop.f32.mrb[0].mxu0
  %1037 = vmatprep.mubr.f32.mxu0 0.0
  %1038 = vmatmul.mubr.f32.gmra.mrb[0].mxu0 %v824
  %v1039 = vpop.f32.mrb[0].mxu0
  %v1040 = vadd.f32 0.0, %v1039
  %v1041 = vpop.f32.mrb[0].mxu0
  %1042 = vmatprep.mubr.f32.mxu0 0.0
  %1043 = vmatmul.mubr.f32.gmra.mrb[0].mxu0 %v825
  %v1044 = vpop.f32.mrb[0].mxu0
  %v1045 = vadd.f32 0.0, %v1044
  %v1046 = vpop.f32.mrb[0].mxu0
  %1047 = vmatprep.mubr.f32.mxu0 0.0
  %1048 = vmatmul.mubr.f32.gmra.mrb[0].mxu0 %v826
  %v1049 = vpop.f32.mrb[0].mxu0
  %v1050 = vadd.f32 0.0, %v1049
  %v1051 = vpop.f32.mrb[0].mxu0
  %1052 = vmatprep.mubr.f32.mxu0 0.0
  %1053 = vmatmul.mubr.f32.gmra.mrb[0].mxu0 %v827
  %v1054 = vpop.f32.mrb[0].mxu0
  %v1055 = vadd.f32 0.0, %v1054
  %v1056 = vpop.f32.mrb[0].mxu0
  %1057 = vmatprep.mubr.f32.mxu0 0.0
  %1058 = vmatmul.mubr.f32.gmra.mrb[0].mxu0 %v828
  %v1059 = vpop.f32.mrb[0].mxu0
  %v1060 = vadd.f32 0.0, %v1059
  %v1061 = vpop.f32.mrb[0].mxu0
  %1062 = vmatprep.mubr.f32.mxu0 0.0
  %1063 = vmatmul.mubr.f32.gmra.mrb[0].mxu0 %v829
  %v1064 = vpop.f32.mrb[0].mxu0
  %v1065 = vadd.f32 0.0, %v1064
  %v1066 = vpop.f32.mrb[0].mxu0
  %1067 = vmatprep.mubr.f32.mxu0 0.0
  %1068 = vmatmul.mubr.f32.gmra.mrb[0].mxu0 %v830
  %v1069 = vpop.f32.mrb[0].mxu0
  %v1070 = vadd.f32 0.0, %v1069
  %v1071 = vpop.f32.mrb[0].mxu0
  %1072 = vmatprep.mubr.f32.mxu0 0.0
  %1073 = vmatmul.mubr.f32.gmra.mrb[0].mxu0 %v831
  %v1074 = vpop.f32.mrb[0].mxu0
  %v1075 = vadd.f32 0.0, %v1074
  %v1076 = vpop.f32.mrb[0].mxu0
  %1077 = vmatprep.mubr.f32.mxu0 0.0
  %1078 = vmatmul.mubr.f32.gmra.mrb[0].mxu0 %v832
  %v1079 = vpop.f32.mrb[0].mxu0
  %v1080 = vadd.f32 0.0, %v1079
  %v1081 = vpop.f32.mrb[0].mxu0
  %1082 = vmatprep.mubr.f32.mxu0 0.0
  %1083 = vmatmul.mubr.f32.gmra.mrb[0].mxu0 %v833
  %v1084 = vpop.f32.mrb[0].mxu0
  %v1085 = vadd.f32 0.0, %v1084
  %v1086 = vpop.f32.mrb[0].mxu0
  %1087 = vmatprep.mubr.f32.mxu0 0.0
  %1088 = vmatmul.mubr.f32.gmra.mrb[0].mxu0 %v834
  %v1089 = vpop.f32.mrb[0].mxu0
  %v1090 = vadd.f32 0.0, %v1089
  %v1091 = vpop.f32.mrb[0].mxu0
  %1092 = vmatprep.mubr.f32.mxu0 0.0
  %1093 = vmatmul.mubr.f32.gmra.mrb[0].mxu0 %v835
  %v1094 = vpop.f32.mrb[0].mxu0
  %v1095 = vadd.f32 0.0, %v1094
  %v1096 = vpop.f32.mrb[0].mxu0
  %1097 = vmatprep.mubr.f32.mxu0 0.0
  %1098 = vmatmul.mubr.f32.gmra.mrb[0].mxu0 %v836
  %v1099 = vpop.f32.mrb[0].mxu0
  %v1100 = vadd.f32 0.0, %v1099
  %v1101 = vpop.f32.mrb[0].mxu0
  %1102 = vmatprep.mubr.f32.mxu0 0.0
  %1103 = vmatmul.mubr.f32.gmra.mrb[0].mxu0 %v837
  %v1104 = vpop.f32.mrb[0].mxu0
  %v1105 = vadd.f32 0.0, %v1104
  %v1106 = vpop.f32.mrb[0].mxu0
  %1107 = vmatprep.mubr.f32.mxu0 0.0
  %1108 = vmatmul.mubr.f32.gmra.mrb[0].mxu0 %v838
  %v1109 = vpop.f32.mrb[0].mxu0
  %v1110 = vadd.f32 0.0, %v1109
  %v1111 = vpop.f32.mrb[0].mxu0
  %1112 = vmatprep.mubr.f32.mxu0 0.0
  %1113 = vmatmul.mubr.f32.gmra.mrb[0].mxu0 %v839
  %v1114 = vpop.f32.mrb[0].mxu0
  %v1115 = vadd.f32 0.0, %v1114
  %v1116 = vpop.f32.mrb[0].mxu0
  %1117 = vmatprep.mubr.f32.mxu0 0.0
  %1118 = vmatmul.mubr.f32.gmra.mrb[0].mxu0 %v840
  %v1119 = vpop.f32.mrb[0].mxu0
  %v1120 = vadd.f32 0.0, %v1119
  %v1121 = vpop.f32.mrb[0].mxu0
  %1122 = vmatprep.mubr.f32.mxu0 0.0
  %1123 = vmatmul.mubr.f32.gmra.mrb[0].mxu0 %v841
  %v1124 = vpop.f32.mrb[0].mxu0
  %v1125 = vadd.f32 0.0, %v1124
  %v1126 = vpop.f32.mrb[0].mxu0
  %1127 = vmatprep.mubr.f32.mxu0 0.0
  %1128 = vmatmul.mubr.f32.gmra.mrb[0].mxu0 %v842
  %v1129 = vpop.f32.mrb[0].mxu0
  %v1130 = vadd.f32 0.0, %v1129
  %v1131 = vpop.f32.mrb[0].mxu0
  %1132 = vmatprep.mubr.f32.mxu0 0.0
  %1133 = vmatmul.mubr.f32.gmra.mrb[0].mxu0 %v843
  %v1134 = vpop.f32.mrb[0].mxu0
  %v1135 = vadd.f32 0.0, %v1134
  %v1136 = vpop.f32.mrb[0].mxu0
  %1137 = vmatprep.mubr.f32.mxu0 0.0
  %1138 = vmatmul.mubr.f32.gmra.mrb[0].mxu0 %v844
  %v1139 = vpop.f32.mrb[0].mxu0
  %v1140 = vadd.f32 0.0, %v1139
  %v1141 = vpop.f32.mrb[0].mxu0
  %1142 = vmatprep.mubr.f32.mxu0 0.0
  %1143 = vmatmul.mubr.f32.gmra.mrb[0].mxu0 %v845
  %v1144 = vpop.f32.mrb[0].mxu0
  %v1145 = vadd.f32 0.0, %v1144
  %v1146 = vpop.f32.mrb[0].mxu0
  %1147 = vmatprep.mubr.f32.mxu0 0.0
  %1148 = vmatmul.mubr.f32.gmra.mrb[0].mxu0 %v846
  %v1149 = vpop.f32.mrb[0].mxu0
  %v1150 = vadd.f32 0.0, %v1149
  %v1151 = vpop.f32.mrb[0].mxu0
  %1152 = vmatprep.mubr.f32.mxu0 0.0
  %1153 = vmatmul.mubr.f32.gmra.mrb[0].mxu0 %v847
  %v1154 = vpop.f32.mrb[0].mxu0
  %v1155 = vadd.f32 0.0, %v1154
  %v1156 = vpop.f32.mrb[0].mxu0
  %1157 = vdwg.mxu0
  %v1158 = vmax.f32 %v749, %v915
  %v1159 = vmax.f32 %v750, %v920
  %v1160 = vmax.f32 %v751, %v925
  %v1161 = vmax.f32 %v752, %v930
  %v1162 = vmax.f32 %v753, %v935
  %v1163 = vmax.f32 %v754, %v940
  %v1164 = vmax.f32 %v755, %v945
  %v1165 = vmax.f32 %v756, %v950
  %v1166 = vmax.f32 %v757, %v955
  %v1167 = vmax.f32 %v758, %v960
  %v1168 = vmax.f32 %v759, %v965
  %v1169 = vmax.f32 %v760, %v970
  %v1170 = vmax.f32 %v761, %v975
  %v1171 = vmax.f32 %v762, %v980
  %v1172 = vmax.f32 %v763, %v985
  %v1173 = vmax.f32 %v764, %v990
  %v1174 = vmax.f32 %v765, %v995
  %v1175 = vmax.f32 %v766, %v1000
  %v1176 = vmax.f32 %v767, %v1005
  %v1177 = vmax.f32 %v768, %v1010
  %v1178 = vmax.f32 %v769, %v1015
  %v1179 = vmax.f32 %v770, %v1020
  %v1180 = vmax.f32 %v771, %v1025
  %v1181 = vmax.f32 %v772, %v1030
  %v1182 = vmax.f32 %v773, %v1035
  %v1183 = vmax.f32 %v774, %v1040
  %v1184 = vmax.f32 %v775, %v1045
  %v1185 = vmax.f32 %v776, %v1050
  %v1186 = vmax.f32 %v777, %v1055
  %v1187 = vmax.f32 %v778, %v1060
  %v1188 = vmax.f32 %v779, %v1065
  %v1189 = vmax.f32 %v780, %v1070
  %v1190 = vmax.f32 %v781, %v1075
  %v1191 = vmax.f32 %v782, %v1080
  %v1192 = vmax.f32 %v783, %v1085
  %v1193 = vmax.f32 %v784, %v1090
  %v1194 = vmax.f32 %v785, %v1095
  %v1195 = vmax.f32 %v786, %v1100
  %v1196 = vmax.f32 %v787, %v1105
  %v1197 = vmax.f32 %v788, %v1110
  %v1198 = vmax.f32 %v789, %v1115
  %v1199 = vmax.f32 %v790, %v1120
  %v1200 = vmax.f32 %v791, %v1125
  %v1201 = vmax.f32 %v792, %v1130
  %v1202 = vmax.f32 %v793, %v1135
  %v1203 = vmax.f32 %v794, %v1140
  %v1204 = vmax.f32 %v795, %v1145
  %v1205 = vmax.f32 %v796, %v1150
  %v1206 = vmax.f32 %v797, %v1155
  %s1207 = scalar_lea.vmem %s0, 1176
  %v1208 = vld [vmem:[%s1207] sm:$0xff]
  %v1209 = vld [vmem:[%s1207 + $0x8] sm:$0xff]
  %v1210 = vld [vmem:[%s1207 + $0x10] sm:$0xff]
  %v1211 = vld [vmem:[%s1207 + $0x18] sm:$0xff]
  %v1212 = vld [vmem:[%s1207 + $0x20] sm:$0xff]
  %v1213 = vld [vmem:[%s1207 + $0x28] sm:$0xff]
  %v1214 = vld [vmem:[%s1207 + $0x30] sm:$0xff]
  %v1215 = vld [vmem:[%s1207 + $0x38] sm:$0xff]
  %v1216 = vld [vmem:[%s1207 + $0x40] sm:$0xff]
  %v1217 = vld [vmem:[%s1207 + $0x48] sm:$0xff]
  %v1218 = vld [vmem:[%s1207 + $0x50] sm:$0xff]
  %v1219 = vld [vmem:[%s1207 + $0x58] sm:$0xff]
  %v1220 = vld [vmem:[%s1207 + $0x60] sm:$0xff]
  %v1221 = vld [vmem:[%s1207 + $0x68] sm:$0xff]
  %v1222 = vld [vmem:[%s1207 + $0x70] sm:$0xff]
  %v1223 = vld [vmem:[%s1207 + $0x78] sm:$0xff]
  %v1224 = vld [vmem:[%s1207 + $0x80] sm:$0xff]
  %v1225 = vld [vmem:[%s1207 + $0x88] sm:$0xff]
  %v1226 = vld [vmem:[%s1207 + $0x90] sm:$0xff]
  %v1227 = vld [vmem:[%s1207 + $0x98] sm:$0xff]
  %v1228 = vld [vmem:[%s1207 + $0xa0] sm:$0xff]
  %v1229 = vld [vmem:[%s1207 + $0xa8] sm:$0xff]
  %v1230 = vld [vmem:[%s1207 + $0xb0] sm:$0xff]
  %v1231 = vld [vmem:[%s1207 + $0xb8] sm:$0xff]
  %v1232 = vld [vmem:[%s1207 + $0xc0] sm:$0xff]
  %v1233 = vld [vmem:[%s1207 + $0xc8] sm:$0xff]
  %v1234 = vld [vmem:[%s1207 + $0xd0] sm:$0xff]
  %v1235 = vld [vmem:[%s1207 + $0xd8] sm:$0xff]
  %v1236 = vld [vmem:[%s1207 + $0xe0] sm:$0xff]
  %v1237 = vld [vmem:[%s1207 + $0xe8] sm:$0xff]
  %v1238 = vld [vmem:[%s1207 + $0xf0] sm:$0xff]
  %v1239 = vld [vmem:[%s1207 + $0xf8] sm:$0xff]
  %v1240 = vld [vmem:[%s1207 + $0x100] sm:$0xff]
  %v1241 = vld [vmem:[%s1207 + $0x108] sm:$0xff]
  %v1242 = vld [vmem:[%s1207 + $0x110] sm:$0xff]
  %v1243 = vld [vmem:[%s1207 + $0x118] sm:$0xff]
  %v1244 = vld [vmem:[%s1207 + $0x120] sm:$0xff]
  %v1245 = vld [vmem:[%s1207 + $0x128] sm:$0xff]
  %v1246 = vld [vmem:[%s1207 + $0x130] sm:$0xff]
  %v1247 = vld [vmem:[%s1207 + $0x138] sm:$0xff]
  %v1248 = vld [vmem:[%s1207 + $0x140] sm:$0xff]
  %v1249 = vld [vmem:[%s1207 + $0x148] sm:$0xff]
  %v1250 = vld [vmem:[%s1207 + $0x150] sm:$0xff]
  %v1251 = vld [vmem:[%s1207 + $0x158] sm:$0xff]
  %v1252 = vld [vmem:[%s1207 + $0x160] sm:$0xff]
  %v1253 = vld [vmem:[%s1207 + $0x168] sm:$0xff]
  %v1254 = vld [vmem:[%s1207 + $0x170] sm:$0xff]
  %v1255 = vld [vmem:[%s1207 + $0x178] sm:$0xff]
  %v1256 = vld [vmem:[%s1207 + $0x180] sm:$0xff]
  %1257 = vmatprep.subr.mxu0 0.0
  %1258 = vmatpush1.msra.mxu0 %v14
  %1259 = vmatprep.subr.mxu0 0.0
  %1260 = vmatpush1.msra.mxu0 %v15
  %1261 = vmatprep.subr.mxu0 0.0
  %1262 = vmatpush1.msra.mxu0 %v16
  %1263 = vmatprep.subr.mxu0 0.0
  %1264 = vmatpush1.msra.mxu0 %v17
  %1265 = vmatprep.subr.mxu0 0.0
  %1266 = vmatpush1.msra.mxu0 %v18
  %1267 = vmatprep.subr.mxu0 0.0
  %1268 = vmatpush1.msra.mxu0 %v19
  %1269 = vmatprep.subr.mxu0 0.0
  %1270 = vmatpush1.msra.mxu0 %v20
  %1271 = vmatprep.subr.mxu0 0.0
  %1272 = vmatpush1.msra.mxu0 %v21
  %1273 = vmatprep.subr.mxu0 0.0
  %1274 = vmatpush1.msra.mxu0 %v22
  %1275 = vmatprep.subr.mxu0 0.0
  %1276 = vmatpush1.msra.mxu0 %v23
  %1277 = vmatprep.subr.mxu0 0.0
  %1278 = vmatpush1.msra.mxu0 %v24
  %1279 = vmatprep.subr.mxu0 0.0
  %1280 = vmatpush1.msra.mxu0 %v25
  %1281 = vmatprep.subr.mxu0 0.0
  %1282 = vmatpush1.msra.mxu0 %v26
  %1283 = vmatprep.subr.mxu0 0.0
  %1284 = vmatpush1.msra.mxu0 %v27
  %1285 = vmatprep.subr.mxu0 0.0
  %1286 = vmatpush1.msra.mxu0 %v28
  %1287 = vmatprep.subr.mxu0 0.0
  %1288 = vmatpush1.msra.mxu0 %v29
  %1289 = vmatprep.subr.mxu0 0.0
  %1290 = vmatpush1.msra.mxu0 0.0
  %1291 = vmatprep.subr.mxu0 0.0
  %1292 = vmatpush1.msra.mxu0 0.0
  %1293 = vmatprep.subr.mxu0 0.0
  %1294 = vmatpush1.msra.mxu0 0.0
  %1295 = vmatprep.subr.mxu0 0.0
  %1296 = vmatpush1.msra.mxu0 0.0
  %1297 = vmatprep.subr.mxu0 0.0
  %1298 = vmatpush1.msra.mxu0 0.0
  %1299 = vmatprep.subr.mxu0 0.0
  %1300 = vmatpush1.msra.mxu0 0.0
  %1301 = vmatprep.subr.mxu0 0.0
  %1302 = vmatpush1.msra.mxu0 0.0
  %1303 = vmatprep.subr.mxu0 0.0
  %1304 = vmatpush1.msra.mxu0 0.0
  %1305 = vmatprep.subr.mxu0 0.0
  %1306 = vmatpush1.msra.mxu0 0.0
  %1307 = vmatprep.subr.mxu0 0.0
  %1308 = vmatpush1.msra.mxu0 0.0
  %1309 = vmatprep.subr.mxu0 0.0
  %1310 = vmatpush1.msra.mxu0 0.0
  %1311 = vmatprep.subr.mxu0 0.0
  %1312 = vmatpush1.msra.mxu0 0.0
  %1313 = vmatprep.subr.mxu0 0.0
  %1314 = vmatpush1.msra.mxu0 0.0
  %1315 = vmatprep.subr.mxu0 0.0
  %1316 = vmatpush1.msra.mxu0 0.0
  %1317 = vmatprep.subr.mxu0 0.0
  %1318 = vmatpush1.msra.mxu0 0.0
  %1319 = vmatprep.subr.mxu0 0.0
  %1320 = vmatpush1.msra.mxu0 0.0
  %1321 = vmatprep.mubr.f32.mxu0 0.0
  %1322 = vmatmul.mubr.f32.gmra.mrb[0].mxu0 %v1208
  %v1323 = vpop.f32.mrb[0].mxu0
  %v1324 = vadd.f32 0.0, %v1323
  %v1325 = vpop.f32.mrb[0].mxu0
  %1326 = vmatprep.mubr.f32.mxu0 0.0
  %1327 = vmatmul.mubr.f32.gmra.mrb[0].mxu0 %v1209
  %v1328 = vpop.f32.mrb[0].mxu0
  %v1329 = vadd.f32 0.0, %v1328
  %v1330 = vpop.f32.mrb[0].mxu0
  %1331 = vmatprep.mubr.f32.mxu0 0.0
  %1332 = vmatmul.mubr.f32.gmra.mrb[0].mxu0 %v1210
  %v1333 = vpop.f32.mrb[0].mxu0
  %v1334 = vadd.f32 0.0, %v1333
  %v1335 = vpop.f32.mrb[0].mxu0
  %1336 = vmatprep.mubr.f32.mxu0 0.0
  %1337 = vmatmul.mubr.f32.gmra.mrb[0].mxu0 %v1211
  %v1338 = vpop.f32.mrb[0].mxu0
  %v1339 = vadd.f32 0.0, %v1338
  %v1340 = vpop.f32.mrb[0].mxu0
  %1341 = vmatprep.mubr.f32.mxu0 0.0
  %1342 = vmatmul.mubr.f32.gmra.mrb[0].mxu0 %v1212
  %v1343 = vpop.f32.mrb[0].mxu0
  %v1344 = vadd.f32 0.0, %v1343
  %v1345 = vpop.f32.mrb[0].mxu0
  %1346 = vmatprep.mubr.f32.mxu0 0.0
  %1347 = vmatmul.mubr.f32.gmra.mrb[0].mxu0 %v1213
  %v1348 = vpop.f32.mrb[0].mxu0
  %v1349 = vadd.f32 0.0, %v1348
  %v1350 = vpop.f32.mrb[0].mxu0
  %1351 = vmatprep.mubr.f32.mxu0 0.0
  %1352 = vmatmul.mubr.f32.gmra.mrb[0].mxu0 %v1214
  %v1353 = vpop.f32.mrb[0].mxu0
  %v1354 = vadd.f32 0.0, %v1353
  %v1355 = vpop.f32.mrb[0].mxu0
  %1356 = vmatprep.mubr.f32.mxu0 0.0
  %1357 = vmatmul.mubr.f32.gmra.mrb[0].mxu0 %v1215
  %v1358 = vpop.f32.mrb[0].mxu0
  %v1359 = vadd.f32 0.0, %v1358
  %v1360 = vpop.f32.mrb[0].mxu0
  %1361 = vmatprep.mubr.f32.mxu0 0.0
  %1362 = vmatmul.mubr.f32.gmra.mrb[0].mxu0 %v1216
  %v1363 = vpop.f32.mrb[0].mxu0
  %v1364 = vadd.f32 0.0, %v1363
  %v1365 = vpop.f32.mrb[0].mxu0
  %1366 = vmatprep.mubr.f32.mxu0 0.0
  %1367 = vmatmul.mubr.f32.gmra.mrb[0].mxu0 %v1217
  %v1368 = vpop.f32.mrb[0].mxu0
  %v1369 = vadd.f32 0.0, %v1368
  %v1370 = vpop.f32.mrb[0].mxu0
  %1371 = vmatprep.mubr.f32.mxu0 0.0
  %1372 = vmatmul.mubr.f32.gmra.mrb[0].mxu0 %v1218
  %v1373 = vpop.f32.mrb[0].mxu0
  %v1374 = vadd.f32 0.0, %v1373
  %v1375 = vpop.f32.mrb[0].mxu0
  %1376 = vmatprep.mubr.f32.mxu0 0.0
  %1377 = vmatmul.mubr.f32.gmra.mrb[0].mxu0 %v1219
  %v1378 = vpop.f32.mrb[0].mxu0
  %v1379 = vadd.f32 0.0, %v1378
  %v1380 = vpop.f32.mrb[0].mxu0
  %1381 = vmatprep.mubr.f32.mxu0 0.0
  %1382 = vmatmul.mubr.f32.gmra.mrb[0].mxu0 %v1220
  %v1383 = vpop.f32.mrb[0].mxu0
  %v1384 = vadd.f32 0.0, %v1383
  %v1385 = vpop.f32.mrb[0].mxu0
  %1386 = vmatprep.mubr.f32.mxu0 0.0
  %1387 = vmatmul.mubr.f32.gmra.mrb[0].mxu0 %v1221
  %v1388 = vpop.f32.mrb[0].mxu0
  %v1389 = vadd.f32 0.0, %v1388
  %v1390 = vpop.f32.mrb[0].mxu0
  %1391 = vmatprep.mubr.f32.mxu0 0.0
  %1392 = vmatmul.mubr.f32.gmra.mrb[0].mxu0 %v1222
  %v1393 = vpop.f32.mrb[0].mxu0
  %v1394 = vadd.f32 0.0, %v1393
  %v1395 = vpop.f32.mrb[0].mxu0
  %1396 = vmatprep.mubr.f32.mxu0 0.0
  %1397 = vmatmul.mubr.f32.gmra.mrb[0].mxu0 %v1223
  %v1398 = vpop.f32.mrb[0].mxu0
  %v1399 = vadd.f32 0.0, %v1398
  %v1400 = vpop.f32.mrb[0].mxu0
  %1401 = vmatprep.mubr.f32.mxu0 0.0
  %1402 = vmatmul.mubr.f32.gmra.mrb[0].mxu0 %v1224
  %v1403 = vpop.f32.mrb[0].mxu0
  %v1404 = vadd.f32 0.0, %v1403
  %v1405 = vpop.f32.mrb[0].mxu0
  %1406 = vmatprep.mubr.f32.mxu0 0.0
  %1407 = vmatmul.mubr.f32.gmra.mrb[0].mxu0 %v1225
  %v1408 = vpop.f32.mrb[0].mxu0
  %v1409 = vadd.f32 0.0, %v1408
  %v1410 = vpop.f32.mrb[0].mxu0
  %1411 = vmatprep.mubr.f32.mxu0 0.0
  %1412 = vmatmul.mubr.f32.gmra.mrb[0].mxu0 %v1226
  %v1413 = vpop.f32.mrb[0].mxu0
  %v1414 = vadd.f32 0.0, %v1413
  %v1415 = vpop.f32.mrb[0].mxu0
  %1416 = vmatprep.mubr.f32.mxu0 0.0
  %1417 = vmatmul.mubr.f32.gmra.mrb[0].mxu0 %v1227
  %v1418 = vpop.f32.mrb[0].mxu0
  %v1419 = vadd.f32 0.0, %v1418
  %v1420 = vpop.f32.mrb[0].mxu0
  %1421 = vmatprep.mubr.f32.mxu0 0.0
  %1422 = vmatmul.mubr.f32.gmra.mrb[0].mxu0 %v1228
  %v1423 = vpop.f32.mrb[0].mxu0
  %v1424 = vadd.f32 0.0, %v1423
  %v1425 = vpop.f32.mrb[0].mxu0
  %1426 = vmatprep.mubr.f32.mxu0 0.0
  %1427 = vmatmul.mubr.f32.gmra.mrb[0].mxu0 %v1229
  %v1428 = vpop.f32.mrb[0].mxu0
  %v1429 = vadd.f32 0.0, %v1428
  %v1430 = vpop.f32.mrb[0].mxu0
  %1431 = vmatprep.mubr.f32.mxu0 0.0
  %1432 = vmatmul.mubr.f32.gmra.mrb[0].mxu0 %v1230
  %v1433 = vpop.f32.mrb[0].mxu0
  %v1434 = vadd.f32 0.0, %v1433
  %v1435 = vpop.f32.mrb[0].mxu0
  %1436 = vmatprep.mubr.f32.mxu0 0.0
  %1437 = vmatmul.mubr.f32.gmra.mrb[0].mxu0 %v1231
  %v1438 = vpop.f32.mrb[0].mxu0
  %v1439 = vadd.f32 0.0, %v1438
  %v1440 = vpop.f32.mrb[0].mxu0
  %1441 = vmatprep.mubr.f32.mxu0 0.0
  %1442 = vmatmul.mubr.f32.gmra.mrb[0].mxu0 %v1232
  %v1443 = vpop.f32.mrb[0].mxu0
  %v1444 = vadd.f32 0.0, %v1443
  %v1445 = vpop.f32.mrb[0].mxu0
  %1446 = vmatprep.mubr.f32.mxu0 0.0
  %1447 = vmatmul.mubr.f32.gmra.mrb[0].mxu0 %v1233
  %v1448 = vpop.f32.mrb[0].mxu0
  %v1449 = vadd.f32 0.0, %v1448
  %v1450 = vpop.f32.mrb[0].mxu0
  %1451 = vmatprep.mubr.f32.mxu0 0.0
  %1452 = vmatmul.mubr.f32.gmra.mrb[0].mxu0 %v1234
  %v1453 = vpop.f32.mrb[0].mxu0
  %v1454 = vadd.f32 0.0, %v1453
  %v1455 = vpop.f32.mrb[0].mxu0
  %1456 = vmatprep.mubr.f32.mxu0 0.0
  %1457 = vmatmul.mubr.f32.gmra.mrb[0].mxu0 %v1235
  %v1458 = vpop.f32.mrb[0].mxu0
  %v1459 = vadd.f32 0.0, %v1458
  %v1460 = vpop.f32.mrb[0].mxu0
  %1461 = vmatprep.mubr.f32.mxu0 0.0
  %1462 = vmatmul.mubr.f32.gmra.mrb[0].mxu0 %v1236
  %v1463 = vpop.f32.mrb[0].mxu0
  %v1464 = vadd.f32 0.0, %v1463
  %v1465 = vpop.f32.mrb[0].mxu0
  %1466 = vmatprep.mubr.f32.mxu0 0.0
  %1467 = vmatmul.mubr.f32.gmra.mrb[0].mxu0 %v1237
  %v1468 = vpop.f32.mrb[0].mxu0
  %v1469 = vadd.f32 0.0, %v1468
  %v1470 = vpop.f32.mrb[0].mxu0
  %1471 = vmatprep.mubr.f32.mxu0 0.0
  %1472 = vmatmul.mubr.f32.gmra.mrb[0].mxu0 %v1238
  %v1473 = vpop.f32.mrb[0].mxu0
  %v1474 = vadd.f32 0.0, %v1473
  %v1475 = vpop.f32.mrb[0].mxu0
  %1476 = vmatprep.mubr.f32.mxu0 0.0
  %1477 = vmatmul.mubr.f32.gmra.mrb[0].mxu0 %v1239
  %v1478 = vpop.f32.mrb[0].mxu0
  %v1479 = vadd.f32 0.0, %v1478
  %v1480 = vpop.f32.mrb[0].mxu0
  %1481 = vmatprep.mubr.f32.mxu0 0.0
  %1482 = vmatmul.mubr.f32.gmra.mrb[0].mxu0 %v1240
  %v1483 = vpop.f32.mrb[0].mxu0
  %v1484 = vadd.f32 0.0, %v1483
  %v1485 = vpop.f32.mrb[0].mxu0
  %1486 = vmatprep.mubr.f32.mxu0 0.0
  %1487 = vmatmul.mubr.f32.gmra.mrb[0].mxu0 %v1241
  %v1488 = vpop.f32.mrb[0].mxu0
  %v1489 = vadd.f32 0.0, %v1488
  %v1490 = vpop.f32.mrb[0].mxu0
  %1491 = vmatprep.mubr.f32.mxu0 0.0
  %1492 = vmatmul.mubr.f32.gmra.mrb[0].mxu0 %v1242
  %v1493 = vpop.f32.mrb[0].mxu0
  %v1494 = vadd.f32 0.0, %v1493
  %v1495 = vpop.f32.mrb[0].mxu0
  %1496 = vmatprep.mubr.f32.mxu0 0.0
  %1497 = vmatmul.mubr.f32.gmra.mrb[0].mxu0 %v1243
  %v1498 = vpop.f32.mrb[0].mxu0
  %v1499 = vadd.f32 0.0, %v1498
  %v1500 = vpop.f32.mrb[0].mxu0
  %1501 = vmatprep.mubr.f32.mxu0 0.0
  %1502 = vmatmul.mubr.f32.gmra.mrb[0].mxu0 %v1244
  %v1503 = vpop.f32.mrb[0].mxu0
  %v1504 = vadd.f32 0.0, %v1503
  %v1505 = vpop.f32.mrb[0].mxu0
  %1506 = vmatprep.mubr.f32.mxu0 0.0
  %1507 = vmatmul.mubr.f32.gmra.mrb[0].mxu0 %v1245
  %v1508 = vpop.f32.mrb[0].mxu0
  %v1509 = vadd.f32 0.0, %v1508
  %v1510 = vpop.f32.mrb[0].mxu0
  %1511 = vmatprep.mubr.f32.mxu0 0.0
  %1512 = vmatmul.mubr.f32.gmra.mrb[0].mxu0 %v1246
  %v1513 = vpop.f32.mrb[0].mxu0
  %v1514 = vadd.f32 0.0, %v1513
  %v1515 = vpop.f32.mrb[0].mxu0
  %1516 = vmatprep.mubr.f32.mxu0 0.0
  %1517 = vmatmul.mubr.f32.gmra.mrb[0].mxu0 %v1247
  %v1518 = vpop.f32.mrb[0].mxu0
  %v1519 = vadd.f32 0.0, %v1518
  %v1520 = vpop.f32.mrb[0].mxu0
  %1521 = vmatprep.mubr.f32.mxu0 0.0
  %1522 = vmatmul.mubr.f32.gmra.mrb[0].mxu0 %v1248
  %v1523 = vpop.f32.mrb[0].mxu0
  %v1524 = vadd.f32 0.0, %v1523
  %v1525 = vpop.f32.mrb[0].mxu0
  %1526 = vmatprep.mubr.f32.mxu0 0.0
  %1527 = vmatmul.mubr.f32.gmra.mrb[0].mxu0 %v1249
  %v1528 = vpop.f32.mrb[0].mxu0
  %v1529 = vadd.f32 0.0, %v1528
  %v1530 = vpop.f32.mrb[0].mxu0
  %1531 = vmatprep.mubr.f32.mxu0 0.0
  %1532 = vmatmul.mubr.f32.gmra.mrb[0].mxu0 %v1250
  %v1533 = vpop.f32.mrb[0].mxu0
  %v1534 = vadd.f32 0.0, %v1533
  %v1535 = vpop.f32.mrb[0].mxu0
  %1536 = vmatprep.mubr.f32.mxu0 0.0
  %1537 = vmatmul.mubr.f32.gmra.mrb[0].mxu0 %v1251
  %v1538 = vpop.f32.mrb[0].mxu0
  %v1539 = vadd.f32 0.0, %v1538
  %v1540 = vpop.f32.mrb[0].mxu0
  %1541 = vmatprep.mubr.f32.mxu0 0.0
  %1542 = vmatmul.mubr.f32.gmra.mrb[0].mxu0 %v1252
  %v1543 = vpop.f32.mrb[0].mxu0
  %v1544 = vadd.f32 0.0, %v1543
  %v1545 = vpop.f32.mrb[0].mxu0
  %1546 = vmatprep.mubr.f32.mxu0 0.0
  %1547 = vmatmul.mubr.f32.gmra.mrb[0].mxu0 %v1253
  %v1548 = vpop.f32.mrb[0].mxu0
  %v1549 = vadd.f32 0.0, %v1548
  %v1550 = vpop.f32.mrb[0].mxu0
  %1551 = vmatprep.mubr.f32.mxu0 0.0
  %1552 = vmatmul.mubr.f32.gmra.mrb[0].mxu0 %v1254
  %v1553 = vpop.f32.mrb[0].mxu0
  %v1554 = vadd.f32 0.0, %v1553
  %v1555 = vpop.f32.mrb[0].mxu0
  %1556 = vmatprep.mubr.f32.mxu0 0.0
  %1557 = vmatmul.mubr.f32.gmra.mrb[0].mxu0 %v1255
  %v1558 = vpop.f32.mrb[0].mxu0
  %v1559 = vadd.f32 0.0, %v1558
  %v1560 = vpop.f32.mrb[0].mxu0
  %1561 = vmatprep.mubr.f32.mxu0 0.0
  %1562 = vmatmul.mubr.f32.gmra.mrb[0].mxu0 %v1256
  %v1563 = vpop.f32.mrb[0].mxu0
  %v1564 = vadd.f32 0.0, %v1563
  %v1565 = vpop.f32.mrb[0].mxu0
  %1566 = vdwg.mxu0
  %v1567 = vmax.f32 %v1158, %v1324
  %v1568 = vmax.f32 %v1159, %v1329
  %v1569 = vmax.f32 %v1160, %v1334
  %v1570 = vmax.f32 %v1161, %v1339
  %v1571 = vmax.f32 %v1162, %v1344
  %v1572 = vmax.f32 %v1163, %v1349
  %v1573 = vmax.f32 %v1164, %v1354
  %v1574 = vmax.f32 %v1165, %v1359
  %v1575 = vmax.f32 %v1166, %v1364
  %v1576 = vmax.f32 %v1167, %v1369
  %v1577 = vmax.f32 %v1168, %v1374
  %v1578 = vmax.f32 %v1169, %v1379
  %v1579 = vmax.f32 %v1170, %v1384
  %v1580 = vmax.f32 %v1171, %v1389
  %v1581 = vmax.f32 %v1172, %v1394
  %v1582 = vmax.f32 %v1173, %v1399
  %v1583 = vmax.f32 %v1174, %v1404
  %v1584 = vmax.f32 %v1175, %v1409
  %v1585 = vmax.f32 %v1176, %v1414
  %v1586 = vmax.f32 %v1177, %v1419
  %v1587 = vmax.f32 %v1178, %v1424
  %v1588 = vmax.f32 %v1179, %v1429
  %v1589 = vmax.f32 %v1180, %v1434
  %v1590 = vmax.f32 %v1181, %v1439
  %v1591 = vmax.f32 %v1182, %v1444
  %v1592 = vmax.f32 %v1183, %v1449
  %v1593 = vmax.f32 %v1184, %v1454
  %v1594 = vmax.f32 %v1185, %v1459
  %v1595 = vmax.f32 %v1186, %v1464
  %v1596 = vmax.f32 %v1187, %v1469
  %v1597 = vmax.f32 %v1188, %v1474
  %v1598 = vmax.f32 %v1189, %v1479
  %v1599 = vmax.f32 %v1190, %v1484
  %v1600 = vmax.f32 %v1191, %v1489
  %v1601 = vmax.f32 %v1192, %v1494
  %v1602 = vmax.f32 %v1193, %v1499
  %v1603 = vmax.f32 %v1194, %v1504
  %v1604 = vmax.f32 %v1195, %v1509
  %v1605 = vmax.f32 %v1196, %v1514
  %v1606 = vmax.f32 %v1197, %v1519
  %v1607 = vmax.f32 %v1198, %v1524
  %v1608 = vmax.f32 %v1199, %v1529
  %v1609 = vmax.f32 %v1200, %v1534
  %v1610 = vmax.f32 %v1201, %v1539
  %v1611 = vmax.f32 %v1202, %v1544
  %v1612 = vmax.f32 %v1203, %v1549
  %v1613 = vmax.f32 %v1204, %v1554
  %v1614 = vmax.f32 %v1205, %v1559
  %v1615 = vmax.f32 %v1206, %v1564
  %v1616 = vld [vmem:[%s2] sm:$0x1]
  %v1618 = vlaneseq
  %v1619 = vshrl.u32 %v1618, 7
  %v1620 = vsub.s32 0, %v1619
  %v1621 = vrot.slane %v1616, %v1620
  %v1623 = vadd.f32 %v1567, %v1621
  %v1624 = vadd.f32 %v1568, %v1621
  %v1625 = vadd.f32 %v1569, %v1621
  %v1626 = vadd.f32 %v1570, %v1621
  %v1627 = vadd.f32 %v1571, %v1621
  %v1628 = vadd.f32 %v1572, %v1621
  %v1629 = vadd.f32 %v1573, %v1621
  %v1630 = vadd.f32 %v1574, %v1621
  %v1631 = vadd.f32 %v1575, %v1621
  %v1632 = vadd.f32 %v1576, %v1621
  %v1633 = vadd.f32 %v1577, %v1621
  %v1634 = vadd.f32 %v1578, %v1621
  %v1635 = vadd.f32 %v1579, %v1621
  %v1636 = vadd.f32 %v1580, %v1621
  %v1637 = vadd.f32 %v1581, %v1621
  %v1638 = vadd.f32 %v1582, %v1621
  %v1639 = vadd.f32 %v1583, %v1621
  %v1640 = vadd.f32 %v1584, %v1621
  %v1641 = vadd.f32 %v1585, %v1621
  %v1642 = vadd.f32 %v1586, %v1621
  %v1643 = vadd.f32 %v1587, %v1621
  %v1644 = vadd.f32 %v1588, %v1621
  %v1645 = vadd.f32 %v1589, %v1621
  %v1646 = vadd.f32 %v1590, %v1621
  %v1647 = vadd.f32 %v1591, %v1621
  %v1648 = vadd.f32 %v1592, %v1621
  %v1649 = vadd.f32 %v1593, %v1621
  %v1650 = vadd.f32 %v1594, %v1621
  %v1651 = vadd.f32 %v1595, %v1621
  %v1652 = vadd.f32 %v1596, %v1621
  %v1653 = vadd.f32 %v1597, %v1621
  %v1654 = vadd.f32 %v1598, %v1621
  %v1655 = vadd.f32 %v1599, %v1621
  %v1656 = vadd.f32 %v1600, %v1621
  %v1657 = vadd.f32 %v1601, %v1621
  %v1658 = vadd.f32 %v1602, %v1621
  %v1659 = vadd.f32 %v1603, %v1621
  %v1660 = vadd.f32 %v1604, %v1621
  %v1661 = vadd.f32 %v1605, %v1621
  %v1662 = vadd.f32 %v1606, %v1621
  %v1663 = vadd.f32 %v1607, %v1621
  %v1664 = vadd.f32 %v1608, %v1621
  %v1665 = vadd.f32 %v1609, %v1621
  %v1666 = vadd.f32 %v1610, %v1621
  %v1667 = vadd.f32 %v1611, %v1621
  %v1668 = vadd.f32 %v1612, %v1621
  %v1669 = vadd.f32 %v1613, %v1621
  %v1670 = vadd.f32 %v1614, %v1621
  %v1671 = vadd.f32 %v1615, %v1621
  %v1672 = vmax.f32 %v1623, 0.0
  %v1673 = vmax.f32 %v1624, 0.0
  %v1674 = vmax.f32 %v1625, 0.0
  %v1675 = vmax.f32 %v1626, 0.0
  %v1676 = vmax.f32 %v1627, 0.0
  %v1677 = vmax.f32 %v1628, 0.0
  %v1678 = vmax.f32 %v1629, 0.0
  %v1679 = vmax.f32 %v1630, 0.0
  %v1680 = vmax.f32 %v1631, 0.0
  %v1681 = vmax.f32 %v1632, 0.0
  %v1682 = vmax.f32 %v1633, 0.0
  %v1683 = vmax.f32 %v1634, 0.0
  %v1684 = vmax.f32 %v1635, 0.0
  %v1685 = vmax.f32 %v1636, 0.0
  %v1686 = vmax.f32 %v1637, 0.0
  %v1687 = vmax.f32 %v1638, 0.0
  %v1688 = vmax.f32 %v1639, 0.0
  %v1689 = vmax.f32 %v1640, 0.0
  %v1690 = vmax.f32 %v1641, 0.0
  %v1691 = vmax.f32 %v1642, 0.0
  %v1692 = vmax.f32 %v1643, 0.0
  %v1693 = vmax.f32 %v1644, 0.0
  %v1694 = vmax.f32 %v1645, 0.0
  %v1695 = vmax.f32 %v1646, 0.0
  %v1696 = vmax.f32 %v1647, 0.0
  %v1697 = vmax.f32 %v1648, 0.0
  %v1698 = vmax.f32 %v1649, 0.0
  %v1699 = vmax.f32 %v1650, 0.0
  %v1700 = vmax.f32 %v1651, 0.0
  %v1701 = vmax.f32 %v1652, 0.0
  %v1702 = vmax.f32 %v1653, 0.0
  %v1703 = vmax.f32 %v1654, 0.0
  %v1704 = vmax.f32 %v1655, 0.0
  %v1705 = vmax.f32 %v1656, 0.0
  %v1706 = vmax.f32 %v1657, 0.0
  %v1707 = vmax.f32 %v1658, 0.0
  %v1708 = vmax.f32 %v1659, 0.0
  %v1709 = vmax.f32 %v1660, 0.0
  %v1710 = vmax.f32 %v1661, 0.0
  %v1711 = vmax.f32 %v1662, 0.0
  %v1712 = vmax.f32 %v1663, 0.0
  %v1713 = vmax.f32 %v1664, 0.0
  %v1714 = vmax.f32 %v1665, 0.0
  %v1715 = vmax.f32 %v1666, 0.0
  %v1716 = vmax.f32 %v1667, 0.0
  %v1717 = vmax.f32 %v1668, 0.0
  %v1718 = vmax.f32 %v1669, 0.0
  %v1719 = vmax.f32 %v1670, 0.0
  %v1720 = vmax.f32 %v1671, 0.0
  %1721 = vst [vmem:[%s3] sm:$0xff] %v1672
  %1722 = vst [vmem:[%s3 + $0x8] sm:$0xff] %v1673
  %1723 = vst [vmem:[%s3 + $0x10] sm:$0xff] %v1674
  %1724 = vst [vmem:[%s3 + $0x18] sm:$0xff] %v1675
  %1725 = vst [vmem:[%s3 + $0x20] sm:$0xff] %v1676
  %1726 = vst [vmem:[%s3 + $0x28] sm:$0xff] %v1677
  %1727 = vst [vmem:[%s3 + $0x30] sm:$0xff] %v1678
  %1728 = vst [vmem:[%s3 + $0x38] sm:$0xff] %v1679
  %1729 = vst [vmem:[%s3 + $0x40] sm:$0xff] %v1680
  %1730 = vst [vmem:[%s3 + $0x48] sm:$0xff] %v1681
  %1731 = vst [vmem:[%s3 + $0x50] sm:$0xff] %v1682
  %1732 = vst [vmem:[%s3 + $0x58] sm:$0xff] %v1683
  %1733 = vst [vmem:[%s3 + $0x60] sm:$0xff] %v1684
  %1734 = vst [vmem:[%s3 + $0x68] sm:$0xff] %v1685
  %1735 = vst [vmem:[%s3 + $0x70] sm:$0xff] %v1686
  %1736 = vst [vmem:[%s3 + $0x78] sm:$0xff] %v1687
  %1737 = vst [vmem:[%s3 + $0x80] sm:$0xff] %v1688
  %1738 = vst [vmem:[%s3 + $0x88] sm:$0xff] %v1689
  %1739 = vst [vmem:[%s3 + $0x90] sm:$0xff] %v1690
  %1740 = vst [vmem:[%s3 + $0x98] sm:$0xff] %v1691
  %1741 = vst [vmem:[%s3 + $0xa0] sm:$0xff] %v1692
  %1742 = vst [vmem:[%s3 + $0xa8] sm:$0xff] %v1693
  %1743 = vst [vmem:[%s3 + $0xb0] sm:$0xff] %v1694
  %1744 = vst [vmem:[%s3 + $0xb8] sm:$0xff] %v1695
  %1745 = vst [vmem:[%s3 + $0xc0] sm:$0xff] %v1696
  %1746 = vst [vmem:[%s3 + $0xc8] sm:$0xff] %v1697
  %1747 = vst [vmem:[%s3 + $0xd0] sm:$0xff] %v1698
  %1748 = vst [vmem:[%s3 + $0xd8] sm:$0xff] %v1699
  %1749 = vst [vmem:[%s3 + $0xe0] sm:$0xff] %v1700
  %1750 = vst [vmem:[%s3 + $0xe8] sm:$0xff] %v1701
  %1751 = vst [vmem:[%s3 + $0xf0] sm:$0xff] %v1702
  %1752 = vst [vmem:[%s3 + $0xf8] sm:$0xff] %v1703
  %1753 = vst [vmem:[%s3 + $0x100] sm:$0xff] %v1704
  %1754 = vst [vmem:[%s3 + $0x108] sm:$0xff] %v1705
  %1755 = vst [vmem:[%s3 + $0x110] sm:$0xff] %v1706
  %1756 = vst [vmem:[%s3 + $0x118] sm:$0xff] %v1707
  %1757 = vst [vmem:[%s3 + $0x120] sm:$0xff] %v1708
  %1758 = vst [vmem:[%s3 + $0x128] sm:$0xff] %v1709
  %1759 = vst [vmem:[%s3 + $0x130] sm:$0xff] %v1710
  %1760 = vst [vmem:[%s3 + $0x138] sm:$0xff] %v1711
  %1761 = vst [vmem:[%s3 + $0x140] sm:$0xff] %v1712
  %1762 = vst [vmem:[%s3 + $0x148] sm:$0xff] %v1713
  %1763 = vst [vmem:[%s3 + $0x150] sm:$0xff] %v1714
  %1764 = vst [vmem:[%s3 + $0x158] sm:$0xff] %v1715
  %1765 = vst [vmem:[%s3 + $0x160] sm:$0xff] %v1716
  %1766 = vst [vmem:[%s3 + $0x168] sm:$0xff] %v1717
  %1767 = vst [vmem:[%s3 + $0x170] sm:$0xff] %v1718
  %1768 = vst [vmem:[%s3 + $0x178] sm:$0xff] %v1719
  %1769 = vst [vmem:[%s3 + $0x180] sm:$0xff] %v1720
  // Predicated region
  $region14: #{net2_forward.3} parent=0 // pred_check
    _
  $region15: #{net2_forward.3} parent=0 // pred_check_branch
    %1771 = sbr.rel (0) target = $region17
  $region16: #{net2_forward.3} parent=0 // pred_region
    _
  $region17: #{net2_forward.3} parent=0 // pred_fallthru
    _
  // Predicated region
  $region18: #{net2_forward.3} parent=0 // pred_check
    _
  $region19: #{net2_forward.3} parent=0 // pred_check_branch
    %1773 = sbr.rel (0) target = $region21
  $region20: #{net2_forward.3} parent=0 // pred_region
    _
  $region21: #{net2_forward.3} parent=0 // pred_fallthru
    _

// kernel: net2_forward.4
$region0: #{net2_forward.4}
  #allocation0 [shape = 'u32[]', space=smem, size = 0x4, offset = 0x4, fixed_abs, tag = 'smem constant byte address 0x4 - core index']
  #allocation1 [shape = 'u32[144,128]{1,0:T(1,128)}', space=vmem, size = 0x12000, scoped, tag = 'internal scratch']
  %s0 = inlined_call_operand.vmem [shape: f32[4,56,256], index: 0, kind: input, shape index: {}]
  %s1 = inlined_call_operand.vmem [shape: f32[256,128], index: 1, kind: input, shape index: {}]
  %s2 = inlined_call_operand.vmem [shape: f32[1,128], index: 2, kind: input, shape index: {}]
  %s3 = inlined_call_operand.vmem [shape: f32[56,128], index: 3, kind: output, shape index: {}]
  %s4 = sld [smem:[#allocation0]]
  $region22: #{net2_forward.4} parent=0
    _
  %s6 = ssub.s32 1, %s4
  %s7 = scalar_select 0, %s6, %s4
  // Predicated region
  $region2: #{net2_forward.4} parent=0 // pred_check
    _
  $region3: #{net2_forward.4} parent=0 // pred_check_branch
    %9 = sbr.rel (0) target = $region5
  $region4: #{net2_forward.4} parent=0 // pred_region
    _
  $region5: #{net2_forward.4} parent=0 // pred_fallthru
    _
  // Predicated region
  $region6: #{net2_forward.4} parent=0 // pred_check
    _
  $region7: #{net2_forward.4} parent=0 // pred_check_branch
    %11 = sbr.rel (0) target = $region9
  $region8: #{net2_forward.4} parent=0 // pred_region
    _
  $region9: #{net2_forward.4} parent=0 // pred_fallthru
    _
  // Predicated region
  $region10: #{net2_forward.4} parent=0 // pred_check
    _
  $region11: #{net2_forward.4} parent=0 // pred_check_branch
    %13 = sbr.rel (0) target = $region13
  $region12: #{net2_forward.4} parent=0 // pred_region
    _
  $region13: #{net2_forward.4} parent=0 // pred_fallthru
    _
  %v14 = vld [vmem:[%s1] sm:$0xff]
  %v15 = vld [vmem:[%s1 + $0x8] sm:$0xff]
  %v16 = vld [vmem:[%s1 + $0x10] sm:$0xff]
  %v17 = vld [vmem:[%s1 + $0x18] sm:$0xff]
  %v18 = vld [vmem:[%s1 + $0x20] sm:$0xff]
  %v19 = vld [vmem:[%s1 + $0x28] sm:$0xff]
  %v20 = vld [vmem:[%s1 + $0x30] sm:$0xff]
  %v21 = vld [vmem:[%s1 + $0x38] sm:$0xff]
  %v22 = vld [vmem:[%s1 + $0x40] sm:$0xff]
  %v23 = vld [vmem:[%s1 + $0x48] sm:$0xff]
  %v24 = vld [vmem:[%s1 + $0x50] sm:$0xff]
  %v25 = vld [vmem:[%s1 + $0x58] sm:$0xff]
  %v26 = vld [vmem:[%s1 + $0x60] sm:$0xff]
  %v27 = vld [vmem:[%s1 + $0x68] sm:$0xff]
  %v28 = vld [vmem:[%s1 + $0x70] sm:$0xff]
  %v29 = vld [vmem:[%s1 + $0x78] sm:$0xff]
  %v30 = vld [vmem:[%s1 + $0x80] sm:$0xff]
  %v31 = vld [vmem:[%s1 + $0x88] sm:$0xff]
  %v32 = vld [vmem:[%s1 + $0x90] sm:$0xff]
  %v33 = vld [vmem:[%s1 + $0x98] sm:$0xff]
  %v34 = vld [vmem:[%s1 + $0xa0] sm:$0xff]
  %v35 = vld [vmem:[%s1 + $0xa8] sm:$0xff]
  %v36 = vld [vmem:[%s1 + $0xb0] sm:$0xff]
  %v37 = vld [vmem:[%s1 + $0xb8] sm:$0xff]
  %v38 = vld [vmem:[%s1 + $0xc0] sm:$0xff]
  %v39 = vld [vmem:[%s1 + $0xc8] sm:$0xff]
  %v40 = vld [vmem:[%s1 + $0xd0] sm:$0xff]
  %v41 = vld [vmem:[%s1 + $0xd8] sm:$0xff]
  %v42 = vld [vmem:[%s1 + $0xe0] sm:$0xff]
  %v43 = vld [vmem:[%s1 + $0xe8] sm:$0xff]
  %v44 = vld [vmem:[%s1 + $0xf0] sm:$0xff]
  %v45 = vld [vmem:[%s1 + $0xf8] sm:$0xff]
  %v46 = vld [vmem:[%s0] sm:$0xff]
  %v47 = vld [vmem:[%s0 + $0x8] sm:$0xff]
  %v48 = vld [vmem:[%s0 + $0x10] sm:$0xff]
  %v49 = vld [vmem:[%s0 + $0x18] sm:$0xff]
  %v50 = vld [vmem:[%s0 + $0x20] sm:$0xff]
  %v51 = vld [vmem:[%s0 + $0x28] sm:$0xff]
  %v52 = vld [vmem:[%s0 + $0x30] sm:$0xff]
  %v53 = vld [vmem:[%s0 + $0x38] sm:$0xff]
  %v54 = vld [vmem:[%s0 + $0x40] sm:$0xff]
  %v55 = vld [vmem:[%s0 + $0x48] sm:$0xff]
  %v56 = vld [vmem:[%s0 + $0x50] sm:$0xff]
  %v57 = vld [vmem:[%s0 + $0x58] sm:$0xff]
  %v58 = vld [vmem:[%s0 + $0x60] sm:$0xff]
  %v59 = vld [vmem:[%s0 + $0x68] sm:$0xff]
  %60 = vmatprep.subr.mxu0 0.0
  %61 = vmatpush1.msra.mxu0 %v14
  %62 = vmatprep.subr.mxu0 0.0
  %63 = vmatpush1.msra.mxu0 %v15
  %64 = vmatprep.subr.mxu0 0.0
  %65 = vmatpush1.msra.mxu0 %v16
  %66 = vmatprep.subr.mxu0 0.0
  %67 = vmatpush1.msra.mxu0 %v17
  %68 = vmatprep.subr.mxu0 0.0
  %69 = vmatpush1.msra.mxu0 %v18
  %70 = vmatprep.subr.mxu0 0.0
  %71 = vmatpush1.msra.mxu0 %v19
  %72 = vmatprep.subr.mxu0 0.0
  %73 = vmatpush1.msra.mxu0 %v20
  %74 = vmatprep.subr.mxu0 0.0
  %75 = vmatpush1.msra.mxu0 %v21
  %76 = vmatprep.subr.mxu0 0.0
  %77 = vmatpush1.msra.mxu0 %v22
  %78 = vmatprep.subr.mxu0 0.0
  %79 = vmatpush1.msra.mxu0 %v23
  %80 = vmatprep.subr.mxu0 0.0
  %81 = vmatpush1.msra.mxu0 %v24
  %82 = vmatprep.subr.mxu0 0.0
  %83 = vmatpush1.msra.mxu0 %v25
  %84 = vmatprep.subr.mxu0 0.0
  %85 = vmatpush1.msra.mxu0 %v26
  %86 = vmatprep.subr.mxu0 0.0
  %87 = vmatpush1.msra.mxu0 %v27
  %88 = vmatprep.subr.mxu0 0.0
  %89 = vmatpush1.msra.mxu0 %v28
  %90 = vmatprep.subr.mxu0 0.0
  %91 = vmatpush1.msra.mxu0 %v29
  %92 = vmatprep.subr.mxu0 0.0
  %93 = vmatpush1.msra.mxu0 %v30
  %94 = vmatprep.subr.mxu0 0.0
  %95 = vmatpush1.msra.mxu0 %v31
  %96 = vmatprep.subr.mxu0 0.0
  %97 = vmatpush1.msra.mxu0 %v32
  %98 = vmatprep.subr.mxu0 0.0
  %99 = vmatpush1.msra.mxu0 %v33
  %100 = vmatprep.subr.mxu0 0.0
  %101 = vmatpush1.msra.mxu0 %v34
  %102 = vmatprep.subr.mxu0 0.0
  %103 = vmatpush1.msra.mxu0 %v35
  %104 = vmatprep.subr.mxu0 0.0
  %105 = vmatpush1.msra.mxu0 %v36
  %106 = vmatprep.subr.mxu0 0.0
  %107 = vmatpush1.msra.mxu0 %v37
  %108 = vmatprep.subr.mxu0 0.0
  %109 = vmatpush1.msra.mxu0 %v38
  %110 = vmatprep.subr.mxu0 0.0
  %111 = vmatpush1.msra.mxu0 %v39
  %112 = vmatprep.subr.mxu0 0.0
  %113 = vmatpush1.msra.mxu0 %v40
  %114 = vmatprep.subr.mxu0 0.0
  %115 = vmatpush1.msra.mxu0 %v41
  %116 = vmatprep.subr.mxu0 0.0
  %117 = vmatpush1.msra.mxu0 %v42
  %118 = vmatprep.subr.mxu0 0.0
  %119 = vmatpush1.msra.mxu0 %v43
  %120 = vmatprep.subr.mxu0 0.0
  %121 = vmatpush1.msra.mxu0 %v44
  %122 = vmatprep.subr.mxu0 0.0
  %123 = vmatpush1.msra.mxu0 %v45
  %124 = vmatprep.mubr.f32.mxu0 %v47
  %125 = vmatmul.mubr.f32.gmra.mrb[0].mxu0 %v46
  %v126 = vpop.f32.mrb[0].mxu0
  %v127 = vadd.f32 0.0, %v126
  %v128 = vpop.f32.mrb[0].mxu0
  %129 = vmatprep.mubr.f32.mxu0 %v49
  %130 = vmatmul.mubr.f32.gmra.mrb[0].mxu0 %v48
  %v131 = vpop.f32.mrb[0].mxu0
  %v132 = vadd.f32 0.0, %v131
  %v133 = vpop.f32.mrb[0].mxu0
  %134 = vmatprep.mubr.f32.mxu0 %v51
  %135 = vmatmul.mubr.f32.gmra.mrb[0].mxu0 %v50
  %v136 = vpop.f32.mrb[0].mxu0
  %v137 = vadd.f32 0.0, %v136
  %v138 = vpop.f32.mrb[0].mxu0
  %139 = vmatprep.mubr.f32.mxu0 %v53
  %140 = vmatmul.mubr.f32.gmra.mrb[0].mxu0 %v52
  %v141 = vpop.f32.mrb[0].mxu0
  %v142 = vadd.f32 0.0, %v141
  %v143 = vpop.f32.mrb[0].mxu0
  %144 = vmatprep.mubr.f32.mxu0 %v55
  %145 = vmatmul.mubr.f32.gmra.mrb[0].mxu0 %v54
  %v146 = vpop.f32.mrb[0].mxu0
  %v147 = vadd.f32 0.0, %v146
  %v148 = vpop.f32.mrb[0].mxu0
  %149 = vmatprep.mubr.f32.mxu0 %v57
  %150 = vmatmul.mubr.f32.gmra.mrb[0].mxu0 %v56
  %v151 = vpop.f32.mrb[0].mxu0
  %v152 = vadd.f32 0.0, %v151
  %v153 = vpop.f32.mrb[0].mxu0
  %154 = vmatprep.mubr.f32.mxu0 %v59
  %155 = vmatmul.mubr.f32.gmra.mrb[0].mxu0 %v58
  %v156 = vpop.f32.mrb[0].mxu0
  %v157 = vadd.f32 0.0, %v156
  %v158 = vpop.f32.mrb[0].mxu0
  %159 = vdwg.mxu0
  %s160 = scalar_lea.vmem %s0, 112
  %v161 = vld [vmem:[%s160] sm:$0xff]
  %v162 = vld [vmem:[%s160 + $0x8] sm:$0xff]
  %v163 = vld [vmem:[%s160 + $0x10] sm:$0xff]
  %v164 = vld [vmem:[%s160 + $0x18] sm:$0xff]
  %v165 = vld [vmem:[%s160 + $0x20] sm:$0xff]
  %v166 = vld [vmem:[%s160 + $0x28] sm:$0xff]
  %v167 = vld [vmem:[%s160 + $0x30] sm:$0xff]
  %v168 = vld [vmem:[%s160 + $0x38] sm:$0xff]
  %v169 = vld [vmem:[%s160 + $0x40] sm:$0xff]
  %v170 = vld [vmem:[%s160 + $0x48] sm:$0xff]
  %v171 = vld [vmem:[%s160 + $0x50] sm:$0xff]
  %v172 = vld [vmem:[%s160 + $0x58] sm:$0xff]
  %v173 = vld [vmem:[%s160 + $0x60] sm:$0xff]
  %v174 = vld [vmem:[%s160 + $0x68] sm:$0xff]
  %175 = vmatprep.subr.mxu0 0.0
  %176 = vmatpush1.msra.mxu0 %v14
  %177 = vmatprep.subr.mxu0 0.0
  %178 = vmatpush1.msra.mxu0 %v15
  %179 = vmatprep.subr.mxu0 0.0
  %180 = vmatpush1.msra.mxu0 %v16
  %181 = vmatprep.subr.mxu0 0.0
  %182 = vmatpush1.msra.mxu0 %v17
  %183 = vmatprep.subr.mxu0 0.0
  %184 = vmatpush1.msra.mxu0 %v18
  %185 = vmatprep.subr.mxu0 0.0
  %186 = vmatpush1.msra.mxu0 %v19
  %187 = vmatprep.subr.mxu0 0.0
  %188 = vmatpush1.msra.mxu0 %v20
  %189 = vmatprep.subr.mxu0 0.0
  %190 = vmatpush1.msra.mxu0 %v21
  %191 = vmatprep.subr.mxu0 0.0
  %192 = vmatpush1.msra.mxu0 %v22
  %193 = vmatprep.subr.mxu0 0.0
  %194 = vmatpush1.msra.mxu0 %v23
  %195 = vmatprep.subr.mxu0 0.0
  %196 = vmatpush1.msra.mxu0 %v24
  %197 = vmatprep.subr.mxu0 0.0
  %198 = vmatpush1.msra.mxu0 %v25
  %199 = vmatprep.subr.mxu0 0.0
  %200 = vmatpush1.msra.mxu0 %v26
  %201 = vmatprep.subr.mxu0 0.0
  %202 = vmatpush1.msra.mxu0 %v27
  %203 = vmatprep.subr.mxu0 0.0
  %204 = vmatpush1.msra.mxu0 %v28
  %205 = vmatprep.subr.mxu0 0.0
  %206 = vmatpush1.msra.mxu0 %v29
  %207 = vmatprep.subr.mxu0 0.0
  %208 = vmatpush1.msra.mxu0 %v30
  %209 = vmatprep.subr.mxu0 0.0
  %210 = vmatpush1.msra.mxu0 %v31
  %211 = vmatprep.subr.mxu0 0.0
  %212 = vmatpush1.msra.mxu0 %v32
  %213 = vmatprep.subr.mxu0 0.0
  %214 = vmatpush1.msra.mxu0 %v33
  %215 = vmatprep.subr.mxu0 0.0
  %216 = vmatpush1.msra.mxu0 %v34
  %217 = vmatprep.subr.mxu0 0.0
  %218 = vmatpush1.msra.mxu0 %v35
  %219 = vmatprep.subr.mxu0 0.0
  %220 = vmatpush1.msra.mxu0 %v36
  %221 = vmatprep.subr.mxu0 0.0
  %222 = vmatpush1.msra.mxu0 %v37
  %223 = vmatprep.subr.mxu0 0.0
  %224 = vmatpush1.msra.mxu0 %v38
  %225 = vmatprep.subr.mxu0 0.0
  %226 = vmatpush1.msra.mxu0 %v39
  %227 = vmatprep.subr.mxu0 0.0
  %228 = vmatpush1.msra.mxu0 %v40
  %229 = vmatprep.subr.mxu0 0.0
  %230 = vmatpush1.msra.mxu0 %v41
  %231 = vmatprep.subr.mxu0 0.0
  %232 = vmatpush1.msra.mxu0 %v42
  %233 = vmatprep.subr.mxu0 0.0
  %234 = vmatpush1.msra.mxu0 %v43
  %235 = vmatprep.subr.mxu0 0.0
  %236 = vmatpush1.msra.mxu0 %v44
  %237 = vmatprep.subr.mxu0 0.0
  %238 = vmatpush1.msra.mxu0 %v45
  %239 = vmatprep.mubr.f32.mxu0 %v162
  %240 = vmatmul.mubr.f32.gmra.mrb[0].mxu0 %v161
  %v241 = vpop.f32.mrb[0].mxu0
  %v242 = vadd.f32 0.0, %v241
  %v243 = vpop.f32.mrb[0].mxu0
  %244 = vmatprep.mubr.f32.mxu0 %v164
  %245 = vmatmul.mubr.f32.gmra.mrb[0].mxu0 %v163
  %v246 = vpop.f32.mrb[0].mxu0
  %v247 = vadd.f32 0.0, %v246
  %v248 = vpop.f32.mrb[0].mxu0
  %249 = vmatprep.mubr.f32.mxu0 %v166
  %250 = vmatmul.mubr.f32.gmra.mrb[0].mxu0 %v165
  %v251 = vpop.f32.mrb[0].mxu0
  %v252 = vadd.f32 0.0, %v251
  %v253 = vpop.f32.mrb[0].mxu0
  %254 = vmatprep.mubr.f32.mxu0 %v168
  %255 = vmatmul.mubr.f32.gmra.mrb[0].mxu0 %v167
  %v256 = vpop.f32.mrb[0].mxu0
  %v257 = vadd.f32 0.0, %v256
  %v258 = vpop.f32.mrb[0].mxu0
  %259 = vmatprep.mubr.f32.mxu0 %v170
  %260 = vmatmul.mubr.f32.gmra.mrb[0].mxu0 %v169
  %v261 = vpop.f32.mrb[0].mxu0
  %v262 = vadd.f32 0.0, %v261
  %v263 = vpop.f32.mrb[0].mxu0
  %264 = vmatprep.mubr.f32.mxu0 %v172
  %265 = vmatmul.mubr.f32.gmra.mrb[0].mxu0 %v171
  %v266 = vpop.f32.mrb[0].mxu0
  %v267 = vadd.f32 0.0, %v266
  %v268 = vpop.f32.mrb[0].mxu0
  %269 = vmatprep.mubr.f32.mxu0 %v174
  %270 = vmatmul.mubr.f32.gmra.mrb[0].mxu0 %v173
  %v271 = vpop.f32.mrb[0].mxu0
  %v272 = vadd.f32 0.0, %v271
  %v273 = vpop.f32.mrb[0].mxu0
  %274 = vdwg.mxu0
  %v275 = vmax.f32 %v127, %v242
  %v276 = vmax.f32 %v132, %v247
  %v277 = vmax.f32 %v137, %v252
  %v278 = vmax.f32 %v142, %v257
  %v279 = vmax.f32 %v147, %v262
  %v280 = vmax.f32 %v152, %v267
  %v281 = vmax.f32 %v157, %v272
  %s282 = scalar_lea.vmem %s0, 224
  %v283 = vld [vmem:[%s282] sm:$0xff]
  %v284 = vld [vmem:[%s282 + $0x8] sm:$0xff]
  %v285 = vld [vmem:[%s282 + $0x10] sm:$0xff]
  %v286 = vld [vmem:[%s282 + $0x18] sm:$0xff]
  %v287 = vld [vmem:[%s282 + $0x20] sm:$0xff]
  %v288 = vld [vmem:[%s282 + $0x28] sm:$0xff]
  %v289 = vld [vmem:[%s282 + $0x30] sm:$0xff]
  %v290 = vld [vmem:[%s282 + $0x38] sm:$0xff]
  %v291 = vld [vmem:[%s282 + $0x40] sm:$0xff]
  %v292 = vld [vmem:[%s282 + $0x48] sm:$0xff]
  %v293 = vld [vmem:[%s282 + $0x50] sm:$0xff]
  %v294 = vld [vmem:[%s282 + $0x58] sm:$0xff]
  %v295 = vld [vmem:[%s282 + $0x60] sm:$0xff]
  %v296 = vld [vmem:[%s282 + $0x68] sm:$0xff]
  %297 = vmatprep.subr.mxu0 0.0
  %298 = vmatpush1.msra.mxu0 %v14
  %299 = vmatprep.subr.mxu0 0.0
  %300 = vmatpush1.msra.mxu0 %v15
  %301 = vmatprep.subr.mxu0 0.0
  %302 = vmatpush1.msra.mxu0 %v16
  %303 = vmatprep.subr.mxu0 0.0
  %304 = vmatpush1.msra.mxu0 %v17
  %305 = vmatprep.subr.mxu0 0.0
  %306 = vmatpush1.msra.mxu0 %v18
  %307 = vmatprep.subr.mxu0 0.0
  %308 = vmatpush1.msra.mxu0 %v19
  %309 = vmatprep.subr.mxu0 0.0
  %310 = vmatpush1.msra.mxu0 %v20
  %311 = vmatprep.subr.mxu0 0.0
  %312 = vmatpush1.msra.mxu0 %v21
  %313 = vmatprep.subr.mxu0 0.0
  %314 = vmatpush1.msra.mxu0 %v22
  %315 = vmatprep.subr.mxu0 0.0
  %316 = vmatpush1.msra.mxu0 %v23
  %317 = vmatprep.subr.mxu0 0.0
  %318 = vmatpush1.msra.mxu0 %v24
  %319 = vmatprep.subr.mxu0 0.0
  %320 = vmatpush1.msra.mxu0 %v25
  %321 = vmatprep.subr.mxu0 0.0
  %322 = vmatpush1.msra.mxu0 %v26
  %323 = vmatprep.subr.mxu0 0.0
  %324 = vmatpush1.msra.mxu0 %v27
  %325 = vmatprep.subr.mxu0 0.0
  %326 = vmatpush1.msra.mxu0 %v28
  %327 = vmatprep.subr.mxu0 0.0
  %328 = vmatpush1.msra.mxu0 %v29
  %329 = vmatprep.subr.mxu0 0.0
  %330 = vmatpush1.msra.mxu0 %v30
  %331 = vmatprep.subr.mxu0 0.0
  %332 = vmatpush1.msra.mxu0 %v31
  %333 = vmatprep.subr.mxu0 0.0
  %334 = vmatpush1.msra.mxu0 %v32
  %335 = vmatprep.subr.mxu0 0.0
  %336 = vmatpush1.msra.mxu0 %v33
  %337 = vmatprep.subr.mxu0 0.0
  %338 = vmatpush1.msra.mxu0 %v34
  %339 = vmatprep.subr.mxu0 0.0
  %340 = vmatpush1.msra.mxu0 %v35
  %341 = vmatprep.subr.mxu0 0.0
  %342 = vmatpush1.msra.mxu0 %v36
  %343 = vmatprep.subr.mxu0 0.0
  %344 = vmatpush1.msra.mxu0 %v37
  %345 = vmatprep.subr.mxu0 0.0
  %346 = vmatpush1.msra.mxu0 %v38
  %347 = vmatprep.subr.mxu0 0.0
  %348 = vmatpush1.msra.mxu0 %v39
  %349 = vmatprep.subr.mxu0 0.0
  %350 = vmatpush1.msra.mxu0 %v40
  %351 = vmatprep.subr.mxu0 0.0
  %352 = vmatpush1.msra.mxu0 %v41
  %353 = vmatprep.subr.mxu0 0.0
  %354 = vmatpush1.msra.mxu0 %v42
  %355 = vmatprep.subr.mxu0 0.0
  %356 = vmatpush1.msra.mxu0 %v43
  %357 = vmatprep.subr.mxu0 0.0
  %358 = vmatpush1.msra.mxu0 %v44
  %359 = vmatprep.subr.mxu0 0.0
  %360 = vmatpush1.msra.mxu0 %v45
  %361 = vmatprep.mubr.f32.mxu0 %v284
  %362 = vmatmul.mubr.f32.gmra.mrb[0].mxu0 %v283
  %v363 = vpop.f32.mrb[0].mxu0
  %v364 = vadd.f32 0.0, %v363
  %v365 = vpop.f32.mrb[0].mxu0
  %366 = vmatprep.mubr.f32.mxu0 %v286
  %367 = vmatmul.mubr.f32.gmra.mrb[0].mxu0 %v285
  %v368 = vpop.f32.mrb[0].mxu0
  %v369 = vadd.f32 0.0, %v368
  %v370 = vpop.f32.mrb[0].mxu0
  %371 = vmatprep.mubr.f32.mxu0 %v288
  %372 = vmatmul.mubr.f32.gmra.mrb[0].mxu0 %v287
  %v373 = vpop.f32.mrb[0].mxu0
  %v374 = vadd.f32 0.0, %v373
  %v375 = vpop.f32.mrb[0].mxu0
  %376 = vmatprep.mubr.f32.mxu0 %v290
  %377 = vmatmul.mubr.f32.gmra.mrb[0].mxu0 %v289
  %v378 = vpop.f32.mrb[0].mxu0
  %v379 = vadd.f32 0.0, %v378
  %v380 = vpop.f32.mrb[0].mxu0
  %381 = vmatprep.mubr.f32.mxu0 %v292
  %382 = vmatmul.mubr.f32.gmra.mrb[0].mxu0 %v291
  %v383 = vpop.f32.mrb[0].mxu0
  %v384 = vadd.f32 0.0, %v383
  %v385 = vpop.f32.mrb[0].mxu0
  %386 = vmatprep.mubr.f32.mxu0 %v294
  %387 = vmatmul.mubr.f32.gmra.mrb[0].mxu0 %v293
  %v388 = vpop.f32.mrb[0].mxu0
  %v389 = vadd.f32 0.0, %v388
  %v390 = vpop.f32.mrb[0].mxu0
  %391 = vmatprep.mubr.f32.mxu0 %v296
  %392 = vmatmul.mubr.f32.gmra.mrb[0].mxu0 %v295
  %v393 = vpop.f32.mrb[0].mxu0
  %v394 = vadd.f32 0.0, %v393
  %v395 = vpop.f32.mrb[0].mxu0
  %396 = vdwg.mxu0
  %v397 = vmax.f32 %v275, %v364
  %v398 = vmax.f32 %v276, %v369
  %v399 = vmax.f32 %v277, %v374
  %v400 = vmax.f32 %v278, %v379
  %v401 = vmax.f32 %v279, %v384
  %v402 = vmax.f32 %v280, %v389
  %v403 = vmax.f32 %v281, %v394
  %s404 = scalar_lea.vmem %s0, 336
  %v405 = vld [vmem:[%s404] sm:$0xff]
  %v406 = vld [vmem:[%s404 + $0x8] sm:$0xff]
  %v407 = vld [vmem:[%s404 + $0x10] sm:$0xff]
  %v408 = vld [vmem:[%s404 + $0x18] sm:$0xff]
  %v409 = vld [vmem:[%s404 + $0x20] sm:$0xff]
  %v410 = vld [vmem:[%s404 + $0x28] sm:$0xff]
  %v411 = vld [vmem:[%s404 + $0x30] sm:$0xff]
  %v412 = vld [vmem:[%s404 + $0x38] sm:$0xff]
  %v413 = vld [vmem:[%s404 + $0x40] sm:$0xff]
  %v414 = vld [vmem:[%s404 + $0x48] sm:$0xff]
  %v415 = vld [vmem:[%s404 + $0x50] sm:$0xff]
  %v416 = vld [vmem:[%s404 + $0x58] sm:$0xff]
  %v417 = vld [vmem:[%s404 + $0x60] sm:$0xff]
  %v418 = vld [vmem:[%s404 + $0x68] sm:$0xff]
  %419 = vmatprep.subr.mxu0 0.0
  %420 = vmatpush1.msra.mxu0 %v14
  %421 = vmatprep.subr.mxu0 0.0
  %422 = vmatpush1.msra.mxu0 %v15
  %423 = vmatprep.subr.mxu0 0.0
  %424 = vmatpush1.msra.mxu0 %v16
  %425 = vmatprep.subr.mxu0 0.0
  %426 = vmatpush1.msra.mxu0 %v17
  %427 = vmatprep.subr.mxu0 0.0
  %428 = vmatpush1.msra.mxu0 %v18
  %429 = vmatprep.subr.mxu0 0.0
  %430 = vmatpush1.msra.mxu0 %v19
  %431 = vmatprep.subr.mxu0 0.0
  %432 = vmatpush1.msra.mxu0 %v20
  %433 = vmatprep.subr.mxu0 0.0
  %434 = vmatpush1.msra.mxu0 %v21
  %435 = vmatprep.subr.mxu0 0.0
  %436 = vmatpush1.msra.mxu0 %v22
  %437 = vmatprep.subr.mxu0 0.0
  %438 = vmatpush1.msra.mxu0 %v23
  %439 = vmatprep.subr.mxu0 0.0
  %440 = vmatpush1.msra.mxu0 %v24
  %441 = vmatprep.subr.mxu0 0.0
  %442 = vmatpush1.msra.mxu0 %v25
  %443 = vmatprep.subr.mxu0 0.0
  %444 = vmatpush1.msra.mxu0 %v26
  %445 = vmatprep.subr.mxu0 0.0
  %446 = vmatpush1.msra.mxu0 %v27
  %447 = vmatprep.subr.mxu0 0.0
  %448 = vmatpush1.msra.mxu0 %v28
  %449 = vmatprep.subr.mxu0 0.0
  %450 = vmatpush1.msra.mxu0 %v29
  %451 = vmatprep.subr.mxu0 0.0
  %452 = vmatpush1.msra.mxu0 %v30
  %453 = vmatprep.subr.mxu0 0.0
  %454 = vmatpush1.msra.mxu0 %v31
  %455 = vmatprep.subr.mxu0 0.0
  %456 = vmatpush1.msra.mxu0 %v32
  %457 = vmatprep.subr.mxu0 0.0
  %458 = vmatpush1.msra.mxu0 %v33
  %459 = vmatprep.subr.mxu0 0.0
  %460 = vmatpush1.msra.mxu0 %v34
  %461 = vmatprep.subr.mxu0 0.0
  %462 = vmatpush1.msra.mxu0 %v35
  %463 = vmatprep.subr.mxu0 0.0
  %464 = vmatpush1.msra.mxu0 %v36
  %465 = vmatprep.subr.mxu0 0.0
  %466 = vmatpush1.msra.mxu0 %v37
  %467 = vmatprep.subr.mxu0 0.0
  %468 = vmatpush1.msra.mxu0 %v38
  %469 = vmatprep.subr.mxu0 0.0
  %470 = vmatpush1.msra.mxu0 %v39
  %471 = vmatprep.subr.mxu0 0.0
  %472 = vmatpush1.msra.mxu0 %v40
  %473 = vmatprep.subr.mxu0 0.0
  %474 = vmatpush1.msra.mxu0 %v41
  %475 = vmatprep.subr.mxu0 0.0
  %476 = vmatpush1.msra.mxu0 %v42
  %477 = vmatprep.subr.mxu0 0.0
  %478 = vmatpush1.msra.mxu0 %v43
  %479 = vmatprep.subr.mxu0 0.0
  %480 = vmatpush1.msra.mxu0 %v44
  %481 = vmatprep.subr.mxu0 0.0
  %482 = vmatpush1.msra.mxu0 %v45
  %483 = vmatprep.mubr.f32.mxu0 %v406
  %484 = vmatmul.mubr.f32.gmra.mrb[0].mxu0 %v405
  %v485 = vpop.f32.mrb[0].mxu0
  %v486 = vadd.f32 0.0, %v485
  %v487 = vpop.f32.mrb[0].mxu0
  %488 = vmatprep.mubr.f32.mxu0 %v408
  %489 = vmatmul.mubr.f32.gmra.mrb[0].mxu0 %v407
  %v490 = vpop.f32.mrb[0].mxu0
  %v491 = vadd.f32 0.0, %v490
  %v492 = vpop.f32.mrb[0].mxu0
  %493 = vmatprep.mubr.f32.mxu0 %v410
  %494 = vmatmul.mubr.f32.gmra.mrb[0].mxu0 %v409
  %v495 = vpop.f32.mrb[0].mxu0
  %v496 = vadd.f32 0.0, %v495
  %v497 = vpop.f32.mrb[0].mxu0
  %498 = vmatprep.mubr.f32.mxu0 %v412
  %499 = vmatmul.mubr.f32.gmra.mrb[0].mxu0 %v411
  %v500 = vpop.f32.mrb[0].mxu0
  %v501 = vadd.f32 0.0, %v500
  %v502 = vpop.f32.mrb[0].mxu0
  %503 = vmatprep.mubr.f32.mxu0 %v414
  %504 = vmatmul.mubr.f32.gmra.mrb[0].mxu0 %v413
  %v505 = vpop.f32.mrb[0].mxu0
  %v506 = vadd.f32 0.0, %v505
  %v507 = vpop.f32.mrb[0].mxu0
  %508 = vmatprep.mubr.f32.mxu0 %v416
  %509 = vmatmul.mubr.f32.gmra.mrb[0].mxu0 %v415
  %v510 = vpop.f32.mrb[0].mxu0
  %v511 = vadd.f32 0.0, %v510
  %v512 = vpop.f32.mrb[0].mxu0
  %513 = vmatprep.mubr.f32.mxu0 %v418
  %514 = vmatmul.mubr.f32.gmra.mrb[0].mxu0 %v417
  %v515 = vpop.f32.mrb[0].mxu0
  %v516 = vadd.f32 0.0, %v515
  %v517 = vpop.f32.mrb[0].mxu0
  %518 = vdwg.mxu0
  %v519 = vmax.f32 %v397, %v486
  %v520 = vmax.f32 %v398, %v491
  %v521 = vmax.f32 %v399, %v496
  %v522 = vmax.f32 %v400, %v501
  %v523 = vmax.f32 %v401, %v506
  %v524 = vmax.f32 %v402, %v511
  %v525 = vmax.f32 %v403, %v516
  %v526 = vld [vmem:[%s2] sm:$0x1]
  %v528 = vlaneseq
  %v529 = vshrl.u32 %v528, 7
  %v530 = vsub.s32 0, %v529
  %v531 = vrot.slane %v526, %v530
  %v533 = vadd.f32 %v519, %v531
  %v534 = vadd.f32 %v520, %v531
  %v535 = vadd.f32 %v521, %v531
  %v536 = vadd.f32 %v522, %v531
  %v537 = vadd.f32 %v523, %v531
  %v538 = vadd.f32 %v524, %v531
  %v539 = vadd.f32 %v525, %v531
  %v540 = vmax.f32 %v533, 0.0
  %v541 = vmax.f32 %v534, 0.0
  %v542 = vmax.f32 %v535, 0.0
  %v543 = vmax.f32 %v536, 0.0
  %v544 = vmax.f32 %v537, 0.0
  %v545 = vmax.f32 %v538, 0.0
  %v546 = vmax.f32 %v539, 0.0
  %547 = vst [vmem:[%s3] sm:$0xff] %v540
  %548 = vst [vmem:[%s3 + $0x8] sm:$0xff] %v541
  %549 = vst [vmem:[%s3 + $0x10] sm:$0xff] %v542
  %550 = vst [vmem:[%s3 + $0x18] sm:$0xff] %v543
  %551 = vst [vmem:[%s3 + $0x20] sm:$0xff] %v544
  %552 = vst [vmem:[%s3 + $0x28] sm:$0xff] %v545
  %553 = vst [vmem:[%s3 + $0x30] sm:$0xff] %v546
  // Predicated region
  $region14: #{net2_forward.4} parent=0 // pred_check
    _
  $region15: #{net2_forward.4} parent=0 // pred_check_branch
    %555 = sbr.rel (0) target = $region17
  $region16: #{net2_forward.4} parent=0 // pred_region
    _
  $region17: #{net2_forward.4} parent=0 // pred_fallthru
    _
  // Predicated region
  $region18: #{net2_forward.4} parent=0 // pred_check
    _
  $region19: #{net2_forward.4} parent=0 // pred_check_branch
    %557 = sbr.rel (0) target = $region21
  $region20: #{net2_forward.4} parent=0 // pred_region
    _
  $region21: #{net2_forward.4} parent=0 // pred_fallthru
    _

// kernel: net2_forward.5
$region0: #{net2_forward.5}
  #allocation0 [shape = 'u32[]', space=smem, size = 0x4, offset = 0x4, fixed_abs, tag = 'smem constant byte address 0x4 - core index']
  #allocation1 [shape = 'u32[144,128]{1,0:T(1,128)}', space=vmem, size = 0x12000, scoped, tag = 'internal scratch']
  %s0 = inlined_call_operand.vmem [shape: f32[8,512], index: 0, kind: input, shape index: {}]
  %s1 = inlined_call_operand.vmem [shape: f32[512,128], index: 1, kind: input, shape index: {}]
  %s2 = inlined_call_operand.vmem [shape: f32[1,128], index: 2, kind: input, shape index: {}]
  %s3 = inlined_call_operand.vmem [shape: f32[128,128], index: 3, kind: input, shape index: {}]
  %s4 = inlined_call_operand.vmem [shape: f32[1,128], index: 4, kind: input, shape index: {}]
  %s5 = inlined_call_operand.vmem [shape: f32[128,128], index: 5, kind: input, shape index: {}]
  %s6 = inlined_call_operand.vmem [shape: f32[1,128], index: 6, kind: input, shape index: {}]
  %s7 = inlined_call_operand.vmem [shape: f32[8,128], index: 7, kind: output, shape index: {}]
  %s8 = sld [smem:[#allocation0]]
  $region38: #{net2_forward.5} parent=0
    _
  %s10 = ssub.s32 1, %s8
  %s11 = scalar_select 0, %s10, %s8
  // Predicated region
  $region2: #{net2_forward.5} parent=0 // pred_check
    _
  $region3: #{net2_forward.5} parent=0 // pred_check_branch
    %13 = sbr.rel (0) target = $region5
  $region4: #{net2_forward.5} parent=0 // pred_region
    _
  $region5: #{net2_forward.5} parent=0 // pred_fallthru
    _
  // Predicated region
  $region6: #{net2_forward.5} parent=0 // pred_check
    _
  $region7: #{net2_forward.5} parent=0 // pred_check_branch
    %15 = sbr.rel (0) target = $region9
  $region8: #{net2_forward.5} parent=0 // pred_region
    _
  $region9: #{net2_forward.5} parent=0 // pred_fallthru
    _
  // Predicated region
  $region10: #{net2_forward.5} parent=0 // pred_check
    _
  $region11: #{net2_forward.5} parent=0 // pred_check_branch
    %17 = sbr.rel (0) target = $region13
  $region12: #{net2_forward.5} parent=0 // pred_region
    _
  $region13: #{net2_forward.5} parent=0 // pred_fallthru
    _
  // Predicated region
  $region14: #{net2_forward.5} parent=0 // pred_check
    _
  $region15: #{net2_forward.5} parent=0 // pred_check_branch
    %19 = sbr.rel (0) target = $region17
  $region16: #{net2_forward.5} parent=0 // pred_region
    _
  $region17: #{net2_forward.5} parent=0 // pred_fallthru
    _
  // Predicated region
  $region18: #{net2_forward.5} parent=0 // pred_check
    _
  $region19: #{net2_forward.5} parent=0 // pred_check_branch
    %21 = sbr.rel (0) target = $region21
  $region20: #{net2_forward.5} parent=0 // pred_region
    _
  $region21: #{net2_forward.5} parent=0 // pred_fallthru
    _
  // Predicated region
  $region22: #{net2_forward.5} parent=0 // pred_check
    _
  $region23: #{net2_forward.5} parent=0 // pred_check_branch
    %23 = sbr.rel (0) target = $region25
  $region24: #{net2_forward.5} parent=0 // pred_region
    _
  $region25: #{net2_forward.5} parent=0 // pred_fallthru
    _
  // Predicated region
  $region26: #{net2_forward.5} parent=0 // pred_check
    _
  $region27: #{net2_forward.5} parent=0 // pred_check_branch
    %25 = sbr.rel (0) target = $region29
  $region28: #{net2_forward.5} parent=0 // pred_region
    _
  $region29: #{net2_forward.5} parent=0 // pred_fallthru
    _
  %v26 = vld [vmem:[%s0] sm:$0xff]
  %v27 = vld [vmem:[%s0 + $0x8] sm:$0xff]
  %v28 = vld [vmem:[%s0 + $0x10] sm:$0xff]
  %v29 = vld [vmem:[%s0 + $0x18] sm:$0xff]
  %v30 = vld [vmem:[%s1] sm:$0xff]
  %v31 = vld [vmem:[%s1 + $0x8] sm:$0xff]
  %v32 = vld [vmem:[%s1 + $0x10] sm:$0xff]
  %v33 = vld [vmem:[%s1 + $0x18] sm:$0xff]
  %v34 = vld [vmem:[%s1 + $0x20] sm:$0xff]
  %v35 = vld [vmem:[%s1 + $0x28] sm:$0xff]
  %v36 = vld [vmem:[%s1 + $0x30] sm:$0xff]
  %v37 = vld [vmem:[%s1 + $0x38] sm:$0xff]
  %v38 = vld [vmem:[%s1 + $0x40] sm:$0xff]
  %v39 = vld [vmem:[%s1 + $0x48] sm:$0xff]
  %v40 = vld [vmem:[%s1 + $0x50] sm:$0xff]
  %v41 = vld [vmem:[%s1 + $0x58] sm:$0xff]
  %v42 = vld [vmem:[%s1 + $0x60] sm:$0xff]
  %v43 = vld [vmem:[%s1 + $0x68] sm:$0xff]
  %v44 = vld [vmem:[%s1 + $0x70] sm:$0xff]
  %v45 = vld [vmem:[%s1 + $0x78] sm:$0xff]
  %v46 = vld [vmem:[%s1 + $0x80] sm:$0xff]
  %v47 = vld [vmem:[%s1 + $0x88] sm:$0xff]
  %v48 = vld [vmem:[%s1 + $0x90] sm:$0xff]
  %v49 = vld [vmem:[%s1 + $0x98] sm:$0xff]
  %v50 = vld [vmem:[%s1 + $0xa0] sm:$0xff]
  %v51 = vld [vmem:[%s1 + $0xa8] sm:$0xff]
  %v52 = vld [vmem:[%s1 + $0xb0] sm:$0xff]
  %v53 = vld [vmem:[%s1 + $0xb8] sm:$0xff]
  %v54 = vld [vmem:[%s1 + $0xc0] sm:$0xff]
  %v55 = vld [vmem:[%s1 + $0xc8] sm:$0xff]
  %v56 = vld [vmem:[%s1 + $0xd0] sm:$0xff]
  %v57 = vld [vmem:[%s1 + $0xd8] sm:$0xff]
  %v58 = vld [vmem:[%s1 + $0xe0] sm:$0xff]
  %v59 = vld [vmem:[%s1 + $0xe8] sm:$0xff]
  %v60 = vld [vmem:[%s1 + $0xf0] sm:$0xff]
  %v61 = vld [vmem:[%s1 + $0xf8] sm:$0xff]
  %v62 = vld [vmem:[%s1 + $0x100] sm:$0xff]
  %v63 = vld [vmem:[%s1 + $0x108] sm:$0xff]
  %v64 = vld [vmem:[%s1 + $0x110] sm:$0xff]
  %v65 = vld [vmem:[%s1 + $0x118] sm:$0xff]
  %v66 = vld [vmem:[%s1 + $0x120] sm:$0xff]
  %v67 = vld [vmem:[%s1 + $0x128] sm:$0xff]
  %v68 = vld [vmem:[%s1 + $0x130] sm:$0xff]
  %v69 = vld [vmem:[%s1 + $0x138] sm:$0xff]
  %v70 = vld [vmem:[%s1 + $0x140] sm:$0xff]
  %v71 = vld [vmem:[%s1 + $0x148] sm:$0xff]
  %v72 = vld [vmem:[%s1 + $0x150] sm:$0xff]
  %v73 = vld [vmem:[%s1 + $0x158] sm:$0xff]
  %v74 = vld [vmem:[%s1 + $0x160] sm:$0xff]
  %v75 = vld [vmem:[%s1 + $0x168] sm:$0xff]
  %v76 = vld [vmem:[%s1 + $0x170] sm:$0xff]
  %v77 = vld [vmem:[%s1 + $0x178] sm:$0xff]
  %v78 = vld [vmem:[%s1 + $0x180] sm:$0xff]
  %v79 = vld [vmem:[%s1 + $0x188] sm:$0xff]
  %v80 = vld [vmem:[%s1 + $0x190] sm:$0xff]
  %v81 = vld [vmem:[%s1 + $0x198] sm:$0xff]
  %v82 = vld [vmem:[%s1 + $0x1a0] sm:$0xff]
  %v83 = vld [vmem:[%s1 + $0x1a8] sm:$0xff]
  %v84 = vld [vmem:[%s1 + $0x1b0] sm:$0xff]
  %v85 = vld [vmem:[%s1 + $0x1b8] sm:$0xff]
  %v86 = vld [vmem:[%s1 + $0x1c0] sm:$0xff]
  %v87 = vld [vmem:[%s1 + $0x1c8] sm:$0xff]
  %v88 = vld [vmem:[%s1 + $0x1d0] sm:$0xff]
  %v89 = vld [vmem:[%s1 + $0x1d8] sm:$0xff]
  %v90 = vld [vmem:[%s1 + $0x1e0] sm:$0xff]
  %v91 = vld [vmem:[%s1 + $0x1e8] sm:$0xff]
  %v92 = vld [vmem:[%s1 + $0x1f0] sm:$0xff]
  %v93 = vld [vmem:[%s1 + $0x1f8] sm:$0xff]
  %v94 = vld [vmem:[%s2] sm:$0x1]
  %v96 = vlaneseq
  %v97 = vshrl.u32 %v96, 7
  %v98 = vsub.s32 0, %v97
  %v99 = vrot.slane %v94, %v98
  %101 = vmatprep.subr.mxu0 0.0
  %102 = vmatpush1.msra.mxu0 %v30
  %103 = vmatprep.subr.mxu0 0.0
  %104 = vmatpush1.msra.mxu0 %v31
  %105 = vmatprep.subr.mxu0 0.0
  %106 = vmatpush1.msra.mxu0 %v32
  %107 = vmatprep.subr.mxu0 0.0
  %108 = vmatpush1.msra.mxu0 %v33
  %109 = vmatprep.subr.mxu0 0.0
  %110 = vmatpush1.msra.mxu0 %v34
  %111 = vmatprep.subr.mxu0 0.0
  %112 = vmatpush1.msra.mxu0 %v35
  %113 = vmatprep.subr.mxu0 0.0
  %114 = vmatpush1.msra.mxu0 %v36
  %115 = vmatprep.subr.mxu0 0.0
  %116 = vmatpush1.msra.mxu0 %v37
  %117 = vmatprep.subr.mxu0 0.0
  %118 = vmatpush1.msra.mxu0 %v38
  %119 = vmatprep.subr.mxu0 0.0
  %120 = vmatpush1.msra.mxu0 %v39
  %121 = vmatprep.subr.mxu0 0.0
  %122 = vmatpush1.msra.mxu0 %v40
  %123 = vmatprep.subr.mxu0 0.0
  %124 = vmatpush1.msra.mxu0 %v41
  %125 = vmatprep.subr.mxu0 0.0
  %126 = vmatpush1.msra.mxu0 %v42
  %127 = vmatprep.subr.mxu0 0.0
  %128 = vmatpush1.msra.mxu0 %v43
  %129 = vmatprep.subr.mxu0 0.0
  %130 = vmatpush1.msra.mxu0 %v44
  %131 = vmatprep.subr.mxu0 0.0
  %132 = vmatpush1.msra.mxu0 %v45
  %133 = vmatprep.subr.mxu0 0.0
  %134 = vmatpush1.msra.mxu0 %v46
  %135 = vmatprep.subr.mxu0 0.0
  %136 = vmatpush1.msra.mxu0 %v47
  %137 = vmatprep.subr.mxu0 0.0
  %138 = vmatpush1.msra.mxu0 %v48
  %139 = vmatprep.subr.mxu0 0.0
  %140 = vmatpush1.msra.mxu0 %v49
  %141 = vmatprep.subr.mxu0 0.0
  %142 = vmatpush1.msra.mxu0 %v50
  %143 = vmatprep.subr.mxu0 0.0
  %144 = vmatpush1.msra.mxu0 %v51
  %145 = vmatprep.subr.mxu0 0.0
  %146 = vmatpush1.msra.mxu0 %v52
  %147 = vmatprep.subr.mxu0 0.0
  %148 = vmatpush1.msra.mxu0 %v53
  %149 = vmatprep.subr.mxu0 0.0
  %150 = vmatpush1.msra.mxu0 %v54
  %151 = vmatprep.subr.mxu0 0.0
  %152 = vmatpush1.msra.mxu0 %v55
  %153 = vmatprep.subr.mxu0 0.0
  %154 = vmatpush1.msra.mxu0 %v56
  %155 = vmatprep.subr.mxu0 0.0
  %156 = vmatpush1.msra.mxu0 %v57
  %157 = vmatprep.subr.mxu0 0.0
  %158 = vmatpush1.msra.mxu0 %v58
  %159 = vmatprep.subr.mxu0 0.0
  %160 = vmatpush1.msra.mxu0 %v59
  %161 = vmatprep.subr.mxu0 0.0
  %162 = vmatpush1.msra.mxu0 %v60
  %163 = vmatprep.subr.mxu0 0.0
  %164 = vmatpush1.msra.mxu0 %v61
  %165 = vmatprep.mubr.f32.mxu0 %v27
  %166 = vmatmul.mubr.f32.gmra.mrb[0].mxu0 %v26
  %v167 = vpop.f32.mrb[0].mxu0
  %v168 = vadd.f32 %v99, %v167
  %v169 = vpop.f32.mrb[0].mxu0
  %170 = vdwg.mxu0
  %171 = vmatprep.subr.mxu0 0.0
  %172 = vmatpush1.msra.mxu0 %v62
  %173 = vmatprep.subr.mxu0 0.0
  %174 = vmatpush1.msra.mxu0 %v63
  %175 = vmatprep.subr.mxu0 0.0
  %176 = vmatpush1.msra.mxu0 %v64
  %177 = vmatprep.subr.mxu0 0.0
  %178 = vmatpush1.msra.mxu0 %v65
  %179 = vmatprep.subr.mxu0 0.0
  %180 = vmatpush1.msra.mxu0 %v66
  %181 = vmatprep.subr.mxu0 0.0
  %182 = vmatpush1.msra.mxu0 %v67
  %183 = vmatprep.subr.mxu0 0.0
  %184 = vmatpush1.msra.mxu0 %v68
  %185 = vmatprep.subr.mxu0 0.0
  %186 = vmatpush1.msra.mxu0 %v69
  %187 = vmatprep.subr.mxu0 0.0
  %188 = vmatpush1.msra.mxu0 %v70
  %189 = vmatprep.subr.mxu0 0.0
  %190 = vmatpush1.msra.mxu0 %v71
  %191 = vmatprep.subr.mxu0 0.0
  %192 = vmatpush1.msra.mxu0 %v72
  %193 = vmatprep.subr.mxu0 0.0
  %194 = vmatpush1.msra.mxu0 %v73
  %195 = vmatprep.subr.mxu0 0.0
  %196 = vmatpush1.msra.mxu0 %v74
  %197 = vmatprep.subr.mxu0 0.0
  %198 = vmatpush1.msra.mxu0 %v75
  %199 = vmatprep.subr.mxu0 0.0
  %200 = vmatpush1.msra.mxu0 %v76
  %201 = vmatprep.subr.mxu0 0.0
  %202 = vmatpush1.msra.mxu0 %v77
  %203 = vmatprep.subr.mxu0 0.0
  %204 = vmatpush1.msra.mxu0 %v78
  %205 = vmatprep.subr.mxu0 0.0
  %206 = vmatpush1.msra.mxu0 %v79
  %207 = vmatprep.subr.mxu0 0.0
  %208 = vmatpush1.msra.mxu0 %v80
  %209 = vmatprep.subr.mxu0 0.0
  %210 = vmatpush1.msra.mxu0 %v81
  %211 = vmatprep.subr.mxu0 0.0
  %212 = vmatpush1.msra.mxu0 %v82
  %213 = vmatprep.subr.mxu0 0.0
  %214 = vmatpush1.msra.mxu0 %v83
  %215 = vmatprep.subr.mxu0 0.0
  %216 = vmatpush1.msra.mxu0 %v84
  %217 = vmatprep.subr.mxu0 0.0
  %218 = vmatpush1.msra.mxu0 %v85
  %219 = vmatprep.subr.mxu0 0.0
  %220 = vmatpush1.msra.mxu0 %v86
  %221 = vmatprep.subr.mxu0 0.0
  %222 = vmatpush1.msra.mxu0 %v87
  %223 = vmatprep.subr.mxu0 0.0
  %224 = vmatpush1.msra.mxu0 %v88
  %225 = vmatprep.subr.mxu0 0.0
  %226 = vmatpush1.msra.mxu0 %v89
  %227 = vmatprep.subr.mxu0 0.0
  %228 = vmatpush1.msra.mxu0 %v90
  %229 = vmatprep.subr.mxu0 0.0
  %230 = vmatpush1.msra.mxu0 %v91
  %231 = vmatprep.subr.mxu0 0.0
  %232 = vmatpush1.msra.mxu0 %v92
  %233 = vmatprep.subr.mxu0 0.0
  %234 = vmatpush1.msra.mxu0 %v93
  %235 = vmatprep.mubr.f32.mxu0 %v29
  %236 = vmatmul.mubr.f32.gmra.mrb[0].mxu0 %v28
  %v237 = vpop.f32.mrb[0].mxu0
  %v238 = vadd.f32 %v168, %v237
  %v239 = vpop.f32.mrb[0].mxu0
  %240 = vdwg.mxu0
  %v241 = vmax.f32 %v238, 0.0
  %v242 = vld [vmem:[%s3] sm:$0xff]
  %v243 = vld [vmem:[%s3 + $0x8] sm:$0xff]
  %v244 = vld [vmem:[%s3 + $0x10] sm:$0xff]
  %v245 = vld [vmem:[%s3 + $0x18] sm:$0xff]
  %v246 = vld [vmem:[%s3 + $0x20] sm:$0xff]
  %v247 = vld [vmem:[%s3 + $0x28] sm:$0xff]
  %v248 = vld [vmem:[%s3 + $0x30] sm:$0xff]
  %v249 = vld [vmem:[%s3 + $0x38] sm:$0xff]
  %v250 = vld [vmem:[%s3 + $0x40] sm:$0xff]
  %v251 = vld [vmem:[%s3 + $0x48] sm:$0xff]
  %v252 = vld [vmem:[%s3 + $0x50] sm:$0xff]
  %v253 = vld [vmem:[%s3 + $0x58] sm:$0xff]
  %v254 = vld [vmem:[%s3 + $0x60] sm:$0xff]
  %v255 = vld [vmem:[%s3 + $0x68] sm:$0xff]
  %v256 = vld [vmem:[%s3 + $0x70] sm:$0xff]
  %v257 = vld [vmem:[%s3 + $0x78] sm:$0xff]
  %v258 = vld [vmem:[%s4] sm:$0x1]
  %v260 = vlaneseq
  %v261 = vshrl.u32 %v260, 7
  %v262 = vsub.s32 0, %v261
  %v263 = vrot.slane %v258, %v262
  %265 = vmatprep.subr.mxu0 0.0
  %266 = vmatpush1.msra.mxu0 %v242
  %267 = vmatprep.subr.mxu0 0.0
  %268 = vmatpush1.msra.mxu0 %v243
  %269 = vmatprep.subr.mxu0 0.0
  %270 = vmatpush1.msra.mxu0 %v244
  %271 = vmatprep.subr.mxu0 0.0
  %272 = vmatpush1.msra.mxu0 %v245
  %273 = vmatprep.subr.mxu0 0.0
  %274 = vmatpush1.msra.mxu0 %v246
  %275 = vmatprep.subr.mxu0 0.0
  %276 = vmatpush1.msra.mxu0 %v247
  %277 = vmatprep.subr.mxu0 0.0
  %278 = vmatpush1.msra.mxu0 %v248
  %279 = vmatprep.subr.mxu0 0.0
  %280 = vmatpush1.msra.mxu0 %v249
  %281 = vmatprep.subr.mxu0 0.0
  %282 = vmatpush1.msra.mxu0 %v250
  %283 = vmatprep.subr.mxu0 0.0
  %284 = vmatpush1.msra.mxu0 %v251
  %285 = vmatprep.subr.mxu0 0.0
  %286 = vmatpush1.msra.mxu0 %v252
  %287 = vmatprep.subr.mxu0 0.0
  %288 = vmatpush1.msra.mxu0 %v253
  %289 = vmatprep.subr.mxu0 0.0
  %290 = vmatpush1.msra.mxu0 %v254
  %291 = vmatprep.subr.mxu0 0.0
  %292 = vmatpush1.msra.mxu0 %v255
  %293 = vmatprep.subr.mxu0 0.0
  %294 = vmatpush1.msra.mxu0 %v256
  %295 = vmatprep.subr.mxu0 0.0
  %296 = vmatpush1.msra.mxu0 %v257
  %297 = vmatprep.subr.mxu0 0.0
  %298 = vmatpush1.msra.mxu0 0.0
  %299 = vmatprep.subr.mxu0 0.0
  %300 = vmatpush1.msra.mxu0 0.0
  %301 = vmatprep.subr.mxu0 0.0
  %302 = vmatpush1.msra.mxu0 0.0
  %303 = vmatprep.subr.mxu0 0.0
  %304 = vmatpush1.msra.mxu0 0.0
  %305 = vmatprep.subr.mxu0 0.0
  %306 = vmatpush1.msra.mxu0 0.0
  %307 = vmatprep.subr.mxu0 0.0
  %308 = vmatpush1.msra.mxu0 0.0
  %309 = vmatprep.subr.mxu0 0.0
  %310 = vmatpush1.msra.mxu0 0.0
  %311 = vmatprep.subr.mxu0 0.0
  %312 = vmatpush1.msra.mxu0 0.0
  %313 = vmatprep.subr.mxu0 0.0
  %314 = vmatpush1.msra.mxu0 0.0
  %315 = vmatprep.subr.mxu0 0.0
  %316 = vmatpush1.msra.mxu0 0.0
  %317 = vmatprep.subr.mxu0 0.0
  %318 = vmatpush1.msra.mxu0 0.0
  %319 = vmatprep.subr.mxu0 0.0
  %320 = vmatpush1.msra.mxu0 0.0
  %321 = vmatprep.subr.mxu0 0.0
  %322 = vmatpush1.msra.mxu0 0.0
  %323 = vmatprep.subr.mxu0 0.0
  %324 = vmatpush1.msra.mxu0 0.0
  %325 = vmatprep.subr.mxu0 0.0
  %326 = vmatpush1.msra.mxu0 0.0
  %327 = vmatprep.subr.mxu0 0.0
  %328 = vmatpush1.msra.mxu0 0.0
  %329 = vmatprep.mubr.f32.mxu0 0.0
  %330 = vmatmul.mubr.f32.gmra.mrb[0].mxu0 %v241
  %v331 = vpop.f32.mrb[0].mxu0
  %v332 = vadd.f32 %v263, %v331
  %v333 = vpop.f32.mrb[0].mxu0
  %334 = vdwg.mxu0
  %v335 = vmax.f32 %v332, 0.0
  %v336 = vld [vmem:[%s5] sm:$0xff]
  %v337 = vld [vmem:[%s5 + $0x8] sm:$0xff]
  %v338 = vld [vmem:[%s5 + $0x10] sm:$0xff]
  %v339 = vld [vmem:[%s5 + $0x18] sm:$0xff]
  %v340 = vld [vmem:[%s5 + $0x20] sm:$0xff]
  %v341 = vld [vmem:[%s5 + $0x28] sm:$0xff]
  %v342 = vld [vmem:[%s5 + $0x30] sm:$0xff]
  %v343 = vld [vmem:[%s5 + $0x38] sm:$0xff]
  %v344 = vld [vmem:[%s5 + $0x40] sm:$0xff]
  %v345 = vld [vmem:[%s5 + $0x48] sm:$0xff]
  %v346 = vld [vmem:[%s5 + $0x50] sm:$0xff]
  %v347 = vld [vmem:[%s5 + $0x58] sm:$0xff]
  %v348 = vld [vmem:[%s5 + $0x60] sm:$0xff]
  %v349 = vld [vmem:[%s5 + $0x68] sm:$0xff]
  %v350 = vld [vmem:[%s5 + $0x70] sm:$0xff]
  %v351 = vld [vmem:[%s5 + $0x78] sm:$0xff]
  %v352 = vld [vmem:[%s6] sm:$0x1]
  %v354 = vlaneseq
  %v355 = vshrl.u32 %v354, 7
  %v356 = vsub.s32 0, %v355
  %v357 = vrot.slane %v352, %v356
  %359 = vmatprep.subr.mxu0 0.0
  %360 = vmatpush1.msra.mxu0 %v336
  %361 = vmatprep.subr.mxu0 0.0
  %362 = vmatpush1.msra.mxu0 %v337
  %363 = vmatprep.subr.mxu0 0.0
  %364 = vmatpush1.msra.mxu0 %v338
  %365 = vmatprep.subr.mxu0 0.0
  %366 = vmatpush1.msra.mxu0 %v339
  %367 = vmatprep.subr.mxu0 0.0
  %368 = vmatpush1.msra.mxu0 %v340
  %369 = vmatprep.subr.mxu0 0.0
  %370 = vmatpush1.msra.mxu0 %v341
  %371 = vmatprep.subr.mxu0 0.0
  %372 = vmatpush1.msra.mxu0 %v342
  %373 = vmatprep.subr.mxu0 0.0
  %374 = vmatpush1.msra.mxu0 %v343
  %375 = vmatprep.subr.mxu0 0.0
  %376 = vmatpush1.msra.mxu0 %v344
  %377 = vmatprep.subr.mxu0 0.0
  %378 = vmatpush1.msra.mxu0 %v345
  %379 = vmatprep.subr.mxu0 0.0
  %380 = vmatpush1.msra.mxu0 %v346
  %381 = vmatprep.subr.mxu0 0.0
  %382 = vmatpush1.msra.mxu0 %v347
  %383 = vmatprep.subr.mxu0 0.0
  %384 = vmatpush1.msra.mxu0 %v348
  %385 = vmatprep.subr.mxu0 0.0
  %386 = vmatpush1.msra.mxu0 %v349
  %387 = vmatprep.subr.mxu0 0.0
  %388 = vmatpush1.msra.mxu0 %v350
  %389 = vmatprep.subr.mxu0 0.0
  %390 = vmatpush1.msra.mxu0 %v351
  %391 = vmatprep.subr.mxu0 0.0
  %392 = vmatpush1.msra.mxu0 0.0
  %393 = vmatprep.subr.mxu0 0.0
  %394 = vmatpush1.msra.mxu0 0.0
  %395 = vmatprep.subr.mxu0 0.0
  %396 = vmatpush1.msra.mxu0 0.0
  %397 = vmatprep.subr.mxu0 0.0
  %398 = vmatpush1.msra.mxu0 0.0
  %399 = vmatprep.subr.mxu0 0.0
  %400 = vmatpush1.msra.mxu0 0.0
  %401 = vmatprep.subr.mxu0 0.0
  %402 = vmatpush1.msra.mxu0 0.0
  %403 = vmatprep.subr.mxu0 0.0
  %404 = vmatpush1.msra.mxu0 0.0
  %405 = vmatprep.subr.mxu0 0.0
  %406 = vmatpush1.msra.mxu0 0.0
  %407 = vmatprep.subr.mxu0 0.0
  %408 = vmatpush1.msra.mxu0 0.0
  %409 = vmatprep.subr.mxu0 0.0
  %410 = vmatpush1.msra.mxu0 0.0
  %411 = vmatprep.subr.mxu0 0.0
  %412 = vmatpush1.msra.mxu0 0.0
  %413 = vmatprep.subr.mxu0 0.0
  %414 = vmatpush1.msra.mxu0 0.0
  %415 = vmatprep.subr.mxu0 0.0
  %416 = vmatpush1.msra.mxu0 0.0
  %417 = vmatprep.subr.mxu0 0.0
  %418 = vmatpush1.msra.mxu0 0.0
  %419 = vmatprep.subr.mxu0 0.0
  %420 = vmatpush1.msra.mxu0 0.0
  %421 = vmatprep.subr.mxu0 0.0
  %422 = vmatpush1.msra.mxu0 0.0
  %423 = vmatprep.mubr.f32.mxu0 0.0
  %424 = vmatmul.mubr.f32.gmra.mrb[0].mxu0 %v335
  %v425 = vpop.f32.mrb[0].mxu0
  %v426 = vadd.f32 %v357, %v425
  %v427 = vpop.f32.mrb[0].mxu0
  %428 = vdwg.mxu0
  %429 = vst [vmem:[%s7] sm:$0xff] %v426
  // Predicated region
  $region30: #{net2_forward.5} parent=0 // pred_check
    _
  $region31: #{net2_forward.5} parent=0 // pred_check_branch
    %431 = sbr.rel (0) target = $region33
  $region32: #{net2_forward.5} parent=0 // pred_region
    _
  $region33: #{net2_forward.5} parent=0 // pred_fallthru
    _
  // Predicated region
  $region34: #{net2_forward.5} parent=0 // pred_check
    _
  $region35: #{net2_forward.5} parent=0 // pred_check_branch
    %433 = sbr.rel (0) target = $region37
  $region36: #{net2_forward.5} parent=0 // pred_region
    _
  $region37: #{net2_forward.5} parent=0 // pred_fallthru
    _

</llo_original>
